<compile_context>
chip_gen: v6e
topology: v6e:2x2x1
jax: 0.10.0
libtpu: 0.0.40
codegen_flags: <defaults>
</compile_context>

<pallas_src>
import jax
import jax.numpy as jnp
from jax import lax
from jax.experimental import pallas as pl
from jax.experimental.pallas import tpu as pltpu

MAX_NUM_PLAYERS = 6
NUM_CARDS = 52
INPUT_SIZE = NUM_CARDS + 2 * (MAX_NUM_PLAYERS - 1)  # 62
INPUT_SIZE_PADDED = 64                              # in-kernel zero-pad target

N_NODES = 256
N_LAYERS = 5          # first_layer + 4 hidden layers
N_HIDDEN = N_LAYERS - 1
HEAD_HIDDEN = 256


def _round_up(x, m):
    return ((x + m - 1) // m) * m


def _default_slab():
    """Row-slab size for the in-kernel loop: 128 on v5e (1 vst slot), else 256."""
    try:
        kind = jax.devices()[0].device_kind.lower()
    except Exception:
        return 256
    return 128 if "v5" in kind else 256


def _mlp_kernel(x_ref, w0_ref, b0_ref, wh_ref, bh_ref,
                wv1_ref, bv1_ref, wv2_ref, bv2_ref, out_ref, xpad_ref):
    slab = xpad_ref.shape[0]
    n_slabs = x_ref.shape[0] // slab

    # Small VMEM-resident operands, hoisted out of the slab loop.
    b0 = b0_ref[...]
    bv1 = bv1_ref[...]
    w_row = wv2_ref[...].astype(jnp.float32)     # (1, 256)
    bv2 = bv2_ref[0, 0]

    # Zero the padded-input scratch once per grid step; only columns
    # [0, INPUT_SIZE) are ever rewritten below, so columns 62..63 stay exactly 0.
    xpad_ref[...] = jnp.zeros_like(xpad_ref)

    # Rolled slab loop: bounds vreg live range (and hence spills) to one slab.
    @pl.loop(0, n_slabs)
    def _(s):
        start = pl.multiple_of(s * slab, slab)

        # In-kernel 62 -> 64 feature zero-pad (no HBM pad pass in the wrapper).
        xpad_ref[:, 0:INPUT_SIZE] = x_ref[pl.ds(start, slab), :]

        # first_layer + ReLU  (bf16 MXU matmul, f32 accumulate/bias/ReLU)
        h = jnp.dot(xpad_ref[...].astype(jnp.bfloat16), w0_ref[...],
                    preferred_element_type=jnp.float32)
        h = jnp.maximum(h + b0, 0.0)

        # 4 hidden Linear(256,256) + ReLU, bf16 weights stacked along axis 0.
        def body(i, h):
            hi = jnp.dot(h.astype(jnp.bfloat16), wh_ref[i],
                         preferred_element_type=jnp.float32)
            return jnp.maximum(hi + bh_ref[i], 0.0)

        h = lax.fori_loop(0, N_HIDDEN, body, h, unroll=True)

        # ValueHead.linear1: Linear(256,256) + ReLU
        v = jnp.dot(h.astype(jnp.bfloat16), wv1_ref[...],
                    preferred_element_type=jnp.float32)
        v = jnp.maximum(v + bv1, 0.0)

        # ValueHead.linear2: Linear(256,1) as VPU multiply + XLU lane reduction.
        head = jnp.sum(v * w_row, axis=-1, keepdims=True) + bv2   # (slab, 1)
        out_ref[pl.ds(start, slab), :] = head


def neural_net_forward(x, params, *, tb=2048, slab=None):
    """x: (B, INPUT_SIZE) f32. params: dict of weights. Returns (out,) with out (B, 1)."""
    B, F = x.shape
    assert F == INPUT_SIZE, F
    if slab is None:
        slab = _default_slab()

    # Batch tile: as large as useful (amortize per-grid-step overhead), a
    # multiple of the in-kernel slab, and >= 2 grid steps whenever B allows so
    # v7x megacore has work on both cores.  No batch padding of x: grid =
    # cdiv(B, tb); the last block's OOB rows produce garbage that is sliced off.
    tb_cap = max(slab, _round_up(min(tb, B), slab))
    num_steps = pl.cdiv(B, tb_cap)
    if num_steps < 2 and B > slab:
        num_steps = 2
    tb = max(slab, _round_up(pl.cdiv(B, num_steps), slab))
    num_steps = pl.cdiv(B, tb)
    B_pad = num_steps * tb

    in_specs = [
        # streaming batch tile; last dim 62 == full feature dim (pad happens in-kernel)
        pl.BlockSpec((tb, INPUT_SIZE), lambda i: (i, 0)),
        # weights / biases pinned to a constant block -> DMA'd once, VMEM-resident.
        # (~0.7 MiB total; default double-buffering of these constants is harmless,
        #  so pipeline_mode is left at its default.)
        pl.BlockSpec((INPUT_SIZE_PADDED, N_NODES), lambda i: (0, 0)),     # w0 (bf16, zero rows 62..63)
        pl.BlockSpec((1, N_NODES), lambda i: (0, 0)),                     # b0 (f32)
        pl.BlockSpec((N_HIDDEN, N_NODES, N_NODES), lambda i: (0, 0, 0)),  # wh (bf16)
        pl.BlockSpec((N_HIDDEN, 1, N_NODES), lambda i: (0, 0, 0)),        # bh (f32)
        pl.BlockSpec((N_NODES, HEAD_HIDDEN), lambda i: (0, 0)),           # wv1 (bf16)
        pl.BlockSpec((1, HEAD_HIDDEN), lambda i: (0, 0)),                 # bv1 (f32)
        pl.BlockSpec((1, HEAD_HIDDEN), lambda i: (0, 0)),                 # wv2 row (bf16)
        pl.BlockSpec(memory_space=pltpu.MemorySpace.SMEM),                # bv2 scalar
    ]
    out_specs = pl.BlockSpec((tb, 1), lambda i: (i, 0))

    out = pl.pallas_call(
        _mlp_kernel,
        out_shape=jax.ShapeDtypeStruct((B_pad, 1), jnp.float32),
        grid=(num_steps,),
        in_specs=in_specs,
        out_specs=out_specs,
        scratch_shapes=[pltpu.VMEM((slab, INPUT_SIZE_PADDED), jnp.float32)],
        compiler_params=pltpu.CompilerParams(
            dimension_semantics=("parallel",)),
    )(
        x,
        params["w0"], params["b0"],
        params["wh"], params["bh"],
        params["wv1"], params["bv1"],
        params["wv2"], params["bv2"],
    )
    return (out[:B],)


def init_params(key):
    """Deterministic parameter init mirroring the PyTorch module's shapes.

    PyTorch Linear(in, out) has weight (out, in); we store the transpose
    (in, out) so the kernel computes x @ W + b with identical semantics.
    Weights are cast to bfloat16 (MXU-native), biases stay f32.
    wv2 is stored as a (1, 256) row; w0 is zero-padded 62 -> 64 input rows.
    """
    keys = jax.random.split(key, 16)

    def uinit(k, shape, fan_in):
        bound = 1.0 / jnp.sqrt(fan_in)
        return jax.random.uniform(k, shape, jnp.float32, -bound, bound)

    w0 = uinit(keys[0], (INPUT_SIZE, N_NODES), INPUT_SIZE)
    w0 = jnp.pad(w0, ((0, INPUT_SIZE_PADDED - INPUT_SIZE), (0, 0)))  # zero rows

    params = {
        "w0": w0.astype(jnp.bfloat16),
        "b0": uinit(keys[1], (1, N_NODES), INPUT_SIZE),
        "wh": uinit(keys[2], (N_HIDDEN, N_NODES, N_NODES), N_NODES).astype(jnp.bfloat16),
        "bh": uinit(keys[3], (N_HIDDEN, 1, N_NODES), N_NODES),
        "wv1": uinit(keys[4], (N_NODES, HEAD_HIDDEN), N_NODES).astype(jnp.bfloat16),
        "bv1": uinit(keys[5], (1, HEAD_HIDDEN), N_NODES),
        "wv2": uinit(keys[6], (1, HEAD_HIDDEN), HEAD_HIDDEN).astype(jnp.bfloat16),
        "bv2": uinit(keys[7], (1, 1), HEAD_HIDDEN),
    }
    return params


def _reference_forward(x, p):
    """Pure-JAX reference of the PyTorch forward with the same bf16 weight math."""
    x = jnp.pad(x, ((0, 0), (0, INPUT_SIZE_PADDED - x.shape[1])))
    h = jnp.dot(x.astype(jnp.bfloat16), p["w0"], preferred_element_type=jnp.float32)
    h = jnp.maximum(h + p["b0"], 0.0)
    for i in range(p["wh"].shape[0]):
        h = jnp.dot(h.astype(jnp.bfloat16), p["wh"][i], preferred_element_type=jnp.float32)
        h = jnp.maximum(h + p["bh"][i], 0.0)
    v = jnp.dot(h.astype(jnp.bfloat16), p["wv1"], preferred_element_type=jnp.float32)
    v = jnp.maximum(v + p["bv1"], 0.0)
    out = jnp.sum(v * p["wv2"].astype(jnp.float32), axis=-1, keepdims=True) + p["bv2"][0, 0]
    return (out,)


if __name__ == "__main__":
    key = jax.random.PRNGKey(0)
    pkey, xkey = jax.random.split(key)
    params = init_params(pkey)

    # B=1000 exercises the multi-step grid (2 steps), the multi-slab inner loop,
    # and the ragged last block (garbage rows sliced off); B=9 exercises the
    # degenerate single-block / non-multiple-of-8 batch path.
    for B in (1000, 9):
        x = jax.random.normal(jax.random.fold_in(xkey, B), (B, INPUT_SIZE),
                              dtype=jnp.float32)
        (out,) = neural_net_forward(x, params)
        out = jax.block_until_ready(out)

        (ref,) = _reference_forward(x, params)
        assert out.shape == (B, 1), out.shape
        assert jnp.allclose(out, ref, atol=1e-2, rtol=1e-2), f"mismatch vs reference (B={B})"

    print("KERNEL_OK")
</pallas_src>

<mosaic_0001>
module attributes {stable_mosaic.version = 11 : i64} {
  func.func @_mlp_kernel(%arg0: i32, %arg1: memref<512x62xf32, #tpu.memory_space<vmem>>, %arg2: memref<64x256xbf16, #tpu.memory_space<vmem>>, %arg3: memref<1x256xf32, #tpu.memory_space<vmem>>, %arg4: memref<4x256x256xbf16, #tpu.memory_space<vmem>>, %arg5: memref<4x1x256xf32, #tpu.memory_space<vmem>>, %arg6: memref<256x256xbf16, #tpu.memory_space<vmem>>, %arg7: memref<1x256xf32, #tpu.memory_space<vmem>>, %arg8: memref<1x256xbf16, #tpu.memory_space<vmem>>, %arg9: memref<1x1xf32, #tpu.memory_space<smem>>, %arg10: memref<512x1xf32, #tpu.memory_space<vmem>>, %arg11: memref<256x64xf32, #tpu.memory_space<vmem>>) attributes {dimension_semantics = [#tpu.dimension_semantics<parallel>], iteration_bounds = array<i64: 2>, scalar_prefetch = 0 : i64, scratch_operands = 1 : i64, tpu.core_type = #tpu.core_type<tc>, window_params = [{transform_indices = @transform_0, window_bounds = array<i64: 512, 62>}, {pipeline_mode = #tpu.pipeline_mode<synchronous>, transform_indices = @transform_1, window_bounds = array<i64: 64, 256>}, {pipeline_mode = #tpu.pipeline_mode<synchronous>, transform_indices = @transform_2, window_bounds = array<i64: 1, 256>}, {pipeline_mode = #tpu.pipeline_mode<synchronous>, transform_indices = @transform_3, window_bounds = array<i64: 4, 256, 256>}, {pipeline_mode = #tpu.pipeline_mode<synchronous>, transform_indices = @transform_4, window_bounds = array<i64: 4, 1, 256>}, {pipeline_mode = #tpu.pipeline_mode<synchronous>, transform_indices = @transform_5, window_bounds = array<i64: 256, 256>}, {pipeline_mode = #tpu.pipeline_mode<synchronous>, transform_indices = @transform_6, window_bounds = array<i64: 1, 256>}, {pipeline_mode = #tpu.pipeline_mode<synchronous>, transform_indices = @transform_7, window_bounds = array<i64: 1, 256>}, {transform_indices = @transform_8, window_bounds = array<i64: 1, 1>}, {transform_indices = @transform_9, window_bounds = array<i64: 512, 1>}]} {
    %c0 = arith.constant 0 : index
    %c0_0 = arith.constant 0 : index
    %0 = vector.load %arg3[%c0, %c0_0] : memref<1x256xf32, #tpu.memory_space<vmem>>, vector<1x256xf32>
    %c0_1 = arith.constant 0 : index
    %c0_2 = arith.constant 0 : index
    %1 = vector.load %arg7[%c0_1, %c0_2] : memref<1x256xf32, #tpu.memory_space<vmem>>, vector<1x256xf32>
    %c0_3 = arith.constant 0 : index
    %c0_4 = arith.constant 0 : index
    %2 = vector.load %arg8[%c0_3, %c0_4] : memref<1x256xbf16, #tpu.memory_space<vmem>>, vector<1x256xbf16>
    %3 = arith.extf %2 : vector<1x256xbf16> to vector<1x256xf32>
    %c0_5 = arith.constant 0 : index
    %c0_6 = arith.constant 0 : index
    %4 = memref.load %arg9[%c0_5, %c0_6] : memref<1x1xf32, #tpu.memory_space<smem>>
    %cst = arith.constant 0.000000e+00 : f32
    %5 = vector.broadcast %cst : f32 to vector<256x64xf32>
    %c0_7 = arith.constant 0 : index
    %c0_8 = arith.constant 0 : index
    %6 = vector.load %arg11[%c0_7, %c0_8] : memref<256x64xf32, #tpu.memory_space<vmem>>, vector<256x64xf32>
    tpu.vector_store %arg11[%c0_7, %c0_8], %5 {strides = array<i32>} : memref<256x64xf32, #tpu.memory_space<vmem>>, vector<256x64xf32>,
    %c0_i32 = arith.constant 0 : i32
    %c2_i32 = arith.constant 2 : i32
    %7 = arith.addi %c0_i32, %c2_i32 : i32
    %c1_i32 = arith.constant 1 : i32
    scf.for %arg12 = %c0_i32 to %7 step %c1_i32  : i32 {
      %c1_i32_10 = arith.constant 1 : i32
      %8 = arith.muli %arg12, %c1_i32_10 : i32
      %c0_i32_11 = arith.constant 0 : i32
      %9 = arith.addi %c0_i32_11, %8 : i32
      %c256_i32 = arith.constant 256 : i32
      %10 = arith.muli %9, %c256_i32 : i32
      %11 = tpu.assume_multiple %10, 256 : i32
      %12 = arith.index_cast %11 : i32 to index
      %c0_12 = arith.constant 0 : index
      %13 = vector.load %arg1[%12, %c0_12] : memref<512x62xf32, #tpu.memory_space<vmem>>, vector<256x62xf32>
      %c0_13 = arith.constant 0 : index
      %c0_14 = arith.constant 0 : index
      %14 = vector.load %arg11[%c0_13, %c0_14] : memref<256x64xf32, #tpu.memory_space<vmem>>, vector<256x62xf32>
      tpu.vector_store %arg11[%c0_13, %c0_14], %13 {strides = array<i32>} : memref<256x64xf32, #tpu.memory_space<vmem>>, vector<256x62xf32>,
      %c0_15 = arith.constant 0 : index
      %c0_16 = arith.constant 0 : index
      %15 = vector.load %arg11[%c0_15, %c0_16] : memref<256x64xf32, #tpu.memory_space<vmem>>, vector<256x64xf32>
      %16 = arith.truncf %15 : vector<256x64xf32> to vector<256x64xbf16>
      %c0_17 = arith.constant 0 : index
      %c0_18 = arith.constant 0 : index
      %17 = vector.load %arg2[%c0_17, %c0_18] : memref<64x256xbf16, #tpu.memory_space<vmem>>, vector<64x256xbf16>
      %cst_19 = arith.constant dense<0.000000e+00> : vector<256x256xf32>
      %18 = tpu.matmul %16, %17, %cst_19 {dimension_numbers = #tpu.dot_dimension_numbers<[1], [0], [0], [1], [0, 0, 1, 1], [], []>} : vector<256x64xbf16>, vector<64x256xbf16>, vector<256x256xf32> -> vector<256x256xf32>
      %19 = vector.broadcast %0 : vector<1x256xf32> to vector<256x256xf32>
      %20 = arith.addf %18, %19 : vector<256x256xf32>
      %cst_20 = arith.constant 0.000000e+00 : f32
      %21 = vector.broadcast %cst_20 : f32 to vector<256x256xf32>
      %22 = arith.maximumf %20, %21 : vector<256x256xf32>
      %c0_i32_21 = arith.constant 0 : i32
      %23 = arith.truncf %22 : vector<256x256xf32> to vector<256x256xbf16>
      %24 = arith.index_cast %c0_i32_21 : i32 to index
      %c0_22 = arith.constant 0 : index
      %c0_23 = arith.constant 0 : index
      %25 = vector.load %arg4[%24, %c0_22, %c0_23] : memref<4x256x256xbf16, #tpu.memory_space<vmem>>, vector<1x256x256xbf16>
      %26 = vector.shape_cast %25 : vector<1x256x256xbf16> to vector<256x256xbf16>
      %cst_24 = arith.constant dense<0.000000e+00> : vector<256x256xf32>
      %27 = tpu.matmul %23, %26, %cst_24 {dimension_numbers = #tpu.dot_dimension_numbers<[1], [0], [0], [1], [0, 0, 1, 1], [], []>} : vector<256x256xbf16>, vector<256x256xbf16>, vector<256x256xf32> -> vector<256x256xf32>
      %28 = arith.index_cast %c0_i32_21 : i32 to index
      %c0_25 = arith.constant 0 : index
      %c0_26 = arith.constant 0 : index
      %29 = vector.load %arg5[%28, %c0_25, %c0_26] : memref<4x1x256xf32, #tpu.memory_space<vmem>>, vector<1x1x256xf32>
      %30 = vector.shape_cast %29 : vector<1x1x256xf32> to vector<1x256xf32>
      %31 = vector.broadcast %30 : vector<1x256xf32> to vector<256x256xf32>
      %32 = arith.addf %27, %31 : vector<256x256xf32>
      %cst_27 = arith.constant 0.000000e+00 : f32
      %33 = vector.broadcast %cst_27 : f32 to vector<256x256xf32>
      %34 = arith.maximumf %32, %33 : vector<256x256xf32>
      %c1_i32_28 = arith.constant 1 : i32
      %35 = arith.truncf %34 : vector<256x256xf32> to vector<256x256xbf16>
      %36 = arith.index_cast %c1_i32_28 : i32 to index
      %c0_29 = arith.constant 0 : index
      %c0_30 = arith.constant 0 : index
      %37 = vector.load %arg4[%36, %c0_29, %c0_30] : memref<4x256x256xbf16, #tpu.memory_space<vmem>>, vector<1x256x256xbf16>
      %38 = vector.shape_cast %37 : vector<1x256x256xbf16> to vector<256x256xbf16>
      %cst_31 = arith.constant dense<0.000000e+00> : vector<256x256xf32>
      %39 = tpu.matmul %35, %38, %cst_31 {dimension_numbers = #tpu.dot_dimension_numbers<[1], [0], [0], [1], [0, 0, 1, 1], [], []>} : vector<256x256xbf16>, vector<256x256xbf16>, vector<256x256xf32> -> vector<256x256xf32>
      %40 = arith.index_cast %c1_i32_28 : i32 to index
      %c0_32 = arith.constant 0 : index
      %c0_33 = arith.constant 0 : index
      %41 = vector.load %arg5[%40, %c0_32, %c0_33] : memref<4x1x256xf32, #tpu.memory_space<vmem>>, vector<1x1x256xf32>
      %42 = vector.shape_cast %41 : vector<1x1x256xf32> to vector<1x256xf32>
      %43 = vector.broadcast %42 : vector<1x256xf32> to vector<256x256xf32>
      %44 = arith.addf %39, %43 : vector<256x256xf32>
      %cst_34 = arith.constant 0.000000e+00 : f32
      %45 = vector.broadcast %cst_34 : f32 to vector<256x256xf32>
      %46 = arith.maximumf %44, %45 : vector<256x256xf32>
      %c2_i32_35 = arith.constant 2 : i32
      %47 = arith.truncf %46 : vector<256x256xf32> to vector<256x256xbf16>
      %48 = arith.index_cast %c2_i32_35 : i32 to index
      %c0_36 = arith.constant 0 : index
      %c0_37 = arith.constant 0 : index
      %49 = vector.load %arg4[%48, %c0_36, %c0_37] : memref<4x256x256xbf16, #tpu.memory_space<vmem>>, vector<1x256x256xbf16>
      %50 = vector.shape_cast %49 : vector<1x256x256xbf16> to vector<256x256xbf16>
      %cst_38 = arith.constant dense<0.000000e+00> : vector<256x256xf32>
      %51 = tpu.matmul %47, %50, %cst_38 {dimension_numbers = #tpu.dot_dimension_numbers<[1], [0], [0], [1], [0, 0, 1, 1], [], []>} : vector<256x256xbf16>, vector<256x256xbf16>, vector<256x256xf32> -> vector<256x256xf32>
      %52 = arith.index_cast %c2_i32_35 : i32 to index
      %c0_39 = arith.constant 0 : index
      %c0_40 = arith.constant 0 : index
      %53 = vector.load %arg5[%52, %c0_39, %c0_40] : memref<4x1x256xf32, #tpu.memory_space<vmem>>, vector<1x1x256xf32>
      %54 = vector.shape_cast %53 : vector<1x1x256xf32> to vector<1x256xf32>
      %55 = vector.broadcast %54 : vector<1x256xf32> to vector<256x256xf32>
      %56 = arith.addf %51, %55 : vector<256x256xf32>
      %cst_41 = arith.constant 0.000000e+00 : f32
      %57 = vector.broadcast %cst_41 : f32 to vector<256x256xf32>
      %58 = arith.maximumf %56, %57 : vector<256x256xf32>
      %c3_i32 = arith.constant 3 : i32
      %59 = arith.truncf %58 : vector<256x256xf32> to vector<256x256xbf16>
      %60 = arith.index_cast %c3_i32 : i32 to index
      %c0_42 = arith.constant 0 : index
      %c0_43 = arith.constant 0 : index
      %61 = vector.load %arg4[%60, %c0_42, %c0_43] : memref<4x256x256xbf16, #tpu.memory_space<vmem>>, vector<1x256x256xbf16>
      %62 = vector.shape_cast %61 : vector<1x256x256xbf16> to vector<256x256xbf16>
      %cst_44 = arith.constant dense<0.000000e+00> : vector<256x256xf32>
      %63 = tpu.matmul %59, %62, %cst_44 {dimension_numbers = #tpu.dot_dimension_numbers<[1], [0], [0], [1], [0, 0, 1, 1], [], []>} : vector<256x256xbf16>, vector<256x256xbf16>, vector<256x256xf32> -> vector<256x256xf32>
      %64 = arith.index_cast %c3_i32 : i32 to index
      %c0_45 = arith.constant 0 : index
      %c0_46 = arith.constant 0 : index
      %65 = vector.load %arg5[%64, %c0_45, %c0_46] : memref<4x1x256xf32, #tpu.memory_space<vmem>>, vector<1x1x256xf32>
      %66 = vector.shape_cast %65 : vector<1x1x256xf32> to vector<1x256xf32>
      %67 = vector.broadcast %66 : vector<1x256xf32> to vector<256x256xf32>
      %68 = arith.addf %63, %67 : vector<256x256xf32>
      %cst_47 = arith.constant 0.000000e+00 : f32
      %69 = vector.broadcast %cst_47 : f32 to vector<256x256xf32>
      %70 = arith.maximumf %68, %69 : vector<256x256xf32>
      %c4_i32 = arith.constant 4 : i32
      %71 = arith.truncf %70 : vector<256x256xf32> to vector<256x256xbf16>
      %c0_48 = arith.constant 0 : index
      %c0_49 = arith.constant 0 : index
      %72 = vector.load %arg6[%c0_48, %c0_49] : memref<256x256xbf16, #tpu.memory_space<vmem>>, vector<256x256xbf16>
      %cst_50 = arith.constant dense<0.000000e+00> : vector<256x256xf32>
      %73 = tpu.matmul %71, %72, %cst_50 {dimension_numbers = #tpu.dot_dimension_numbers<[1], [0], [0], [1], [0, 0, 1, 1], [], []>} : vector<256x256xbf16>, vector<256x256xbf16>, vector<256x256xf32> -> vector<256x256xf32>
      %74 = vector.broadcast %1 : vector<1x256xf32> to vector<256x256xf32>
      %75 = arith.addf %73, %74 : vector<256x256xf32>
      %cst_51 = arith.constant 0.000000e+00 : f32
      %76 = vector.broadcast %cst_51 : f32 to vector<256x256xf32>
      %77 = arith.maximumf %75, %76 : vector<256x256xf32>
      %78 = vector.broadcast %3 : vector<1x256xf32> to vector<256x256xf32>
      %79 = arith.mulf %77, %78 : vector<256x256xf32>
      %cst_52 = arith.constant dense<0.000000e+00> : vector<256xf32>
      %80 = vector.multi_reduction <add>, %79, %cst_52 [1] : vector<256x256xf32> to vector<256xf32>
      %81 = vector.shape_cast %80 : vector<256xf32> to vector<256x1xf32>
      %82 = vector.broadcast %4 : f32 to vector<256x1xf32>
      %83 = arith.addf %81, %82 : vector<256x1xf32>
      %84 = arith.index_cast %11 : i32 to index
      %c0_53 = arith.constant 0 : index
      %85 = vector.load %arg10[%84, %c0_53] : memref<512x1xf32, #tpu.memory_space<vmem>>, vector<256x1xf32>
      tpu.vector_store %arg10[%84, %c0_53], %83 {strides = array<i32>} : memref<512x1xf32, #tpu.memory_space<vmem>>, vector<256x1xf32>,
    }
    %c2_i32_9 = arith.constant 2 : i32
    return
  }
  func.func @transform_0(%arg0: i32) -> (i32, i32) {
    %c0_i32 = arith.constant 0 : i32
    %c0_i32_0 = arith.constant 0 : i32
    return %arg0, %c0_i32 : i32, i32
  }
  func.func @transform_1(%arg0: i32) -> (i32, i32) {
    %c0_i32 = arith.constant 0 : i32
    %c0_i32_0 = arith.constant 0 : i32
    %c0_i32_1 = arith.constant 0 : i32
    return %c0_i32, %c0_i32_0 : i32, i32
  }
  func.func @transform_2(%arg0: i32) -> (i32, i32) {
    %c0_i32 = arith.constant 0 : i32
    %c0_i32_0 = arith.constant 0 : i32
    %c0_i32_1 = arith.constant 0 : i32
    return %c0_i32, %c0_i32_0 : i32, i32
  }
  func.func @transform_3(%arg0: i32) -> (i32, i32, i32) {
    %c0_i32 = arith.constant 0 : i32
    %c0_i32_0 = arith.constant 0 : i32
    %c0_i32_1 = arith.constant 0 : i32
    %c0_i32_2 = arith.constant 0 : i32
    return %c0_i32, %c0_i32_0, %c0_i32_1 : i32, i32, i32
  }
  func.func @transform_4(%arg0: i32) -> (i32, i32, i32) {
    %c0_i32 = arith.constant 0 : i32
    %c0_i32_0 = arith.constant 0 : i32
    %c0_i32_1 = arith.constant 0 : i32
    %c0_i32_2 = arith.constant 0 : i32
    return %c0_i32, %c0_i32_0, %c0_i32_1 : i32, i32, i32
  }
  func.func @transform_5(%arg0: i32) -> (i32, i32) {
    %c0_i32 = arith.constant 0 : i32
    %c0_i32_0 = arith.constant 0 : i32
    %c0_i32_1 = arith.constant 0 : i32
    return %c0_i32, %c0_i32_0 : i32, i32
  }
  func.func @transform_6(%arg0: i32) -> (i32, i32) {
    %c0_i32 = arith.constant 0 : i32
    %c0_i32_0 = arith.constant 0 : i32
    %c0_i32_1 = arith.constant 0 : i32
    return %c0_i32, %c0_i32_0 : i32, i32
  }
  func.func @transform_7(%arg0: i32) -> (i32, i32) {
    %c0_i32 = arith.constant 0 : i32
    %c0_i32_0 = arith.constant 0 : i32
    %c0_i32_1 = arith.constant 0 : i32
    return %c0_i32, %c0_i32_0 : i32, i32
  }
  func.func @transform_8(%arg0: i32) -> (i32, i32) {
    %c0_i32 = arith.constant 0 : i32
    %c0_i32_0 = arith.constant 0 : i32
    %c0_i32_1 = arith.constant 0 : i32
    return %c0_i32, %c0_i32_0 : i32, i32
  }
  func.func @transform_9(%arg0: i32) -> (i32, i32) {
    %c0_i32 = arith.constant 0 : i32
    %c0_i32_0 = arith.constant 0 : i32
    return %arg0, %c0_i32 : i32, i32
  }
}

</mosaic_0001>

<llo_original>
// kernel: tpu_custom_call.1
$region0: #{tpu_custom_call.1}
  #allocation0 [shape = 'u32[]', space=smem, size = 0x4, offset = 0x4, fixed_abs, tag = 'smem constant byte address 0x4 - core index']
  #allocation1 [shape = 'u32[144,128]{1,0:T(1,128)}', space=vmem, size = 0x12000, scoped, tag = 'internal scratch']
  #allocation2 [shape = 'f32[256,64]{1,0:T(8,128)}', space=vmem, size = 0x20000, scoped, tag = 'scratch operand']
  #allocation3 [shape = 'f32[1,1]{1,0:T(1,128)S(6)}', space=smem, size = 0x200, scoped, tag = 'scoped memory for tpu_custom_call.1']
  %s0 = inlined_call_operand.vmem [shape: f32[1000,62], index: 0, kind: input, shape index: {}]
  %s1 = inlined_call_operand.vmem [shape: bf16[64,256], index: 1, kind: input, shape index: {}]
  %s2 = inlined_call_operand.vmem [shape: f32[1,256], index: 2, kind: input, shape index: {}]
  %s3 = inlined_call_operand.vmem [shape: bf16[4,256,256], index: 3, kind: input, shape index: {}]
  %s4 = inlined_call_operand.vmem [shape: f32[4,1,256], index: 4, kind: input, shape index: {}]
  %s5 = inlined_call_operand.vmem [shape: bf16[256,256], index: 5, kind: input, shape index: {}]
  %s6 = inlined_call_operand.vmem [shape: f32[1,256], index: 6, kind: input, shape index: {}]
  %s7 = inlined_call_operand.vmem [shape: bf16[1,256], index: 7, kind: input, shape index: {}]
  %s8 = inlined_call_operand.<no memory space> [shape: f32[1,1], index: 8, kind: input, shape index: {}]
  %s9 = inlined_call_operand.vmem [shape: f32[1024,1], index: 9, kind: output, shape index: {}]
  %s10 = sld [smem:[#allocation0]]
  $region76: #{tpu_custom_call.1} parent=0
    _
  %s12 = ssub.s32 1, %s10
  %s13 = scalar_select 0, %s12, %s10
  %14 = sst [smem:[#allocation3]] %s8
  loop: start=0, step=1, limit=4
  $region2: #{tpu_custom_call.1} parent=0 // loop_pre_header
    _
  $region3: #{tpu_custom_call.1} parent=0 // loop_header
    %s16 = sphi 0, %s20
    %p17 = scmp.ge.s32.totalorder %s16, 4
    %s26 = sphi 0, %s28
    %s29 = sphi 0, %s26
    %s30 = sphi 0, %s29
    %s46 = sphi 0, %s30
    %s50 = sphi 0, %s50
    %s52 = sphi 0, %s50
    %s53 = sphi 0, %s52
    %s67 = sphi 0, %s53
    %s71 = sphi 0, %s71
    %s73 = sphi 0, %s71
    %s74 = sphi 0, %s73
    %s88 = sphi 0, %s74
    %s92 = sphi 0, %s92
    %s94 = sphi 0, %s92
    %s95 = sphi 0, %s94
    %s109 = sphi 0, %s95
    %s113 = sphi 0, %s113
    %s115 = sphi 0, %s113
    %s116 = sphi 0, %s115
    %s130 = sphi 0, %s116
    %s134 = sphi 0, %s134
    %s136 = sphi 0, %s134
    %s137 = sphi 0, %s136
    %s151 = sphi 0, %s137
    %s155 = sphi 0, %s155
    %s157 = sphi 0, %s155
    %s158 = sphi 0, %s157
    %s172 = sphi 0, %s158
    %s176 = sphi 0, %s176
    %s178 = sphi 0, %s176
    %s179 = sphi 0, %s178
    %s193 = sphi 0, %s179
    %s197 = sphi 0, %s197
    %s199 = sphi 0, %s197
    %s200 = sphi 0, %s199
    %s214 = sphi 0, %s200
    %s220 = sphi 0, %s222
    %s223 = sphi 0, %s220
    %s224 = sphi 0, %s223
    %s240 = sphi 0, %s224
  $region4: #{tpu_custom_call.1} parent=0 // loop_header_branch
    %19 = sbr.rel (%p17) target = $region8
  $region5: #{tpu_custom_call.1} parent=0 // loop_body
    %s21 = ssub.s32 %s16, 1
    %s22 = ssub.s32 %s16, 2
    %s23 = sadd.s32 %s16, 1
    %s24 = ssub.s32 %s16, %s23
    %p25 = scmp.eq.s32.totalorder %s24, 0
    %s27 = sadd.s32 %s26, 1
    %s28 = scalar_select %p25, %s26, %s27
    %p31 = pneg %p25
    %p32 = scmp.eq.s32.totalorder %s16, 1
    %p33 = por %p31, %p32
    %p34 = scmp.ne.s32.totalorder %s26, %s29
    %p35 = scmp.eq.s32.totalorder %s16, 0
    %p36 = por %p34, %p35
    %p37 = scmp.ne.s32.totalorder %s26, %s29
    %p38 = scmp.eq.s32.totalorder %s21, 1
    %p39 = por %p37, %p38
    %p40 = scmp.ne.s32.totalorder %s29, %s30
    %p41 = scmp.eq.s32.totalorder %s21, 0
    %p42 = por %p40, %p41
    %p43 = scmp.ne.s32.totalorder %s29, %s30
    %p44 = scmp.eq.s32.totalorder %s22, 1
    %p45 = por %p43, %p44
    %p47 = scmp.ne.s32.totalorder %s30, %s46
    %p48 = scmp.eq.s32.totalorder %s22, 0
    %p49 = por %p47, %p48
    %s51 = sadd.s32 %s50, 1
    %p54 = scmp.eq.s32.totalorder %s16, 1
    %p55 = scmp.ne.s32.totalorder %s50, %s52
    %p56 = scmp.eq.s32.totalorder %s16, 0
    %p57 = por %p55, %p56
    %p58 = scmp.ne.s32.totalorder %s50, %s52
    %p59 = scmp.eq.s32.totalorder %s21, 1
    %p60 = por %p58, %p59
    %p61 = scmp.ne.s32.totalorder %s52, %s53
    %p62 = scmp.eq.s32.totalorder %s21, 0
    %p63 = por %p61, %p62
    %p64 = scmp.ne.s32.totalorder %s52, %s53
    %p65 = scmp.eq.s32.totalorder %s22, 1
    %p66 = por %p64, %p65
    %p68 = scmp.ne.s32.totalorder %s53, %s67
    %p69 = scmp.eq.s32.totalorder %s22, 0
    %p70 = por %p68, %p69
    %s72 = sadd.s32 %s71, 1
    %p75 = scmp.eq.s32.totalorder %s16, 1
    %p76 = scmp.ne.s32.totalorder %s71, %s73
    %p77 = scmp.eq.s32.totalorder %s16, 0
    %p78 = por %p76, %p77
    %p79 = scmp.ne.s32.totalorder %s71, %s73
    %p80 = scmp.eq.s32.totalorder %s21, 1
    %p81 = por %p79, %p80
    %p82 = scmp.ne.s32.totalorder %s73, %s74
    %p83 = scmp.eq.s32.totalorder %s21, 0
    %p84 = por %p82, %p83
    %p85 = scmp.ne.s32.totalorder %s73, %s74
    %p86 = scmp.eq.s32.totalorder %s22, 1
    %p87 = por %p85, %p86
    %p89 = scmp.ne.s32.totalorder %s74, %s88
    %p90 = scmp.eq.s32.totalorder %s22, 0
    %p91 = por %p89, %p90
    %s93 = sadd.s32 %s92, 1
    %p96 = scmp.eq.s32.totalorder %s16, 1
    %p97 = scmp.ne.s32.totalorder %s92, %s94
    %p98 = scmp.eq.s32.totalorder %s16, 0
    %p99 = por %p97, %p98
    %p100 = scmp.ne.s32.totalorder %s92, %s94
    %p101 = scmp.eq.s32.totalorder %s21, 1
    %p102 = por %p100, %p101
    %p103 = scmp.ne.s32.totalorder %s94, %s95
    %p104 = scmp.eq.s32.totalorder %s21, 0
    %p105 = por %p103, %p104
    %p106 = scmp.ne.s32.totalorder %s94, %s95
    %p107 = scmp.eq.s32.totalorder %s22, 1
    %p108 = por %p106, %p107
    %p110 = scmp.ne.s32.totalorder %s95, %s109
    %p111 = scmp.eq.s32.totalorder %s22, 0
    %p112 = por %p110, %p111
    %s114 = sadd.s32 %s113, 1
    %p117 = scmp.eq.s32.totalorder %s16, 1
    %p118 = scmp.ne.s32.totalorder %s113, %s115
    %p119 = scmp.eq.s32.totalorder %s16, 0
    %p120 = por %p118, %p119
    %p121 = scmp.ne.s32.totalorder %s113, %s115
    %p122 = scmp.eq.s32.totalorder %s21, 1
    %p123 = por %p121, %p122
    %p124 = scmp.ne.s32.totalorder %s115, %s116
    %p125 = scmp.eq.s32.totalorder %s21, 0
    %p126 = por %p124, %p125
    %p127 = scmp.ne.s32.totalorder %s115, %s116
    %p128 = scmp.eq.s32.totalorder %s22, 1
    %p129 = por %p127, %p128
    %p131 = scmp.ne.s32.totalorder %s116, %s130
    %p132 = scmp.eq.s32.totalorder %s22, 0
    %p133 = por %p131, %p132
    %s135 = sadd.s32 %s134, 1
    %p138 = scmp.eq.s32.totalorder %s16, 1
    %p139 = scmp.ne.s32.totalorder %s134, %s136
    %p140 = scmp.eq.s32.totalorder %s16, 0
    %p141 = por %p139, %p140
    %p142 = scmp.ne.s32.totalorder %s134, %s136
    %p143 = scmp.eq.s32.totalorder %s21, 1
    %p144 = por %p142, %p143
    %p145 = scmp.ne.s32.totalorder %s136, %s137
    %p146 = scmp.eq.s32.totalorder %s21, 0
    %p147 = por %p145, %p146
    %p148 = scmp.ne.s32.totalorder %s136, %s137
    %p149 = scmp.eq.s32.totalorder %s22, 1
    %p150 = por %p148, %p149
    %p152 = scmp.ne.s32.totalorder %s137, %s151
    %p153 = scmp.eq.s32.totalorder %s22, 0
    %p154 = por %p152, %p153
    %s156 = sadd.s32 %s155, 1
    %p159 = scmp.eq.s32.totalorder %s16, 1
    %p160 = scmp.ne.s32.totalorder %s155, %s157
    %p161 = scmp.eq.s32.totalorder %s16, 0
    %p162 = por %p160, %p161
    %p163 = scmp.ne.s32.totalorder %s155, %s157
    %p164 = scmp.eq.s32.totalorder %s21, 1
    %p165 = por %p163, %p164
    %p166 = scmp.ne.s32.totalorder %s157, %s158
    %p167 = scmp.eq.s32.totalorder %s21, 0
    %p168 = por %p166, %p167
    %p169 = scmp.ne.s32.totalorder %s157, %s158
    %p170 = scmp.eq.s32.totalorder %s22, 1
    %p171 = por %p169, %p170
    %p173 = scmp.ne.s32.totalorder %s158, %s172
    %p174 = scmp.eq.s32.totalorder %s22, 0
    %p175 = por %p173, %p174
    %s177 = sadd.s32 %s176, 1
    %p180 = scmp.eq.s32.totalorder %s16, 1
    %p181 = scmp.ne.s32.totalorder %s176, %s178
    %p182 = scmp.eq.s32.totalorder %s16, 0
    %p183 = por %p181, %p182
    %p184 = scmp.ne.s32.totalorder %s176, %s178
    %p185 = scmp.eq.s32.totalorder %s21, 1
    %p186 = por %p184, %p185
    %p187 = scmp.ne.s32.totalorder %s178, %s179
    %p188 = scmp.eq.s32.totalorder %s21, 0
    %p189 = por %p187, %p188
    %p190 = scmp.ne.s32.totalorder %s178, %s179
    %p191 = scmp.eq.s32.totalorder %s22, 1
    %p192 = por %p190, %p191
    %p194 = scmp.ne.s32.totalorder %s179, %s193
    %p195 = scmp.eq.s32.totalorder %s22, 0
    %p196 = por %p194, %p195
    %s198 = sadd.s32 %s197, 1
    %p201 = scmp.eq.s32.totalorder %s16, 1
    %p202 = scmp.ne.s32.totalorder %s197, %s199
    %p203 = scmp.eq.s32.totalorder %s16, 0
    %p204 = por %p202, %p203
    %p205 = scmp.ne.s32.totalorder %s197, %s199
    %p206 = scmp.eq.s32.totalorder %s21, 1
    %p207 = por %p205, %p206
    %p208 = scmp.ne.s32.totalorder %s199, %s200
    %p209 = scmp.eq.s32.totalorder %s21, 0
    %p210 = por %p208, %p209
    %p211 = scmp.ne.s32.totalorder %s199, %s200
    %p212 = scmp.eq.s32.totalorder %s22, 1
    %p213 = por %p211, %p212
    %p215 = scmp.ne.s32.totalorder %s200, %s214
    %p216 = scmp.eq.s32.totalorder %s22, 0
    %p217 = por %p215, %p216
    %s218 = ssub.s32 %s16, %s23
    %p219 = scmp.eq.s32.totalorder %s218, 0
    %s221 = sadd.s32 %s220, 1
    %s222 = scalar_select %p219, %s220, %s221
    %p225 = pneg %p219
    %p226 = scmp.eq.s32.totalorder %s16, 1
    %p227 = por %p225, %p226
    %p228 = scmp.ne.s32.totalorder %s220, %s223
    %p229 = scmp.eq.s32.totalorder %s16, 0
    %p230 = por %p228, %p229
    %p231 = scmp.ne.s32.totalorder %s220, %s223
    %p232 = scmp.eq.s32.totalorder %s21, 1
    %p233 = por %p231, %p232
    %p234 = scmp.ne.s32.totalorder %s223, %s224
    %p235 = scmp.eq.s32.totalorder %s21, 0
    %p236 = por %p234, %p235
    %p237 = scmp.ne.s32.totalorder %s223, %s224
    %p238 = scmp.eq.s32.totalorder %s22, 1
    %p239 = por %p237, %p238
    %p241 = scmp.ne.s32.totalorder %s224, %s240
    %p242 = scmp.eq.s32.totalorder %s22, 0
    %p243 = por %p241, %p242
    %p244 = scmp.le.s32.totalorder 1, %s16
    %p245 = scmp.lt.s32.totalorder %s16, 3
    %p246 = pnand %p244, %p245
    %p247 = pneg %p246
    // Predicated region
    $region9: #{tpu_custom_call.1} parent=5 // pred_check
      _
    $region10: #{tpu_custom_call.1} parent=5 // pred_check_branch
      %249 = sbr.rel (%p246) target = $region12
    $region11: #{tpu_custom_call.1} parent=5 // pred_region
      %s250 = ssub.s32 %s16, 1
      // Predicated region
      $region13: #{tpu_custom_call.1} parent=11 // pred_check
        %p251 = pneg %p63
      $region14: #{tpu_custom_call.1} parent=11 // pred_check_branch
        %253 = sbr.rel (%p251) target = $region16
      $region15: #{tpu_custom_call.1} parent=11 // pred_region
        _
      $region16: #{tpu_custom_call.1} parent=11 // pred_fallthru
        _
      // Predicated region
      $region17: #{tpu_custom_call.1} parent=11 // pred_check
        %p254 = pneg %p84
      $region18: #{tpu_custom_call.1} parent=11 // pred_check_branch
        %256 = sbr.rel (%p254) target = $region20
      $region19: #{tpu_custom_call.1} parent=11 // pred_region
        _
      $region20: #{tpu_custom_call.1} parent=11 // pred_fallthru
        _
      // Predicated region
      $region21: #{tpu_custom_call.1} parent=11 // pred_check
        %p257 = pneg %p105
      $region22: #{tpu_custom_call.1} parent=11 // pred_check_branch
        %259 = sbr.rel (%p257) target = $region24
      $region23: #{tpu_custom_call.1} parent=11 // pred_region
        _
      $region24: #{tpu_custom_call.1} parent=11 // pred_fallthru
        _
      // Predicated region
      $region25: #{tpu_custom_call.1} parent=11 // pred_check
        %p260 = pneg %p126
      $region26: #{tpu_custom_call.1} parent=11 // pred_check_branch
        %262 = sbr.rel (%p260) target = $region28
      $region27: #{tpu_custom_call.1} parent=11 // pred_region
        _
      $region28: #{tpu_custom_call.1} parent=11 // pred_fallthru
        _
      // Predicated region
      $region29: #{tpu_custom_call.1} parent=11 // pred_check
        %p263 = pneg %p147
      $region30: #{tpu_custom_call.1} parent=11 // pred_check_branch
        %265 = sbr.rel (%p263) target = $region32
      $region31: #{tpu_custom_call.1} parent=11 // pred_region
        _
      $region32: #{tpu_custom_call.1} parent=11 // pred_fallthru
        _
      // Predicated region
      $region33: #{tpu_custom_call.1} parent=11 // pred_check
        %p266 = pneg %p168
      $region34: #{tpu_custom_call.1} parent=11 // pred_check_branch
        %268 = sbr.rel (%p266) target = $region36
      $region35: #{tpu_custom_call.1} parent=11 // pred_region
        _
      $region36: #{tpu_custom_call.1} parent=11 // pred_fallthru
        _
      // Predicated region
      $region37: #{tpu_custom_call.1} parent=11 // pred_check
        %p269 = pneg %p189
      $region38: #{tpu_custom_call.1} parent=11 // pred_check_branch
        %271 = sbr.rel (%p269) target = $region40
      $region39: #{tpu_custom_call.1} parent=11 // pred_region
        _
      $region40: #{tpu_custom_call.1} parent=11 // pred_fallthru
        _
      // Predicated region
      $region41: #{tpu_custom_call.1} parent=11 // pred_check
        %p272 = pneg %p210
      $region42: #{tpu_custom_call.1} parent=11 // pred_check_branch
        %274 = sbr.rel (%p272) target = $region44
      $region43: #{tpu_custom_call.1} parent=11 // pred_region
        _
      $region44: #{tpu_custom_call.1} parent=11 // pred_fallthru
        _
    $region12: #{tpu_custom_call.1} parent=5 // pred_fallthru
      _
    %p275 = scmp.lt.s32.totalorder %s16, 2
    // Predicated region
    $region45: #{tpu_custom_call.1} parent=5 // pred_check
      %p276 = pneg %p275
    $region46: #{tpu_custom_call.1} parent=5 // pred_check_branch
      %278 = sbr.rel (%p276) target = $region48
    $region47: #{tpu_custom_call.1} parent=5 // pred_region
      // Predicated region
      $region49: #{tpu_custom_call.1} parent=47 // pred_check
        %p279 = pneg %p36
      $region50: #{tpu_custom_call.1} parent=47 // pred_check_branch
        %281 = sbr.rel (%p279) target = $region52
      $region51: #{tpu_custom_call.1} parent=47 // pred_region
        %s282 = smul.u32 64, %s16
        %s283 = ssub.s32 125, %s282
        %p284 = scmp.lt.s32.totalorder %s283, 64
        %s285 = scalar_select %p284, %s283, 64
        %s286 = smul.u32 128, %s285
        %p287 = scmp.lt.s32.totalorder %s282, 124
        %s288 = scalar_select %p287, %s282, 124
        %s289 = smul.addr %s288, 8
        %s290 = scalar_lea.vmem %s0, %s289
        %s291 = smul.u32 64, %s16
        %s292 = ssub.s32 125, %s291
        %p293 = scmp.lt.s32.totalorder %s292, 64
        %s294 = scalar_select %p293, %s292, 64
        %s295 = smul.u32 128, %s294
      $region52: #{tpu_custom_call.1} parent=47 // pred_fallthru
        _
    $region48: #{tpu_custom_call.1} parent=5 // pred_fallthru
      _
    %p296 = scmp.le.s32.totalorder 1, %s16
    %p297 = scmp.lt.s32.totalorder %s16, 3
    %p298 = pnand %p296, %p297
    %p299 = pneg %p298
    // Predicated region
    $region53: #{tpu_custom_call.1} parent=5 // pred_check
      _
    $region54: #{tpu_custom_call.1} parent=5 // pred_check_branch
      %301 = sbr.rel (%p298) target = $region56
    $region55: #{tpu_custom_call.1} parent=5 // pred_region
      %s302 = ssub.s32 %s16, 1
      %s303 = smul.u32 64, %s21
      %s304 = ssub.s32 125, %s303
      %p305 = scmp.lt.s32.totalorder %s304, 64
      %s306 = scalar_select %p305, %s304, 64
      %s307 = smul.u32 128, %s306
      %p308 = scmp.lt.s32.totalorder %s303, 124
      %s309 = scalar_select %p308, %s303, 124
      %s310 = smul.addr %s309, 8
      %s311 = scalar_lea.vmem %s0, %s310
      %p312 = pneg %p42
      %p313 = pneg %p39
      %p314 = pneg %p63
      %p315 = pneg %p60
      %p316 = pneg %p84
      %p317 = pneg %p81
      %p318 = pneg %p105
      %p319 = pneg %p102
      %p320 = pneg %p126
      %p321 = pneg %p123
      %p322 = pneg %p147
      %p323 = pneg %p144
      %p324 = pneg %p168
      %p325 = pneg %p165
      %p326 = pneg %p189
      %p327 = pneg %p186
      %p328 = pneg %p210
      %p329 = pneg %p207
      %p330 = pneg %p236
      %p331 = pneg %p233
      %s332 = smul.u32 64, %s21
      %p333 = scmp.lt.s32.totalorder %s332, 127
      %s334 = scalar_select %p333, %s332, 127
      %s335 = smul.addr %s334, 8
      %s336 = scalar_lea.vmem %s9, %s335
      %s337 = smul.u32 64, %s21
      %s338 = ssub.s32 125, %s337
      %p339 = scmp.lt.s32.totalorder %s338, 64
      %s340 = scalar_select %p339, %s338, 64
      %s341 = smul.u32 128, %s340
      %p342 = scmp.lt.s32.totalorder %s337, 124
      %s343 = scalar_select %p342, %s337, 124
      %s344 = smul.addr %s343, 8
      %s345 = scalar_lea.vmem %s0, %s344
      %s346 = smul.u32 64, %s21
      %s347 = ssub.s32 125, %s346
      %p348 = scmp.lt.s32.totalorder %s347, 64
      %s349 = scalar_select %p348, %s347, 64
      %s350 = smul.u32 128, %s349
      %s351 = smul.u32 64, %s21
      %p352 = scmp.lt.s32.totalorder %s351, 127
      %s353 = scalar_select %p352, %s351, 127
      %s354 = smul.addr %s353, 8
      %s355 = scalar_lea.vmem %s9, %s354
      %s356 = smul.u32 64, %s21
      %v358 = vld [vmem:[%s2] sm:$0x3]
      %v359 = vld [vmem:[%s6] sm:$0x3]
      %v360 = vld [vmem:[%s7] sm:$0x3]
      %v361 = vunpack.c.l.bf16 %v360
      %s362 = sld [smem:[#allocation3]]
      %vm363 = vcmask 523264
      %364 = vst.msk [vmem:[#allocation2] sm:$0xff] %vm363, 0.0
      %365 = vst.msk [vmem:[#allocation2 + $0x8] sm:$0xff] %vm363, 0.0
      %366 = vst.msk [vmem:[#allocation2 + $0x10] sm:$0xff] %vm363, 0.0
      %367 = vst.msk [vmem:[#allocation2 + $0x18] sm:$0xff] %vm363, 0.0
      %368 = vst.msk [vmem:[#allocation2 + $0x20] sm:$0xff] %vm363, 0.0
      %369 = vst.msk [vmem:[#allocation2 + $0x28] sm:$0xff] %vm363, 0.0
      %370 = vst.msk [vmem:[#allocation2 + $0x30] sm:$0xff] %vm363, 0.0
      %371 = vst.msk [vmem:[#allocation2 + $0x38] sm:$0xff] %vm363, 0.0
      %372 = vst.msk [vmem:[#allocation2 + $0x40] sm:$0xff] %vm363, 0.0
      %373 = vst.msk [vmem:[#allocation2 + $0x48] sm:$0xff] %vm363, 0.0
      %374 = vst.msk [vmem:[#allocation2 + $0x50] sm:$0xff] %vm363, 0.0
      %375 = vst.msk [vmem:[#allocation2 + $0x58] sm:$0xff] %vm363, 0.0
      %376 = vst.msk [vmem:[#allocation2 + $0x60] sm:$0xff] %vm363, 0.0
      %377 = vst.msk [vmem:[#allocation2 + $0x68] sm:$0xff] %vm363, 0.0
      %378 = vst.msk [vmem:[#allocation2 + $0x70] sm:$0xff] %vm363, 0.0
      %379 = vst.msk [vmem:[#allocation2 + $0x78] sm:$0xff] %vm363, 0.0
      %380 = vst.msk [vmem:[#allocation2 + $0x80] sm:$0xff] %vm363, 0.0
      %381 = vst.msk [vmem:[#allocation2 + $0x88] sm:$0xff] %vm363, 0.0
      %382 = vst.msk [vmem:[#allocation2 + $0x90] sm:$0xff] %vm363, 0.0
      %383 = vst.msk [vmem:[#allocation2 + $0x98] sm:$0xff] %vm363, 0.0
      %384 = vst.msk [vmem:[#allocation2 + $0xa0] sm:$0xff] %vm363, 0.0
      %385 = vst.msk [vmem:[#allocation2 + $0xa8] sm:$0xff] %vm363, 0.0
      %386 = vst.msk [vmem:[#allocation2 + $0xb0] sm:$0xff] %vm363, 0.0
      %387 = vst.msk [vmem:[#allocation2 + $0xb8] sm:$0xff] %vm363, 0.0
      %388 = vst.msk [vmem:[#allocation2 + $0xc0] sm:$0xff] %vm363, 0.0
      %389 = vst.msk [vmem:[#allocation2 + $0xc8] sm:$0xff] %vm363, 0.0
      %390 = vst.msk [vmem:[#allocation2 + $0xd0] sm:$0xff] %vm363, 0.0
      %391 = vst.msk [vmem:[#allocation2 + $0xd8] sm:$0xff] %vm363, 0.0
      %392 = vst.msk [vmem:[#allocation2 + $0xe0] sm:$0xff] %vm363, 0.0
      %393 = vst.msk [vmem:[#allocation2 + $0xe8] sm:$0xff] %vm363, 0.0
      %394 = vst.msk [vmem:[#allocation2 + $0xf0] sm:$0xff] %vm363, 0.0
      %395 = vst.msk [vmem:[#allocation2 + $0xf8] sm:$0xff] %vm363, 0.0
      loop: start=0, step=1, limit=2
      $region57: #{tpu_custom_call.1} parent=55 // loop_pre_header
        _
      $region58: #{tpu_custom_call.1} parent=55 // loop_header
        %s397 = sphi 0, %s401
        %p398 = scmp.ge.s32.totalorder %s397, 2
      $region59: #{tpu_custom_call.1} parent=55 // loop_header_branch
        %400 = sbr.rel (%p398) target = $region63
      $region60: #{tpu_custom_call.1} parent=55 // loop_body
        %s402 = smul.u32 %s397, 256
        %s403 = scalar_lea.vmem %s345, %s402
        %v404 = vld [vmem:[%s403] sm:$0xff]
        %v405 = vld [vmem:[%s403 + $0x8] sm:$0xff]
        %v406 = vld [vmem:[%s403 + $0x10] sm:$0xff]
        %v407 = vld [vmem:[%s403 + $0x18] sm:$0xff]
        %v408 = vld [vmem:[%s403 + $0x20] sm:$0xff]
        %v409 = vld [vmem:[%s403 + $0x28] sm:$0xff]
        %v410 = vld [vmem:[%s403 + $0x30] sm:$0xff]
        %v411 = vld [vmem:[%s403 + $0x38] sm:$0xff]
        %v412 = vld [vmem:[%s403 + $0x40] sm:$0xff]
        %v413 = vld [vmem:[%s403 + $0x48] sm:$0xff]
        %v414 = vld [vmem:[%s403 + $0x50] sm:$0xff]
        %v415 = vld [vmem:[%s403 + $0x58] sm:$0xff]
        %v416 = vld [vmem:[%s403 + $0x60] sm:$0xff]
        %v417 = vld [vmem:[%s403 + $0x68] sm:$0xff]
        %v418 = vld [vmem:[%s403 + $0x70] sm:$0xff]
        %v419 = vld [vmem:[%s403 + $0x78] sm:$0xff]
        %v420 = vld [vmem:[%s403 + $0x80] sm:$0xff]
        %v421 = vld [vmem:[%s403 + $0x88] sm:$0xff]
        %v422 = vld [vmem:[%s403 + $0x90] sm:$0xff]
        %v423 = vld [vmem:[%s403 + $0x98] sm:$0xff]
        %v424 = vld [vmem:[%s403 + $0xa0] sm:$0xff]
        %v425 = vld [vmem:[%s403 + $0xa8] sm:$0xff]
        %v426 = vld [vmem:[%s403 + $0xb0] sm:$0xff]
        %v427 = vld [vmem:[%s403 + $0xb8] sm:$0xff]
        %v428 = vld [vmem:[%s403 + $0xc0] sm:$0xff]
        %v429 = vld [vmem:[%s403 + $0xc8] sm:$0xff]
        %v430 = vld [vmem:[%s403 + $0xd0] sm:$0xff]
        %v431 = vld [vmem:[%s403 + $0xd8] sm:$0xff]
        %v432 = vld [vmem:[%s403 + $0xe0] sm:$0xff]
        %v433 = vld [vmem:[%s403 + $0xe8] sm:$0xff]
        %v434 = vld [vmem:[%s403 + $0xf0] sm:$0xff]
        %v435 = vld [vmem:[%s403 + $0xf8] sm:$0xff]
        %vm436 = vcmask 506880
        %437 = vst.msk [vmem:[#allocation2] sm:$0xff] %vm436, %v404
        %438 = vst.msk [vmem:[#allocation2 + $0x8] sm:$0xff] %vm436, %v405
        %439 = vst.msk [vmem:[#allocation2 + $0x10] sm:$0xff] %vm436, %v406
        %440 = vst.msk [vmem:[#allocation2 + $0x18] sm:$0xff] %vm436, %v407
        %441 = vst.msk [vmem:[#allocation2 + $0x20] sm:$0xff] %vm436, %v408
        %442 = vst.msk [vmem:[#allocation2 + $0x28] sm:$0xff] %vm436, %v409
        %443 = vst.msk [vmem:[#allocation2 + $0x30] sm:$0xff] %vm436, %v410
        %444 = vst.msk [vmem:[#allocation2 + $0x38] sm:$0xff] %vm436, %v411
        %445 = vst.msk [vmem:[#allocation2 + $0x40] sm:$0xff] %vm436, %v412
        %446 = vst.msk [vmem:[#allocation2 + $0x48] sm:$0xff] %vm436, %v413
        %447 = vst.msk [vmem:[#allocation2 + $0x50] sm:$0xff] %vm436, %v414
        %448 = vst.msk [vmem:[#allocation2 + $0x58] sm:$0xff] %vm436, %v415
        %449 = vst.msk [vmem:[#allocation2 + $0x60] sm:$0xff] %vm436, %v416
        %450 = vst.msk [vmem:[#allocation2 + $0x68] sm:$0xff] %vm436, %v417
        %451 = vst.msk [vmem:[#allocation2 + $0x70] sm:$0xff] %vm436, %v418
        %452 = vst.msk [vmem:[#allocation2 + $0x78] sm:$0xff] %vm436, %v419
        %453 = vst.msk [vmem:[#allocation2 + $0x80] sm:$0xff] %vm436, %v420
        %454 = vst.msk [vmem:[#allocation2 + $0x88] sm:$0xff] %vm436, %v421
        %455 = vst.msk [vmem:[#allocation2 + $0x90] sm:$0xff] %vm436, %v422
        %456 = vst.msk [vmem:[#allocation2 + $0x98] sm:$0xff] %vm436, %v423
        %457 = vst.msk [vmem:[#allocation2 + $0xa0] sm:$0xff] %vm436, %v424
        %458 = vst.msk [vmem:[#allocation2 + $0xa8] sm:$0xff] %vm436, %v425
        %459 = vst.msk [vmem:[#allocation2 + $0xb0] sm:$0xff] %vm436, %v426
        %460 = vst.msk [vmem:[#allocation2 + $0xb8] sm:$0xff] %vm436, %v427
        %461 = vst.msk [vmem:[#allocation2 + $0xc0] sm:$0xff] %vm436, %v428
        %462 = vst.msk [vmem:[#allocation2 + $0xc8] sm:$0xff] %vm436, %v429
        %463 = vst.msk [vmem:[#allocation2 + $0xd0] sm:$0xff] %vm436, %v430
        %464 = vst.msk [vmem:[#allocation2 + $0xd8] sm:$0xff] %vm436, %v431
        %465 = vst.msk [vmem:[#allocation2 + $0xe0] sm:$0xff] %vm436, %v432
        %466 = vst.msk [vmem:[#allocation2 + $0xe8] sm:$0xff] %vm436, %v433
        %467 = vst.msk [vmem:[#allocation2 + $0xf0] sm:$0xff] %vm436, %v434
        %468 = vst.msk [vmem:[#allocation2 + $0xf8] sm:$0xff] %vm436, %v435
        %v469 = vld [vmem:[#allocation2] sm:$0xff]
        %v470 = vld [vmem:[#allocation2 + $0x8] sm:$0xff]
        %v471 = vld [vmem:[#allocation2 + $0x10] sm:$0xff]
        %v472 = vld [vmem:[#allocation2 + $0x18] sm:$0xff]
        %v473 = vld [vmem:[#allocation2 + $0x20] sm:$0xff]
        %v474 = vld [vmem:[#allocation2 + $0x28] sm:$0xff]
        %v475 = vld [vmem:[#allocation2 + $0x30] sm:$0xff]
        %v476 = vld [vmem:[#allocation2 + $0x38] sm:$0xff]
        %v477 = vld [vmem:[#allocation2 + $0x40] sm:$0xff]
        %v478 = vld [vmem:[#allocation2 + $0x48] sm:$0xff]
        %v479 = vld [vmem:[#allocation2 + $0x50] sm:$0xff]
        %v480 = vld [vmem:[#allocation2 + $0x58] sm:$0xff]
        %v481 = vld [vmem:[#allocation2 + $0x60] sm:$0xff]
        %v482 = vld [vmem:[#allocation2 + $0x68] sm:$0xff]
        %v483 = vld [vmem:[#allocation2 + $0x70] sm:$0xff]
        %v484 = vld [vmem:[#allocation2 + $0x78] sm:$0xff]
        %v485 = vld [vmem:[#allocation2 + $0x80] sm:$0xff]
        %v486 = vld [vmem:[#allocation2 + $0x88] sm:$0xff]
        %v487 = vld [vmem:[#allocation2 + $0x90] sm:$0xff]
        %v488 = vld [vmem:[#allocation2 + $0x98] sm:$0xff]
        %v489 = vld [vmem:[#allocation2 + $0xa0] sm:$0xff]
        %v490 = vld [vmem:[#allocation2 + $0xa8] sm:$0xff]
        %v491 = vld [vmem:[#allocation2 + $0xb0] sm:$0xff]
        %v492 = vld [vmem:[#allocation2 + $0xb8] sm:$0xff]
        %v493 = vld [vmem:[#allocation2 + $0xc0] sm:$0xff]
        %v494 = vld [vmem:[#allocation2 + $0xc8] sm:$0xff]
        %v495 = vld [vmem:[#allocation2 + $0xd0] sm:$0xff]
        %v496 = vld [vmem:[#allocation2 + $0xd8] sm:$0xff]
        %v497 = vld [vmem:[#allocation2 + $0xe0] sm:$0xff]
        %v498 = vld [vmem:[#allocation2 + $0xe8] sm:$0xff]
        %v499 = vld [vmem:[#allocation2 + $0xf0] sm:$0xff]
        %v500 = vld [vmem:[#allocation2 + $0xf8] sm:$0xff]
        %v501 = vpack.c.bf16 %v470, %v469
        %v502 = vpack.c.bf16 %v472, %v471
        %v503 = vpack.c.bf16 %v474, %v473
        %v504 = vpack.c.bf16 %v476, %v475
        %v505 = vpack.c.bf16 %v478, %v477
        %v506 = vpack.c.bf16 %v480, %v479
        %v507 = vpack.c.bf16 %v482, %v481
        %v508 = vpack.c.bf16 %v484, %v483
        %v509 = vpack.c.bf16 %v486, %v485
        %v510 = vpack.c.bf16 %v488, %v487
        %v511 = vpack.c.bf16 %v490, %v489
        %v512 = vpack.c.bf16 %v492, %v491
        %v513 = vpack.c.bf16 %v494, %v493
        %v514 = vpack.c.bf16 %v496, %v495
        %v515 = vpack.c.bf16 %v498, %v497
        %v516 = vpack.c.bf16 %v500, %v499
        %v517 = vld [vmem:[%s1] sm:$0xff]
        %v518 = vld [vmem:[%s1 + $0x8] sm:$0xff]
        %v519 = vld [vmem:[%s1 + $0x10] sm:$0xff]
        %v520 = vld [vmem:[%s1 + $0x18] sm:$0xff]
        %v521 = vld [vmem:[%s1 + $0x20] sm:$0xff]
        %v522 = vld [vmem:[%s1 + $0x28] sm:$0xff]
        %v523 = vld [vmem:[%s1 + $0x30] sm:$0xff]
        %v524 = vld [vmem:[%s1 + $0x38] sm:$0xff]
        %v526 = vlaneseq
        %v527 = vshrl.u32 %v526, 7
        %v528 = vsub.s32 0, %v527
        %v529 = vrot.slane %v358, %v528
        %v530 = vlaneseq
        %v531 = vshrl.u32 %v530, 7
        %v532 = vsub.s32 1, %v531
        %v533 = vrot.slane %v358, %v532
        %v544 = vunpack.c.l.b16 %v517
        %v545 = vunpack.c.h.b16 %v517
        %v546 = vunpack.c.l.b16 %v518
        %v547 = vunpack.c.h.b16 %v518
        %v548 = vunpack.c.l.b16 %v519
        %v549 = vunpack.c.h.b16 %v519
        %v550 = vunpack.c.l.b16 %v520
        %v551 = vunpack.c.h.b16 %v520
        %v552 = vunpack.c.l.b16 %v521
        %v553 = vunpack.c.h.b16 %v521
        %v554 = vunpack.c.l.b16 %v522
        %v555 = vunpack.c.h.b16 %v522
        %v556 = vunpack.c.l.b16 %v523
        %v557 = vunpack.c.h.b16 %v523
        %v558 = vunpack.c.l.b16 %v524
        %v559 = vunpack.c.h.b16 %v524
        %v560 = vpack.c.b16 %v546, %v544
        %v561 = vpack.c.b16 %v547, %v545
        %v562 = vpack.c.b16 %v550, %v548
        %v563 = vpack.c.b16 %v551, %v549
        %v564 = vpack.c.b16 %v554, %v552
        %v565 = vpack.c.b16 %v555, %v553
        %v566 = vpack.c.b16 %v558, %v556
        %v567 = vpack.c.b16 %v559, %v557
        %v577 = vsel %vm363, %v501, 0
        %v580 = vsel %vm363, %v502, 0
        %v583 = vsel %vm363, %v503, 0
        %v586 = vsel %vm363, %v504, 0
        %v589 = vsel %vm363, %v505, 0
        %v592 = vsel %vm363, %v506, 0
        %v595 = vsel %vm363, %v507, 0
        %v598 = vsel %vm363, %v508, 0
        %v601 = vsel %vm363, %v509, 0
        %v604 = vsel %vm363, %v510, 0
        %v607 = vsel %vm363, %v511, 0
        %v610 = vsel %vm363, %v512, 0
        %v613 = vsel %vm363, %v513, 0
        %v616 = vsel %vm363, %v514, 0
        %v619 = vsel %vm363, %v515, 0
        %v622 = vsel %vm363, %v516, 0
        %624 = vmatprep.subr.bf16.mxu0 0
        %625 = vmatpush1.bf16.msra.mxu0 0
        %626 = vmatprep.subr.bf16.mxu0 0
        %627 = vmatpush1.bf16.msra.mxu0 0
        %628 = vmatprep.subr.bf16.mxu0 0
        %629 = vmatpush1.bf16.msra.mxu0 0
        %630 = vmatprep.subr.bf16.mxu0 0
        %631 = vmatpush1.bf16.msra.mxu0 0
        %632 = vmatprep.subr.bf16.mxu0 %v567
        %633 = vmatpush1.bf16.msra.mxu0 %v566
        %634 = vmatprep.subr.bf16.mxu0 %v565
        %635 = vmatpush1.bf16.msra.mxu0 %v564
        %636 = vmatprep.subr.bf16.mxu0 %v563
        %637 = vmatpush1.bf16.msra.mxu0 %v562
        %638 = vmatprep.subr.bf16.mxu0 %v561
        %639 = vmatpush1.bf16.msra.mxu0 %v560
        %640 = vmatprep.subr.bf16.mxu0 0
        %641 = vmatpush2.bf16.msra.mxu0 0
        %642 = vmatprep.subr.bf16.mxu0 0
        %643 = vmatpush2.bf16.msra.mxu0 0
        %644 = vmatprep.subr.bf16.mxu0 0
        %645 = vmatpush2.bf16.msra.mxu0 0
        %646 = vmatprep.subr.bf16.mxu0 0
        %647 = vmatpush2.bf16.msra.mxu0 0
        %648 = vmatprep.subr.bf16.mxu0 0
        %649 = vmatpush2.bf16.msra.mxu0 0
        %650 = vmatprep.subr.bf16.mxu0 0
        %651 = vmatpush2.bf16.msra.mxu0 0
        %652 = vmatprep.subr.bf16.mxu0 0
        %653 = vmatpush2.bf16.msra.mxu0 0
        %654 = vmatprep.subr.bf16.mxu0 0
        %655 = vmatpush2.bf16.msra.mxu0 0
        %656 = vmatprep.mubr.bf16.mxu0 0
        %657 = vmatmul.mubr.bf16.gmra.mxu0 %v577
        %v658 = vpop.f32.mrf.mxu0
        %v659 = vadd.f32 %v529, %v658
        %v660 = vpop.f32.mrf.mxu0
        %v661 = vadd.f32 %v533, %v660
        %v662 = vpop.f32.mrf.mxu0
        %v663 = vadd.f32 %v529, %v662
        %v664 = vpop.f32.mrf.mxu0
        %v665 = vadd.f32 %v533, %v664
        %666 = vmatprep.mubr.bf16.mxu0 0
        %667 = vmatmul.mubr.bf16.gmra.mxu0 %v580
        %v668 = vpop.f32.mrf.mxu0
        %v669 = vadd.f32 %v529, %v668
        %v670 = vpop.f32.mrf.mxu0
        %v671 = vadd.f32 %v533, %v670
        %v672 = vpop.f32.mrf.mxu0
        %v673 = vadd.f32 %v529, %v672
        %v674 = vpop.f32.mrf.mxu0
        %v675 = vadd.f32 %v533, %v674
        %676 = vmatprep.mubr.bf16.mxu0 0
        %677 = vmatmul.mubr.bf16.gmra.mxu0 %v583
        %v678 = vpop.f32.mrf.mxu0
        %v679 = vadd.f32 %v529, %v678
        %v680 = vpop.f32.mrf.mxu0
        %v681 = vadd.f32 %v533, %v680
        %v682 = vpop.f32.mrf.mxu0
        %v683 = vadd.f32 %v529, %v682
        %v684 = vpop.f32.mrf.mxu0
        %v685 = vadd.f32 %v533, %v684
        %686 = vmatprep.mubr.bf16.mxu0 0
        %687 = vmatmul.mubr.bf16.gmra.mxu0 %v586
        %v688 = vpop.f32.mrf.mxu0
        %v689 = vadd.f32 %v529, %v688
        %v690 = vpop.f32.mrf.mxu0
        %v691 = vadd.f32 %v533, %v690
        %v692 = vpop.f32.mrf.mxu0
        %v693 = vadd.f32 %v529, %v692
        %v694 = vpop.f32.mrf.mxu0
        %v695 = vadd.f32 %v533, %v694
        %696 = vmatprep.mubr.bf16.mxu0 0
        %697 = vmatmul.mubr.bf16.gmra.mxu0 %v589
        %v698 = vpop.f32.mrf.mxu0
        %v699 = vadd.f32 %v529, %v698
        %v700 = vpop.f32.mrf.mxu0
        %v701 = vadd.f32 %v533, %v700
        %v702 = vpop.f32.mrf.mxu0
        %v703 = vadd.f32 %v529, %v702
        %v704 = vpop.f32.mrf.mxu0
        %v705 = vadd.f32 %v533, %v704
        %706 = vmatprep.mubr.bf16.mxu0 0
        %707 = vmatmul.mubr.bf16.gmra.mxu0 %v592
        %v708 = vpop.f32.mrf.mxu0
        %v709 = vadd.f32 %v529, %v708
        %v710 = vpop.f32.mrf.mxu0
        %v711 = vadd.f32 %v533, %v710
        %v712 = vpop.f32.mrf.mxu0
        %v713 = vadd.f32 %v529, %v712
        %v714 = vpop.f32.mrf.mxu0
        %v715 = vadd.f32 %v533, %v714
        %716 = vmatprep.mubr.bf16.mxu0 0
        %717 = vmatmul.mubr.bf16.gmra.mxu0 %v595
        %v718 = vpop.f32.mrf.mxu0
        %v719 = vadd.f32 %v529, %v718
        %v720 = vpop.f32.mrf.mxu0
        %v721 = vadd.f32 %v533, %v720
        %v722 = vpop.f32.mrf.mxu0
        %v723 = vadd.f32 %v529, %v722
        %v724 = vpop.f32.mrf.mxu0
        %v725 = vadd.f32 %v533, %v724
        %726 = vmatprep.mubr.bf16.mxu0 0
        %727 = vmatmul.mubr.bf16.gmra.mxu0 %v598
        %v728 = vpop.f32.mrf.mxu0
        %v729 = vadd.f32 %v529, %v728
        %v730 = vpop.f32.mrf.mxu0
        %v731 = vadd.f32 %v533, %v730
        %v732 = vpop.f32.mrf.mxu0
        %v733 = vadd.f32 %v529, %v732
        %v734 = vpop.f32.mrf.mxu0
        %v735 = vadd.f32 %v533, %v734
        %736 = vmatprep.mubr.bf16.mxu0 0
        %737 = vmatmul.mubr.bf16.gmra.mxu0 %v601
        %v738 = vpop.f32.mrf.mxu0
        %v739 = vadd.f32 %v529, %v738
        %v740 = vpop.f32.mrf.mxu0
        %v741 = vadd.f32 %v533, %v740
        %v742 = vpop.f32.mrf.mxu0
        %v743 = vadd.f32 %v529, %v742
        %v744 = vpop.f32.mrf.mxu0
        %v745 = vadd.f32 %v533, %v744
        %746 = vmatprep.mubr.bf16.mxu0 0
        %747 = vmatmul.mubr.bf16.gmra.mxu0 %v604
        %v748 = vpop.f32.mrf.mxu0
        %v749 = vadd.f32 %v529, %v748
        %v750 = vpop.f32.mrf.mxu0
        %v751 = vadd.f32 %v533, %v750
        %v752 = vpop.f32.mrf.mxu0
        %v753 = vadd.f32 %v529, %v752
        %v754 = vpop.f32.mrf.mxu0
        %v755 = vadd.f32 %v533, %v754
        %756 = vmatprep.mubr.bf16.mxu0 0
        %757 = vmatmul.mubr.bf16.gmra.mxu0 %v607
        %v758 = vpop.f32.mrf.mxu0
        %v759 = vadd.f32 %v529, %v758
        %v760 = vpop.f32.mrf.mxu0
        %v761 = vadd.f32 %v533, %v760
        %v762 = vpop.f32.mrf.mxu0
        %v763 = vadd.f32 %v529, %v762
        %v764 = vpop.f32.mrf.mxu0
        %v765 = vadd.f32 %v533, %v764
        %766 = vmatprep.mubr.bf16.mxu0 0
        %767 = vmatmul.mubr.bf16.gmra.mxu0 %v610
        %v768 = vpop.f32.mrf.mxu0
        %v769 = vadd.f32 %v529, %v768
        %v770 = vpop.f32.mrf.mxu0
        %v771 = vadd.f32 %v533, %v770
        %v772 = vpop.f32.mrf.mxu0
        %v773 = vadd.f32 %v529, %v772
        %v774 = vpop.f32.mrf.mxu0
        %v775 = vadd.f32 %v533, %v774
        %776 = vmatprep.mubr.bf16.mxu0 0
        %777 = vmatmul.mubr.bf16.gmra.mxu0 %v613
        %v778 = vpop.f32.mrf.mxu0
        %v779 = vadd.f32 %v529, %v778
        %v780 = vpop.f32.mrf.mxu0
        %v781 = vadd.f32 %v533, %v780
        %v782 = vpop.f32.mrf.mxu0
        %v783 = vadd.f32 %v529, %v782
        %v784 = vpop.f32.mrf.mxu0
        %v785 = vadd.f32 %v533, %v784
        %786 = vmatprep.mubr.bf16.mxu0 0
        %787 = vmatmul.mubr.bf16.gmra.mxu0 %v616
        %v788 = vpop.f32.mrf.mxu0
        %v789 = vadd.f32 %v529, %v788
        %v790 = vpop.f32.mrf.mxu0
        %v791 = vadd.f32 %v533, %v790
        %v792 = vpop.f32.mrf.mxu0
        %v793 = vadd.f32 %v529, %v792
        %v794 = vpop.f32.mrf.mxu0
        %v795 = vadd.f32 %v533, %v794
        %796 = vmatprep.mubr.bf16.mxu0 0
        %797 = vmatmul.mubr.bf16.gmra.mxu0 %v619
        %v798 = vpop.f32.mrf.mxu0
        %v799 = vadd.f32 %v529, %v798
        %v800 = vpop.f32.mrf.mxu0
        %v801 = vadd.f32 %v533, %v800
        %v802 = vpop.f32.mrf.mxu0
        %v803 = vadd.f32 %v529, %v802
        %v804 = vpop.f32.mrf.mxu0
        %v805 = vadd.f32 %v533, %v804
        %806 = vmatprep.mubr.bf16.mxu0 0
        %807 = vmatmul.mubr.bf16.gmra.mxu0 %v622
        %v808 = vpop.f32.mrf.mxu0
        %v809 = vadd.f32 %v529, %v808
        %v810 = vpop.f32.mrf.mxu0
        %v811 = vadd.f32 %v533, %v810
        %v812 = vpop.f32.mrf.mxu0
        %v813 = vadd.f32 %v529, %v812
        %v814 = vpop.f32.mrf.mxu0
        %v815 = vadd.f32 %v533, %v814
        %816 = vdwg.mxu0
        %v817 = vmax.f32 %v659, 0.0
        %v818 = vmax.f32 %v661, 0.0
        %v819 = vmax.f32 %v663, 0.0
        %v820 = vmax.f32 %v665, 0.0
        %v821 = vmax.f32 %v669, 0.0
        %v822 = vmax.f32 %v671, 0.0
        %v823 = vmax.f32 %v673, 0.0
        %v824 = vmax.f32 %v675, 0.0
        %v825 = vmax.f32 %v679, 0.0
        %v826 = vmax.f32 %v681, 0.0
        %v827 = vmax.f32 %v683, 0.0
        %v828 = vmax.f32 %v685, 0.0
        %v829 = vmax.f32 %v689, 0.0
        %v830 = vmax.f32 %v691, 0.0
        %v831 = vmax.f32 %v693, 0.0
        %v832 = vmax.f32 %v695, 0.0
        %v833 = vmax.f32 %v699, 0.0
        %v834 = vmax.f32 %v701, 0.0
        %v835 = vmax.f32 %v703, 0.0
        %v836 = vmax.f32 %v705, 0.0
        %v837 = vmax.f32 %v709, 0.0
        %v838 = vmax.f32 %v711, 0.0
        %v839 = vmax.f32 %v713, 0.0
        %v840 = vmax.f32 %v715, 0.0
        %v841 = vmax.f32 %v719, 0.0
        %v842 = vmax.f32 %v721, 0.0
        %v843 = vmax.f32 %v723, 0.0
        %v844 = vmax.f32 %v725, 0.0
        %v845 = vmax.f32 %v729, 0.0
        %v846 = vmax.f32 %v731, 0.0
        %v847 = vmax.f32 %v733, 0.0
        %v848 = vmax.f32 %v735, 0.0
        %v849 = vmax.f32 %v739, 0.0
        %v850 = vmax.f32 %v741, 0.0
        %v851 = vmax.f32 %v743, 0.0
        %v852 = vmax.f32 %v745, 0.0
        %v853 = vmax.f32 %v749, 0.0
        %v854 = vmax.f32 %v751, 0.0
        %v855 = vmax.f32 %v753, 0.0
        %v856 = vmax.f32 %v755, 0.0
        %v857 = vmax.f32 %v759, 0.0
        %v858 = vmax.f32 %v761, 0.0
        %v859 = vmax.f32 %v763, 0.0
        %v860 = vmax.f32 %v765, 0.0
        %v861 = vmax.f32 %v769, 0.0
        %v862 = vmax.f32 %v771, 0.0
        %v863 = vmax.f32 %v773, 0.0
        %v864 = vmax.f32 %v775, 0.0
        %v865 = vmax.f32 %v779, 0.0
        %v866 = vmax.f32 %v781, 0.0
        %v867 = vmax.f32 %v783, 0.0
        %v868 = vmax.f32 %v785, 0.0
        %v869 = vmax.f32 %v789, 0.0
        %v870 = vmax.f32 %v791, 0.0
        %v871 = vmax.f32 %v793, 0.0
        %v872 = vmax.f32 %v795, 0.0
        %v873 = vmax.f32 %v799, 0.0
        %v874 = vmax.f32 %v801, 0.0
        %v875 = vmax.f32 %v803, 0.0
        %v876 = vmax.f32 %v805, 0.0
        %v877 = vmax.f32 %v809, 0.0
        %v878 = vmax.f32 %v811, 0.0
        %v879 = vmax.f32 %v813, 0.0
        %v880 = vmax.f32 %v815, 0.0
        %v881 = vpack.c.bf16 %v819, %v817
        %v882 = vpack.c.bf16 %v820, %v818
        %v883 = vpack.c.bf16 %v823, %v821
        %v884 = vpack.c.bf16 %v824, %v822
        %v885 = vpack.c.bf16 %v827, %v825
        %v886 = vpack.c.bf16 %v828, %v826
        %v887 = vpack.c.bf16 %v831, %v829
        %v888 = vpack.c.bf16 %v832, %v830
        %v889 = vpack.c.bf16 %v835, %v833
        %v890 = vpack.c.bf16 %v836, %v834
        %v891 = vpack.c.bf16 %v839, %v837
        %v892 = vpack.c.bf16 %v840, %v838
        %v893 = vpack.c.bf16 %v843, %v841
        %v894 = vpack.c.bf16 %v844, %v842
        %v895 = vpack.c.bf16 %v847, %v845
        %v896 = vpack.c.bf16 %v848, %v846
        %v897 = vpack.c.bf16 %v851, %v849
        %v898 = vpack.c.bf16 %v852, %v850
        %v899 = vpack.c.bf16 %v855, %v853
        %v900 = vpack.c.bf16 %v856, %v854
        %v901 = vpack.c.bf16 %v859, %v857
        %v902 = vpack.c.bf16 %v860, %v858
        %v903 = vpack.c.bf16 %v863, %v861
        %v904 = vpack.c.bf16 %v864, %v862
        %v905 = vpack.c.bf16 %v867, %v865
        %v906 = vpack.c.bf16 %v868, %v866
        %v907 = vpack.c.bf16 %v871, %v869
        %v908 = vpack.c.bf16 %v872, %v870
        %v909 = vpack.c.bf16 %v875, %v873
        %v910 = vpack.c.bf16 %v876, %v874
        %v911 = vpack.c.bf16 %v879, %v877
        %v912 = vpack.c.bf16 %v880, %v878
        %v913 = vld [vmem:[%s3] sm:$0xff]
        %v914 = vld [vmem:[%s3 + $0x8] sm:$0xff]
        %v915 = vld [vmem:[%s3 + $0x10] sm:$0xff]
        %v916 = vld [vmem:[%s3 + $0x18] sm:$0xff]
        %v917 = vld [vmem:[%s3 + $0x20] sm:$0xff]
        %v918 = vld [vmem:[%s3 + $0x28] sm:$0xff]
        %v919 = vld [vmem:[%s3 + $0x30] sm:$0xff]
        %v920 = vld [vmem:[%s3 + $0x38] sm:$0xff]
        %v921 = vld [vmem:[%s3 + $0x40] sm:$0xff]
        %v922 = vld [vmem:[%s3 + $0x48] sm:$0xff]
        %v923 = vld [vmem:[%s3 + $0x50] sm:$0xff]
        %v924 = vld [vmem:[%s3 + $0x58] sm:$0xff]
        %v925 = vld [vmem:[%s3 + $0x60] sm:$0xff]
        %v926 = vld [vmem:[%s3 + $0x68] sm:$0xff]
        %v927 = vld [vmem:[%s3 + $0x70] sm:$0xff]
        %v928 = vld [vmem:[%s3 + $0x78] sm:$0xff]
        %v929 = vld [vmem:[%s3 + $0x80] sm:$0xff]
        %v930 = vld [vmem:[%s3 + $0x88] sm:$0xff]
        %v931 = vld [vmem:[%s3 + $0x90] sm:$0xff]
        %v932 = vld [vmem:[%s3 + $0x98] sm:$0xff]
        %v933 = vld [vmem:[%s3 + $0xa0] sm:$0xff]
        %v934 = vld [vmem:[%s3 + $0xa8] sm:$0xff]
        %v935 = vld [vmem:[%s3 + $0xb0] sm:$0xff]
        %v936 = vld [vmem:[%s3 + $0xb8] sm:$0xff]
        %v937 = vld [vmem:[%s3 + $0xc0] sm:$0xff]
        %v938 = vld [vmem:[%s3 + $0xc8] sm:$0xff]
        %v939 = vld [vmem:[%s3 + $0xd0] sm:$0xff]
        %v940 = vld [vmem:[%s3 + $0xd8] sm:$0xff]
        %v941 = vld [vmem:[%s3 + $0xe0] sm:$0xff]
        %v942 = vld [vmem:[%s3 + $0xe8] sm:$0xff]
        %v943 = vld [vmem:[%s3 + $0xf0] sm:$0xff]
        %v944 = vld [vmem:[%s3 + $0xf8] sm:$0xff]
        %v945 = vld [vmem:[%s4] sm:$0x3]
        %v947 = vlaneseq
        %v948 = vshrl.u32 %v947, 7
        %v949 = vsub.s32 0, %v948
        %v950 = vrot.slane %v945, %v949
        %v951 = vlaneseq
        %v952 = vshrl.u32 %v951, 7
        %v953 = vsub.s32 1, %v952
        %v954 = vrot.slane %v945, %v953
        %v989 = vunpack.c.l.b16 %v913
        %v990 = vunpack.c.h.b16 %v913
        %v991 = vunpack.c.l.b16 %v914
        %v992 = vunpack.c.h.b16 %v914
        %v993 = vunpack.c.l.b16 %v915
        %v994 = vunpack.c.h.b16 %v915
        %v995 = vunpack.c.l.b16 %v916
        %v996 = vunpack.c.h.b16 %v916
        %v997 = vunpack.c.l.b16 %v917
        %v998 = vunpack.c.h.b16 %v917
        %v999 = vunpack.c.l.b16 %v918
        %v1000 = vunpack.c.h.b16 %v918
        %v1001 = vunpack.c.l.b16 %v919
        %v1002 = vunpack.c.h.b16 %v919
        %v1003 = vunpack.c.l.b16 %v920
        %v1004 = vunpack.c.h.b16 %v920
        %v1005 = vunpack.c.l.b16 %v921
        %v1006 = vunpack.c.h.b16 %v921
        %v1007 = vunpack.c.l.b16 %v922
        %v1008 = vunpack.c.h.b16 %v922
        %v1009 = vunpack.c.l.b16 %v923
        %v1010 = vunpack.c.h.b16 %v923
        %v1011 = vunpack.c.l.b16 %v924
        %v1012 = vunpack.c.h.b16 %v924
        %v1013 = vunpack.c.l.b16 %v925
        %v1014 = vunpack.c.h.b16 %v925
        %v1015 = vunpack.c.l.b16 %v926
        %v1016 = vunpack.c.h.b16 %v926
        %v1017 = vunpack.c.l.b16 %v927
        %v1018 = vunpack.c.h.b16 %v927
        %v1019 = vunpack.c.l.b16 %v928
        %v1020 = vunpack.c.h.b16 %v928
        %v1021 = vunpack.c.l.b16 %v929
        %v1022 = vunpack.c.h.b16 %v929
        %v1023 = vunpack.c.l.b16 %v930
        %v1024 = vunpack.c.h.b16 %v930
        %v1025 = vunpack.c.l.b16 %v931
        %v1026 = vunpack.c.h.b16 %v931
        %v1027 = vunpack.c.l.b16 %v932
        %v1028 = vunpack.c.h.b16 %v932
        %v1029 = vunpack.c.l.b16 %v933
        %v1030 = vunpack.c.h.b16 %v933
        %v1031 = vunpack.c.l.b16 %v934
        %v1032 = vunpack.c.h.b16 %v934
        %v1033 = vunpack.c.l.b16 %v935
        %v1034 = vunpack.c.h.b16 %v935
        %v1035 = vunpack.c.l.b16 %v936
        %v1036 = vunpack.c.h.b16 %v936
        %v1037 = vunpack.c.l.b16 %v937
        %v1038 = vunpack.c.h.b16 %v937
        %v1039 = vunpack.c.l.b16 %v938
        %v1040 = vunpack.c.h.b16 %v938
        %v1041 = vunpack.c.l.b16 %v939
        %v1042 = vunpack.c.h.b16 %v939
        %v1043 = vunpack.c.l.b16 %v940
        %v1044 = vunpack.c.h.b16 %v940
        %v1045 = vunpack.c.l.b16 %v941
        %v1046 = vunpack.c.h.b16 %v941
        %v1047 = vunpack.c.l.b16 %v942
        %v1048 = vunpack.c.h.b16 %v942
        %v1049 = vunpack.c.l.b16 %v943
        %v1050 = vunpack.c.h.b16 %v943
        %v1051 = vunpack.c.l.b16 %v944
        %v1052 = vunpack.c.h.b16 %v944
        %v1053 = vpack.c.b16 %v991, %v989
        %v1054 = vpack.c.b16 %v992, %v990
        %v1055 = vpack.c.b16 %v995, %v993
        %v1056 = vpack.c.b16 %v996, %v994
        %v1057 = vpack.c.b16 %v999, %v997
        %v1058 = vpack.c.b16 %v1000, %v998
        %v1059 = vpack.c.b16 %v1003, %v1001
        %v1060 = vpack.c.b16 %v1004, %v1002
        %v1061 = vpack.c.b16 %v1007, %v1005
        %v1062 = vpack.c.b16 %v1008, %v1006
        %v1063 = vpack.c.b16 %v1011, %v1009
        %v1064 = vpack.c.b16 %v1012, %v1010
        %v1065 = vpack.c.b16 %v1015, %v1013
        %v1066 = vpack.c.b16 %v1016, %v1014
        %v1067 = vpack.c.b16 %v1019, %v1017
        %v1068 = vpack.c.b16 %v1020, %v1018
        %v1069 = vpack.c.b16 %v1023, %v1021
        %v1070 = vpack.c.b16 %v1024, %v1022
        %v1071 = vpack.c.b16 %v1027, %v1025
        %v1072 = vpack.c.b16 %v1028, %v1026
        %v1073 = vpack.c.b16 %v1031, %v1029
        %v1074 = vpack.c.b16 %v1032, %v1030
        %v1075 = vpack.c.b16 %v1035, %v1033
        %v1076 = vpack.c.b16 %v1036, %v1034
        %v1077 = vpack.c.b16 %v1039, %v1037
        %v1078 = vpack.c.b16 %v1040, %v1038
        %v1079 = vpack.c.b16 %v1043, %v1041
        %v1080 = vpack.c.b16 %v1044, %v1042
        %v1081 = vpack.c.b16 %v1047, %v1045
        %v1082 = vpack.c.b16 %v1048, %v1046
        %v1083 = vpack.c.b16 %v1051, %v1049
        %v1084 = vpack.c.b16 %v1052, %v1050
        %1117 = vmatprep.subr.bf16.mxu0 %v1068
        %1118 = vmatpush1.bf16.msra.mxu0 %v1067
        %1119 = vmatprep.subr.bf16.mxu0 %v1066
        %1120 = vmatpush1.bf16.msra.mxu0 %v1065
        %1121 = vmatprep.subr.bf16.mxu0 %v1064
        %1122 = vmatpush1.bf16.msra.mxu0 %v1063
        %1123 = vmatprep.subr.bf16.mxu0 %v1062
        %1124 = vmatpush1.bf16.msra.mxu0 %v1061
        %1125 = vmatprep.subr.bf16.mxu0 %v1060
        %1126 = vmatpush1.bf16.msra.mxu0 %v1059
        %1127 = vmatprep.subr.bf16.mxu0 %v1058
        %1128 = vmatpush1.bf16.msra.mxu0 %v1057
        %1129 = vmatprep.subr.bf16.mxu0 %v1056
        %1130 = vmatpush1.bf16.msra.mxu0 %v1055
        %1131 = vmatprep.subr.bf16.mxu0 %v1054
        %1132 = vmatpush1.bf16.msra.mxu0 %v1053
        %1133 = vmatprep.subr.bf16.mxu0 %v1084
        %1134 = vmatpush2.bf16.msra.mxu0 %v1083
        %1135 = vmatprep.subr.bf16.mxu0 %v1082
        %1136 = vmatpush2.bf16.msra.mxu0 %v1081
        %1137 = vmatprep.subr.bf16.mxu0 %v1080
        %1138 = vmatpush2.bf16.msra.mxu0 %v1079
        %1139 = vmatprep.subr.bf16.mxu0 %v1078
        %1140 = vmatpush2.bf16.msra.mxu0 %v1077
        %1141 = vmatprep.subr.bf16.mxu0 %v1076
        %1142 = vmatpush2.bf16.msra.mxu0 %v1075
        %1143 = vmatprep.subr.bf16.mxu0 %v1074
        %1144 = vmatpush2.bf16.msra.mxu0 %v1073
        %1145 = vmatprep.subr.bf16.mxu0 %v1072
        %1146 = vmatpush2.bf16.msra.mxu0 %v1071
        %1147 = vmatprep.subr.bf16.mxu0 %v1070
        %1148 = vmatpush2.bf16.msra.mxu0 %v1069
        %1149 = vmatprep.mubr.bf16.mxu0 %v882
        %1150 = vmatmul.mubr.bf16.gmra.mxu0 %v881
        %v1151 = vpop.f32.mrf.mxu0
        %v1152 = vadd.f32 %v950, %v1151
        %v1153 = vpop.f32.mrf.mxu0
        %v1154 = vadd.f32 %v954, %v1153
        %v1155 = vpop.f32.mrf.mxu0
        %v1156 = vadd.f32 %v950, %v1155
        %v1157 = vpop.f32.mrf.mxu0
        %v1158 = vadd.f32 %v954, %v1157
        %1159 = vmatprep.mubr.bf16.mxu0 %v884
        %1160 = vmatmul.mubr.bf16.gmra.mxu0 %v883
        %v1161 = vpop.f32.mrf.mxu0
        %v1162 = vadd.f32 %v950, %v1161
        %v1163 = vpop.f32.mrf.mxu0
        %v1164 = vadd.f32 %v954, %v1163
        %v1165 = vpop.f32.mrf.mxu0
        %v1166 = vadd.f32 %v950, %v1165
        %v1167 = vpop.f32.mrf.mxu0
        %v1168 = vadd.f32 %v954, %v1167
        %1169 = vmatprep.mubr.bf16.mxu0 %v886
        %1170 = vmatmul.mubr.bf16.gmra.mxu0 %v885
        %v1171 = vpop.f32.mrf.mxu0
        %v1172 = vadd.f32 %v950, %v1171
        %v1173 = vpop.f32.mrf.mxu0
        %v1174 = vadd.f32 %v954, %v1173
        %v1175 = vpop.f32.mrf.mxu0
        %v1176 = vadd.f32 %v950, %v1175
        %v1177 = vpop.f32.mrf.mxu0
        %v1178 = vadd.f32 %v954, %v1177
        %1179 = vmatprep.mubr.bf16.mxu0 %v888
        %1180 = vmatmul.mubr.bf16.gmra.mxu0 %v887
        %v1181 = vpop.f32.mrf.mxu0
        %v1182 = vadd.f32 %v950, %v1181
        %v1183 = vpop.f32.mrf.mxu0
        %v1184 = vadd.f32 %v954, %v1183
        %v1185 = vpop.f32.mrf.mxu0
        %v1186 = vadd.f32 %v950, %v1185
        %v1187 = vpop.f32.mrf.mxu0
        %v1188 = vadd.f32 %v954, %v1187
        %1189 = vmatprep.mubr.bf16.mxu0 %v890
        %1190 = vmatmul.mubr.bf16.gmra.mxu0 %v889
        %v1191 = vpop.f32.mrf.mxu0
        %v1192 = vadd.f32 %v950, %v1191
        %v1193 = vpop.f32.mrf.mxu0
        %v1194 = vadd.f32 %v954, %v1193
        %v1195 = vpop.f32.mrf.mxu0
        %v1196 = vadd.f32 %v950, %v1195
        %v1197 = vpop.f32.mrf.mxu0
        %v1198 = vadd.f32 %v954, %v1197
        %1199 = vmatprep.mubr.bf16.mxu0 %v892
        %1200 = vmatmul.mubr.bf16.gmra.mxu0 %v891
        %v1201 = vpop.f32.mrf.mxu0
        %v1202 = vadd.f32 %v950, %v1201
        %v1203 = vpop.f32.mrf.mxu0
        %v1204 = vadd.f32 %v954, %v1203
        %v1205 = vpop.f32.mrf.mxu0
        %v1206 = vadd.f32 %v950, %v1205
        %v1207 = vpop.f32.mrf.mxu0
        %v1208 = vadd.f32 %v954, %v1207
        %1209 = vmatprep.mubr.bf16.mxu0 %v894
        %1210 = vmatmul.mubr.bf16.gmra.mxu0 %v893
        %v1211 = vpop.f32.mrf.mxu0
        %v1212 = vadd.f32 %v950, %v1211
        %v1213 = vpop.f32.mrf.mxu0
        %v1214 = vadd.f32 %v954, %v1213
        %v1215 = vpop.f32.mrf.mxu0
        %v1216 = vadd.f32 %v950, %v1215
        %v1217 = vpop.f32.mrf.mxu0
        %v1218 = vadd.f32 %v954, %v1217
        %1219 = vmatprep.mubr.bf16.mxu0 %v896
        %1220 = vmatmul.mubr.bf16.gmra.mxu0 %v895
        %v1221 = vpop.f32.mrf.mxu0
        %v1222 = vadd.f32 %v950, %v1221
        %v1223 = vpop.f32.mrf.mxu0
        %v1224 = vadd.f32 %v954, %v1223
        %v1225 = vpop.f32.mrf.mxu0
        %v1226 = vadd.f32 %v950, %v1225
        %v1227 = vpop.f32.mrf.mxu0
        %v1228 = vadd.f32 %v954, %v1227
        %1229 = vmatprep.mubr.bf16.mxu0 %v898
        %1230 = vmatmul.mubr.bf16.gmra.mxu0 %v897
        %v1231 = vpop.f32.mrf.mxu0
        %v1232 = vadd.f32 %v950, %v1231
        %v1233 = vpop.f32.mrf.mxu0
        %v1234 = vadd.f32 %v954, %v1233
        %v1235 = vpop.f32.mrf.mxu0
        %v1236 = vadd.f32 %v950, %v1235
        %v1237 = vpop.f32.mrf.mxu0
        %v1238 = vadd.f32 %v954, %v1237
        %1239 = vmatprep.mubr.bf16.mxu0 %v900
        %1240 = vmatmul.mubr.bf16.gmra.mxu0 %v899
        %v1241 = vpop.f32.mrf.mxu0
        %v1242 = vadd.f32 %v950, %v1241
        %v1243 = vpop.f32.mrf.mxu0
        %v1244 = vadd.f32 %v954, %v1243
        %v1245 = vpop.f32.mrf.mxu0
        %v1246 = vadd.f32 %v950, %v1245
        %v1247 = vpop.f32.mrf.mxu0
        %v1248 = vadd.f32 %v954, %v1247
        %1249 = vmatprep.mubr.bf16.mxu0 %v902
        %1250 = vmatmul.mubr.bf16.gmra.mxu0 %v901
        %v1251 = vpop.f32.mrf.mxu0
        %v1252 = vadd.f32 %v950, %v1251
        %v1253 = vpop.f32.mrf.mxu0
        %v1254 = vadd.f32 %v954, %v1253
        %v1255 = vpop.f32.mrf.mxu0
        %v1256 = vadd.f32 %v950, %v1255
        %v1257 = vpop.f32.mrf.mxu0
        %v1258 = vadd.f32 %v954, %v1257
        %1259 = vmatprep.mubr.bf16.mxu0 %v904
        %1260 = vmatmul.mubr.bf16.gmra.mxu0 %v903
        %v1261 = vpop.f32.mrf.mxu0
        %v1262 = vadd.f32 %v950, %v1261
        %v1263 = vpop.f32.mrf.mxu0
        %v1264 = vadd.f32 %v954, %v1263
        %v1265 = vpop.f32.mrf.mxu0
        %v1266 = vadd.f32 %v950, %v1265
        %v1267 = vpop.f32.mrf.mxu0
        %v1268 = vadd.f32 %v954, %v1267
        %1269 = vmatprep.mubr.bf16.mxu0 %v906
        %1270 = vmatmul.mubr.bf16.gmra.mxu0 %v905
        %v1271 = vpop.f32.mrf.mxu0
        %v1272 = vadd.f32 %v950, %v1271
        %v1273 = vpop.f32.mrf.mxu0
        %v1274 = vadd.f32 %v954, %v1273
        %v1275 = vpop.f32.mrf.mxu0
        %v1276 = vadd.f32 %v950, %v1275
        %v1277 = vpop.f32.mrf.mxu0
        %v1278 = vadd.f32 %v954, %v1277
        %1279 = vmatprep.mubr.bf16.mxu0 %v908
        %1280 = vmatmul.mubr.bf16.gmra.mxu0 %v907
        %v1281 = vpop.f32.mrf.mxu0
        %v1282 = vadd.f32 %v950, %v1281
        %v1283 = vpop.f32.mrf.mxu0
        %v1284 = vadd.f32 %v954, %v1283
        %v1285 = vpop.f32.mrf.mxu0
        %v1286 = vadd.f32 %v950, %v1285
        %v1287 = vpop.f32.mrf.mxu0
        %v1288 = vadd.f32 %v954, %v1287
        %1289 = vmatprep.mubr.bf16.mxu0 %v910
        %1290 = vmatmul.mubr.bf16.gmra.mxu0 %v909
        %v1291 = vpop.f32.mrf.mxu0
        %v1292 = vadd.f32 %v950, %v1291
        %v1293 = vpop.f32.mrf.mxu0
        %v1294 = vadd.f32 %v954, %v1293
        %v1295 = vpop.f32.mrf.mxu0
        %v1296 = vadd.f32 %v950, %v1295
        %v1297 = vpop.f32.mrf.mxu0
        %v1298 = vadd.f32 %v954, %v1297
        %1299 = vmatprep.mubr.bf16.mxu0 %v912
        %1300 = vmatmul.mubr.bf16.gmra.mxu0 %v911
        %v1301 = vpop.f32.mrf.mxu0
        %v1302 = vadd.f32 %v950, %v1301
        %v1303 = vpop.f32.mrf.mxu0
        %v1304 = vadd.f32 %v954, %v1303
        %v1305 = vpop.f32.mrf.mxu0
        %v1306 = vadd.f32 %v950, %v1305
        %v1307 = vpop.f32.mrf.mxu0
        %v1308 = vadd.f32 %v954, %v1307
        %1309 = vdwg.mxu0
        %v1310 = vmax.f32 %v1152, 0.0
        %v1311 = vmax.f32 %v1154, 0.0
        %v1312 = vmax.f32 %v1156, 0.0
        %v1313 = vmax.f32 %v1158, 0.0
        %v1314 = vmax.f32 %v1162, 0.0
        %v1315 = vmax.f32 %v1164, 0.0
        %v1316 = vmax.f32 %v1166, 0.0
        %v1317 = vmax.f32 %v1168, 0.0
        %v1318 = vmax.f32 %v1172, 0.0
        %v1319 = vmax.f32 %v1174, 0.0
        %v1320 = vmax.f32 %v1176, 0.0
        %v1321 = vmax.f32 %v1178, 0.0
        %v1322 = vmax.f32 %v1182, 0.0
        %v1323 = vmax.f32 %v1184, 0.0
        %v1324 = vmax.f32 %v1186, 0.0
        %v1325 = vmax.f32 %v1188, 0.0
        %v1326 = vmax.f32 %v1192, 0.0
        %v1327 = vmax.f32 %v1194, 0.0
        %v1328 = vmax.f32 %v1196, 0.0
        %v1329 = vmax.f32 %v1198, 0.0
        %v1330 = vmax.f32 %v1202, 0.0
        %v1331 = vmax.f32 %v1204, 0.0
        %v1332 = vmax.f32 %v1206, 0.0
        %v1333 = vmax.f32 %v1208, 0.0
        %v1334 = vmax.f32 %v1212, 0.0
        %v1335 = vmax.f32 %v1214, 0.0
        %v1336 = vmax.f32 %v1216, 0.0
        %v1337 = vmax.f32 %v1218, 0.0
        %v1338 = vmax.f32 %v1222, 0.0
        %v1339 = vmax.f32 %v1224, 0.0
        %v1340 = vmax.f32 %v1226, 0.0
        %v1341 = vmax.f32 %v1228, 0.0
        %v1342 = vmax.f32 %v1232, 0.0
        %v1343 = vmax.f32 %v1234, 0.0
        %v1344 = vmax.f32 %v1236, 0.0
        %v1345 = vmax.f32 %v1238, 0.0
        %v1346 = vmax.f32 %v1242, 0.0
        %v1347 = vmax.f32 %v1244, 0.0
        %v1348 = vmax.f32 %v1246, 0.0
        %v1349 = vmax.f32 %v1248, 0.0
        %v1350 = vmax.f32 %v1252, 0.0
        %v1351 = vmax.f32 %v1254, 0.0
        %v1352 = vmax.f32 %v1256, 0.0
        %v1353 = vmax.f32 %v1258, 0.0
        %v1354 = vmax.f32 %v1262, 0.0
        %v1355 = vmax.f32 %v1264, 0.0
        %v1356 = vmax.f32 %v1266, 0.0
        %v1357 = vmax.f32 %v1268, 0.0
        %v1358 = vmax.f32 %v1272, 0.0
        %v1359 = vmax.f32 %v1274, 0.0
        %v1360 = vmax.f32 %v1276, 0.0
        %v1361 = vmax.f32 %v1278, 0.0
        %v1362 = vmax.f32 %v1282, 0.0
        %v1363 = vmax.f32 %v1284, 0.0
        %v1364 = vmax.f32 %v1286, 0.0
        %v1365 = vmax.f32 %v1288, 0.0
        %v1366 = vmax.f32 %v1292, 0.0
        %v1367 = vmax.f32 %v1294, 0.0
        %v1368 = vmax.f32 %v1296, 0.0
        %v1369 = vmax.f32 %v1298, 0.0
        %v1370 = vmax.f32 %v1302, 0.0
        %v1371 = vmax.f32 %v1304, 0.0
        %v1372 = vmax.f32 %v1306, 0.0
        %v1373 = vmax.f32 %v1308, 0.0
        %v1374 = vpack.c.bf16 %v1312, %v1310
        %v1375 = vpack.c.bf16 %v1313, %v1311
        %v1376 = vpack.c.bf16 %v1316, %v1314
        %v1377 = vpack.c.bf16 %v1317, %v1315
        %v1378 = vpack.c.bf16 %v1320, %v1318
        %v1379 = vpack.c.bf16 %v1321, %v1319
        %v1380 = vpack.c.bf16 %v1324, %v1322
        %v1381 = vpack.c.bf16 %v1325, %v1323
        %v1382 = vpack.c.bf16 %v1328, %v1326
        %v1383 = vpack.c.bf16 %v1329, %v1327
        %v1384 = vpack.c.bf16 %v1332, %v1330
        %v1385 = vpack.c.bf16 %v1333, %v1331
        %v1386 = vpack.c.bf16 %v1336, %v1334
        %v1387 = vpack.c.bf16 %v1337, %v1335
        %v1388 = vpack.c.bf16 %v1340, %v1338
        %v1389 = vpack.c.bf16 %v1341, %v1339
        %v1390 = vpack.c.bf16 %v1344, %v1342
        %v1391 = vpack.c.bf16 %v1345, %v1343
        %v1392 = vpack.c.bf16 %v1348, %v1346
        %v1393 = vpack.c.bf16 %v1349, %v1347
        %v1394 = vpack.c.bf16 %v1352, %v1350
        %v1395 = vpack.c.bf16 %v1353, %v1351
        %v1396 = vpack.c.bf16 %v1356, %v1354
        %v1397 = vpack.c.bf16 %v1357, %v1355
        %v1398 = vpack.c.bf16 %v1360, %v1358
        %v1399 = vpack.c.bf16 %v1361, %v1359
        %v1400 = vpack.c.bf16 %v1364, %v1362
        %v1401 = vpack.c.bf16 %v1365, %v1363
        %v1402 = vpack.c.bf16 %v1368, %v1366
        %v1403 = vpack.c.bf16 %v1369, %v1367
        %v1404 = vpack.c.bf16 %v1372, %v1370
        %v1405 = vpack.c.bf16 %v1373, %v1371
        %s1406 = scalar_lea.vmem %s3, 256
        %v1407 = vld [vmem:[%s1406] sm:$0xff]
        %v1408 = vld [vmem:[%s1406 + $0x8] sm:$0xff]
        %v1409 = vld [vmem:[%s1406 + $0x10] sm:$0xff]
        %v1410 = vld [vmem:[%s1406 + $0x18] sm:$0xff]
        %v1411 = vld [vmem:[%s1406 + $0x20] sm:$0xff]
        %v1412 = vld [vmem:[%s1406 + $0x28] sm:$0xff]
        %v1413 = vld [vmem:[%s1406 + $0x30] sm:$0xff]
        %v1414 = vld [vmem:[%s1406 + $0x38] sm:$0xff]
        %v1415 = vld [vmem:[%s1406 + $0x40] sm:$0xff]
        %v1416 = vld [vmem:[%s1406 + $0x48] sm:$0xff]
        %v1417 = vld [vmem:[%s1406 + $0x50] sm:$0xff]
        %v1418 = vld [vmem:[%s1406 + $0x58] sm:$0xff]
        %v1419 = vld [vmem:[%s1406 + $0x60] sm:$0xff]
        %v1420 = vld [vmem:[%s1406 + $0x68] sm:$0xff]
        %v1421 = vld [vmem:[%s1406 + $0x70] sm:$0xff]
        %v1422 = vld [vmem:[%s1406 + $0x78] sm:$0xff]
        %v1423 = vld [vmem:[%s1406 + $0x80] sm:$0xff]
        %v1424 = vld [vmem:[%s1406 + $0x88] sm:$0xff]
        %v1425 = vld [vmem:[%s1406 + $0x90] sm:$0xff]
        %v1426 = vld [vmem:[%s1406 + $0x98] sm:$0xff]
        %v1427 = vld [vmem:[%s1406 + $0xa0] sm:$0xff]
        %v1428 = vld [vmem:[%s1406 + $0xa8] sm:$0xff]
        %v1429 = vld [vmem:[%s1406 + $0xb0] sm:$0xff]
        %v1430 = vld [vmem:[%s1406 + $0xb8] sm:$0xff]
        %v1431 = vld [vmem:[%s1406 + $0xc0] sm:$0xff]
        %v1432 = vld [vmem:[%s1406 + $0xc8] sm:$0xff]
        %v1433 = vld [vmem:[%s1406 + $0xd0] sm:$0xff]
        %v1434 = vld [vmem:[%s1406 + $0xd8] sm:$0xff]
        %v1435 = vld [vmem:[%s1406 + $0xe0] sm:$0xff]
        %v1436 = vld [vmem:[%s1406 + $0xe8] sm:$0xff]
        %v1437 = vld [vmem:[%s1406 + $0xf0] sm:$0xff]
        %v1438 = vld [vmem:[%s1406 + $0xf8] sm:$0xff]
        %s1439 = scalar_lea.vmem %s4, 2
        %v1440 = vld [vmem:[%s1439] sm:$0x3]
        %v1442 = vlaneseq
        %v1443 = vshrl.u32 %v1442, 7
        %v1444 = vsub.s32 0, %v1443
        %v1445 = vrot.slane %v1440, %v1444
        %v1446 = vlaneseq
        %v1447 = vshrl.u32 %v1446, 7
        %v1448 = vsub.s32 1, %v1447
        %v1449 = vrot.slane %v1440, %v1448
        %v1484 = vunpack.c.l.b16 %v1407
        %v1485 = vunpack.c.h.b16 %v1407
        %v1486 = vunpack.c.l.b16 %v1408
        %v1487 = vunpack.c.h.b16 %v1408
        %v1488 = vunpack.c.l.b16 %v1409
        %v1489 = vunpack.c.h.b16 %v1409
        %v1490 = vunpack.c.l.b16 %v1410
        %v1491 = vunpack.c.h.b16 %v1410
        %v1492 = vunpack.c.l.b16 %v1411
        %v1493 = vunpack.c.h.b16 %v1411
        %v1494 = vunpack.c.l.b16 %v1412
        %v1495 = vunpack.c.h.b16 %v1412
        %v1496 = vunpack.c.l.b16 %v1413
        %v1497 = vunpack.c.h.b16 %v1413
        %v1498 = vunpack.c.l.b16 %v1414
        %v1499 = vunpack.c.h.b16 %v1414
        %v1500 = vunpack.c.l.b16 %v1415
        %v1501 = vunpack.c.h.b16 %v1415
        %v1502 = vunpack.c.l.b16 %v1416
        %v1503 = vunpack.c.h.b16 %v1416
        %v1504 = vunpack.c.l.b16 %v1417
        %v1505 = vunpack.c.h.b16 %v1417
        %v1506 = vunpack.c.l.b16 %v1418
        %v1507 = vunpack.c.h.b16 %v1418
        %v1508 = vunpack.c.l.b16 %v1419
        %v1509 = vunpack.c.h.b16 %v1419
        %v1510 = vunpack.c.l.b16 %v1420
        %v1511 = vunpack.c.h.b16 %v1420
        %v1512 = vunpack.c.l.b16 %v1421
        %v1513 = vunpack.c.h.b16 %v1421
        %v1514 = vunpack.c.l.b16 %v1422
        %v1515 = vunpack.c.h.b16 %v1422
        %v1516 = vunpack.c.l.b16 %v1423
        %v1517 = vunpack.c.h.b16 %v1423
        %v1518 = vunpack.c.l.b16 %v1424
        %v1519 = vunpack.c.h.b16 %v1424
        %v1520 = vunpack.c.l.b16 %v1425
        %v1521 = vunpack.c.h.b16 %v1425
        %v1522 = vunpack.c.l.b16 %v1426
        %v1523 = vunpack.c.h.b16 %v1426
        %v1524 = vunpack.c.l.b16 %v1427
        %v1525 = vunpack.c.h.b16 %v1427
        %v1526 = vunpack.c.l.b16 %v1428
        %v1527 = vunpack.c.h.b16 %v1428
        %v1528 = vunpack.c.l.b16 %v1429
        %v1529 = vunpack.c.h.b16 %v1429
        %v1530 = vunpack.c.l.b16 %v1430
        %v1531 = vunpack.c.h.b16 %v1430
        %v1532 = vunpack.c.l.b16 %v1431
        %v1533 = vunpack.c.h.b16 %v1431
        %v1534 = vunpack.c.l.b16 %v1432
        %v1535 = vunpack.c.h.b16 %v1432
        %v1536 = vunpack.c.l.b16 %v1433
        %v1537 = vunpack.c.h.b16 %v1433
        %v1538 = vunpack.c.l.b16 %v1434
        %v1539 = vunpack.c.h.b16 %v1434
        %v1540 = vunpack.c.l.b16 %v1435
        %v1541 = vunpack.c.h.b16 %v1435
        %v1542 = vunpack.c.l.b16 %v1436
        %v1543 = vunpack.c.h.b16 %v1436
        %v1544 = vunpack.c.l.b16 %v1437
        %v1545 = vunpack.c.h.b16 %v1437
        %v1546 = vunpack.c.l.b16 %v1438
        %v1547 = vunpack.c.h.b16 %v1438
        %v1548 = vpack.c.b16 %v1486, %v1484
        %v1549 = vpack.c.b16 %v1487, %v1485
        %v1550 = vpack.c.b16 %v1490, %v1488
        %v1551 = vpack.c.b16 %v1491, %v1489
        %v1552 = vpack.c.b16 %v1494, %v1492
        %v1553 = vpack.c.b16 %v1495, %v1493
        %v1554 = vpack.c.b16 %v1498, %v1496
        %v1555 = vpack.c.b16 %v1499, %v1497
        %v1556 = vpack.c.b16 %v1502, %v1500
        %v1557 = vpack.c.b16 %v1503, %v1501
        %v1558 = vpack.c.b16 %v1506, %v1504
        %v1559 = vpack.c.b16 %v1507, %v1505
        %v1560 = vpack.c.b16 %v1510, %v1508
        %v1561 = vpack.c.b16 %v1511, %v1509
        %v1562 = vpack.c.b16 %v1514, %v1512
        %v1563 = vpack.c.b16 %v1515, %v1513
        %v1564 = vpack.c.b16 %v1518, %v1516
        %v1565 = vpack.c.b16 %v1519, %v1517
        %v1566 = vpack.c.b16 %v1522, %v1520
        %v1567 = vpack.c.b16 %v1523, %v1521
        %v1568 = vpack.c.b16 %v1526, %v1524
        %v1569 = vpack.c.b16 %v1527, %v1525
        %v1570 = vpack.c.b16 %v1530, %v1528
        %v1571 = vpack.c.b16 %v1531, %v1529
        %v1572 = vpack.c.b16 %v1534, %v1532
        %v1573 = vpack.c.b16 %v1535, %v1533
        %v1574 = vpack.c.b16 %v1538, %v1536
        %v1575 = vpack.c.b16 %v1539, %v1537
        %v1576 = vpack.c.b16 %v1542, %v1540
        %v1577 = vpack.c.b16 %v1543, %v1541
        %v1578 = vpack.c.b16 %v1546, %v1544
        %v1579 = vpack.c.b16 %v1547, %v1545
        %1612 = vmatprep.subr.bf16.mxu0 %v1563
        %1613 = vmatpush1.bf16.msra.mxu0 %v1562
        %1614 = vmatprep.subr.bf16.mxu0 %v1561
        %1615 = vmatpush1.bf16.msra.mxu0 %v1560
        %1616 = vmatprep.subr.bf16.mxu0 %v1559
        %1617 = vmatpush1.bf16.msra.mxu0 %v1558
        %1618 = vmatprep.subr.bf16.mxu0 %v1557
        %1619 = vmatpush1.bf16.msra.mxu0 %v1556
        %1620 = vmatprep.subr.bf16.mxu0 %v1555
        %1621 = vmatpush1.bf16.msra.mxu0 %v1554
        %1622 = vmatprep.subr.bf16.mxu0 %v1553
        %1623 = vmatpush1.bf16.msra.mxu0 %v1552
        %1624 = vmatprep.subr.bf16.mxu0 %v1551
        %1625 = vmatpush1.bf16.msra.mxu0 %v1550
        %1626 = vmatprep.subr.bf16.mxu0 %v1549
        %1627 = vmatpush1.bf16.msra.mxu0 %v1548
        %1628 = vmatprep.subr.bf16.mxu0 %v1579
        %1629 = vmatpush2.bf16.msra.mxu0 %v1578
        %1630 = vmatprep.subr.bf16.mxu0 %v1577
        %1631 = vmatpush2.bf16.msra.mxu0 %v1576
        %1632 = vmatprep.subr.bf16.mxu0 %v1575
        %1633 = vmatpush2.bf16.msra.mxu0 %v1574
        %1634 = vmatprep.subr.bf16.mxu0 %v1573
        %1635 = vmatpush2.bf16.msra.mxu0 %v1572
        %1636 = vmatprep.subr.bf16.mxu0 %v1571
        %1637 = vmatpush2.bf16.msra.mxu0 %v1570
        %1638 = vmatprep.subr.bf16.mxu0 %v1569
        %1639 = vmatpush2.bf16.msra.mxu0 %v1568
        %1640 = vmatprep.subr.bf16.mxu0 %v1567
        %1641 = vmatpush2.bf16.msra.mxu0 %v1566
        %1642 = vmatprep.subr.bf16.mxu0 %v1565
        %1643 = vmatpush2.bf16.msra.mxu0 %v1564
        %1644 = vmatprep.mubr.bf16.mxu0 %v1375
        %1645 = vmatmul.mubr.bf16.gmra.mxu0 %v1374
        %v1646 = vpop.f32.mrf.mxu0
        %v1647 = vadd.f32 %v1445, %v1646
        %v1648 = vpop.f32.mrf.mxu0
        %v1649 = vadd.f32 %v1449, %v1648
        %v1650 = vpop.f32.mrf.mxu0
        %v1651 = vadd.f32 %v1445, %v1650
        %v1652 = vpop.f32.mrf.mxu0
        %v1653 = vadd.f32 %v1449, %v1652
        %1654 = vmatprep.mubr.bf16.mxu0 %v1377
        %1655 = vmatmul.mubr.bf16.gmra.mxu0 %v1376
        %v1656 = vpop.f32.mrf.mxu0
        %v1657 = vadd.f32 %v1445, %v1656
        %v1658 = vpop.f32.mrf.mxu0
        %v1659 = vadd.f32 %v1449, %v1658
        %v1660 = vpop.f32.mrf.mxu0
        %v1661 = vadd.f32 %v1445, %v1660
        %v1662 = vpop.f32.mrf.mxu0
        %v1663 = vadd.f32 %v1449, %v1662
        %1664 = vmatprep.mubr.bf16.mxu0 %v1379
        %1665 = vmatmul.mubr.bf16.gmra.mxu0 %v1378
        %v1666 = vpop.f32.mrf.mxu0
        %v1667 = vadd.f32 %v1445, %v1666
        %v1668 = vpop.f32.mrf.mxu0
        %v1669 = vadd.f32 %v1449, %v1668
        %v1670 = vpop.f32.mrf.mxu0
        %v1671 = vadd.f32 %v1445, %v1670
        %v1672 = vpop.f32.mrf.mxu0
        %v1673 = vadd.f32 %v1449, %v1672
        %1674 = vmatprep.mubr.bf16.mxu0 %v1381
        %1675 = vmatmul.mubr.bf16.gmra.mxu0 %v1380
        %v1676 = vpop.f32.mrf.mxu0
        %v1677 = vadd.f32 %v1445, %v1676
        %v1678 = vpop.f32.mrf.mxu0
        %v1679 = vadd.f32 %v1449, %v1678
        %v1680 = vpop.f32.mrf.mxu0
        %v1681 = vadd.f32 %v1445, %v1680
        %v1682 = vpop.f32.mrf.mxu0
        %v1683 = vadd.f32 %v1449, %v1682
        %1684 = vmatprep.mubr.bf16.mxu0 %v1383
        %1685 = vmatmul.mubr.bf16.gmra.mxu0 %v1382
        %v1686 = vpop.f32.mrf.mxu0
        %v1687 = vadd.f32 %v1445, %v1686
        %v1688 = vpop.f32.mrf.mxu0
        %v1689 = vadd.f32 %v1449, %v1688
        %v1690 = vpop.f32.mrf.mxu0
        %v1691 = vadd.f32 %v1445, %v1690
        %v1692 = vpop.f32.mrf.mxu0
        %v1693 = vadd.f32 %v1449, %v1692
        %1694 = vmatprep.mubr.bf16.mxu0 %v1385
        %1695 = vmatmul.mubr.bf16.gmra.mxu0 %v1384
        %v1696 = vpop.f32.mrf.mxu0
        %v1697 = vadd.f32 %v1445, %v1696
        %v1698 = vpop.f32.mrf.mxu0
        %v1699 = vadd.f32 %v1449, %v1698
        %v1700 = vpop.f32.mrf.mxu0
        %v1701 = vadd.f32 %v1445, %v1700
        %v1702 = vpop.f32.mrf.mxu0
        %v1703 = vadd.f32 %v1449, %v1702
        %1704 = vmatprep.mubr.bf16.mxu0 %v1387
        %1705 = vmatmul.mubr.bf16.gmra.mxu0 %v1386
        %v1706 = vpop.f32.mrf.mxu0
        %v1707 = vadd.f32 %v1445, %v1706
        %v1708 = vpop.f32.mrf.mxu0
        %v1709 = vadd.f32 %v1449, %v1708
        %v1710 = vpop.f32.mrf.mxu0
        %v1711 = vadd.f32 %v1445, %v1710
        %v1712 = vpop.f32.mrf.mxu0
        %v1713 = vadd.f32 %v1449, %v1712
        %1714 = vmatprep.mubr.bf16.mxu0 %v1389
        %1715 = vmatmul.mubr.bf16.gmra.mxu0 %v1388
        %v1716 = vpop.f32.mrf.mxu0
        %v1717 = vadd.f32 %v1445, %v1716
        %v1718 = vpop.f32.mrf.mxu0
        %v1719 = vadd.f32 %v1449, %v1718
        %v1720 = vpop.f32.mrf.mxu0
        %v1721 = vadd.f32 %v1445, %v1720
        %v1722 = vpop.f32.mrf.mxu0
        %v1723 = vadd.f32 %v1449, %v1722
        %1724 = vmatprep.mubr.bf16.mxu0 %v1391
        %1725 = vmatmul.mubr.bf16.gmra.mxu0 %v1390
        %v1726 = vpop.f32.mrf.mxu0
        %v1727 = vadd.f32 %v1445, %v1726
        %v1728 = vpop.f32.mrf.mxu0
        %v1729 = vadd.f32 %v1449, %v1728
        %v1730 = vpop.f32.mrf.mxu0
        %v1731 = vadd.f32 %v1445, %v1730
        %v1732 = vpop.f32.mrf.mxu0
        %v1733 = vadd.f32 %v1449, %v1732
        %1734 = vmatprep.mubr.bf16.mxu0 %v1393
        %1735 = vmatmul.mubr.bf16.gmra.mxu0 %v1392
        %v1736 = vpop.f32.mrf.mxu0
        %v1737 = vadd.f32 %v1445, %v1736
        %v1738 = vpop.f32.mrf.mxu0
        %v1739 = vadd.f32 %v1449, %v1738
        %v1740 = vpop.f32.mrf.mxu0
        %v1741 = vadd.f32 %v1445, %v1740
        %v1742 = vpop.f32.mrf.mxu0
        %v1743 = vadd.f32 %v1449, %v1742
        %1744 = vmatprep.mubr.bf16.mxu0 %v1395
        %1745 = vmatmul.mubr.bf16.gmra.mxu0 %v1394
        %v1746 = vpop.f32.mrf.mxu0
        %v1747 = vadd.f32 %v1445, %v1746
        %v1748 = vpop.f32.mrf.mxu0
        %v1749 = vadd.f32 %v1449, %v1748
        %v1750 = vpop.f32.mrf.mxu0
        %v1751 = vadd.f32 %v1445, %v1750
        %v1752 = vpop.f32.mrf.mxu0
        %v1753 = vadd.f32 %v1449, %v1752
        %1754 = vmatprep.mubr.bf16.mxu0 %v1397
        %1755 = vmatmul.mubr.bf16.gmra.mxu0 %v1396
        %v1756 = vpop.f32.mrf.mxu0
        %v1757 = vadd.f32 %v1445, %v1756
        %v1758 = vpop.f32.mrf.mxu0
        %v1759 = vadd.f32 %v1449, %v1758
        %v1760 = vpop.f32.mrf.mxu0
        %v1761 = vadd.f32 %v1445, %v1760
        %v1762 = vpop.f32.mrf.mxu0
        %v1763 = vadd.f32 %v1449, %v1762
        %1764 = vmatprep.mubr.bf16.mxu0 %v1399
        %1765 = vmatmul.mubr.bf16.gmra.mxu0 %v1398
        %v1766 = vpop.f32.mrf.mxu0
        %v1767 = vadd.f32 %v1445, %v1766
        %v1768 = vpop.f32.mrf.mxu0
        %v1769 = vadd.f32 %v1449, %v1768
        %v1770 = vpop.f32.mrf.mxu0
        %v1771 = vadd.f32 %v1445, %v1770
        %v1772 = vpop.f32.mrf.mxu0
        %v1773 = vadd.f32 %v1449, %v1772
        %1774 = vmatprep.mubr.bf16.mxu0 %v1401
        %1775 = vmatmul.mubr.bf16.gmra.mxu0 %v1400
        %v1776 = vpop.f32.mrf.mxu0
        %v1777 = vadd.f32 %v1445, %v1776
        %v1778 = vpop.f32.mrf.mxu0
        %v1779 = vadd.f32 %v1449, %v1778
        %v1780 = vpop.f32.mrf.mxu0
        %v1781 = vadd.f32 %v1445, %v1780
        %v1782 = vpop.f32.mrf.mxu0
        %v1783 = vadd.f32 %v1449, %v1782
        %1784 = vmatprep.mubr.bf16.mxu0 %v1403
        %1785 = vmatmul.mubr.bf16.gmra.mxu0 %v1402
        %v1786 = vpop.f32.mrf.mxu0
        %v1787 = vadd.f32 %v1445, %v1786
        %v1788 = vpop.f32.mrf.mxu0
        %v1789 = vadd.f32 %v1449, %v1788
        %v1790 = vpop.f32.mrf.mxu0
        %v1791 = vadd.f32 %v1445, %v1790
        %v1792 = vpop.f32.mrf.mxu0
        %v1793 = vadd.f32 %v1449, %v1792
        %1794 = vmatprep.mubr.bf16.mxu0 %v1405
        %1795 = vmatmul.mubr.bf16.gmra.mxu0 %v1404
        %v1796 = vpop.f32.mrf.mxu0
        %v1797 = vadd.f32 %v1445, %v1796
        %v1798 = vpop.f32.mrf.mxu0
        %v1799 = vadd.f32 %v1449, %v1798
        %v1800 = vpop.f32.mrf.mxu0
        %v1801 = vadd.f32 %v1445, %v1800
        %v1802 = vpop.f32.mrf.mxu0
        %v1803 = vadd.f32 %v1449, %v1802
        %1804 = vdwg.mxu0
        %v1805 = vmax.f32 %v1647, 0.0
        %v1806 = vmax.f32 %v1649, 0.0
        %v1807 = vmax.f32 %v1651, 0.0
        %v1808 = vmax.f32 %v1653, 0.0
        %v1809 = vmax.f32 %v1657, 0.0
        %v1810 = vmax.f32 %v1659, 0.0
        %v1811 = vmax.f32 %v1661, 0.0
        %v1812 = vmax.f32 %v1663, 0.0
        %v1813 = vmax.f32 %v1667, 0.0
        %v1814 = vmax.f32 %v1669, 0.0
        %v1815 = vmax.f32 %v1671, 0.0
        %v1816 = vmax.f32 %v1673, 0.0
        %v1817 = vmax.f32 %v1677, 0.0
        %v1818 = vmax.f32 %v1679, 0.0
        %v1819 = vmax.f32 %v1681, 0.0
        %v1820 = vmax.f32 %v1683, 0.0
        %v1821 = vmax.f32 %v1687, 0.0
        %v1822 = vmax.f32 %v1689, 0.0
        %v1823 = vmax.f32 %v1691, 0.0
        %v1824 = vmax.f32 %v1693, 0.0
        %v1825 = vmax.f32 %v1697, 0.0
        %v1826 = vmax.f32 %v1699, 0.0
        %v1827 = vmax.f32 %v1701, 0.0
        %v1828 = vmax.f32 %v1703, 0.0
        %v1829 = vmax.f32 %v1707, 0.0
        %v1830 = vmax.f32 %v1709, 0.0
        %v1831 = vmax.f32 %v1711, 0.0
        %v1832 = vmax.f32 %v1713, 0.0
        %v1833 = vmax.f32 %v1717, 0.0
        %v1834 = vmax.f32 %v1719, 0.0
        %v1835 = vmax.f32 %v1721, 0.0
        %v1836 = vmax.f32 %v1723, 0.0
        %v1837 = vmax.f32 %v1727, 0.0
        %v1838 = vmax.f32 %v1729, 0.0
        %v1839 = vmax.f32 %v1731, 0.0
        %v1840 = vmax.f32 %v1733, 0.0
        %v1841 = vmax.f32 %v1737, 0.0
        %v1842 = vmax.f32 %v1739, 0.0
        %v1843 = vmax.f32 %v1741, 0.0
        %v1844 = vmax.f32 %v1743, 0.0
        %v1845 = vmax.f32 %v1747, 0.0
        %v1846 = vmax.f32 %v1749, 0.0
        %v1847 = vmax.f32 %v1751, 0.0
        %v1848 = vmax.f32 %v1753, 0.0
        %v1849 = vmax.f32 %v1757, 0.0
        %v1850 = vmax.f32 %v1759, 0.0
        %v1851 = vmax.f32 %v1761, 0.0
        %v1852 = vmax.f32 %v1763, 0.0
        %v1853 = vmax.f32 %v1767, 0.0
        %v1854 = vmax.f32 %v1769, 0.0
        %v1855 = vmax.f32 %v1771, 0.0
        %v1856 = vmax.f32 %v1773, 0.0
        %v1857 = vmax.f32 %v1777, 0.0
        %v1858 = vmax.f32 %v1779, 0.0
        %v1859 = vmax.f32 %v1781, 0.0
        %v1860 = vmax.f32 %v1783, 0.0
        %v1861 = vmax.f32 %v1787, 0.0
        %v1862 = vmax.f32 %v1789, 0.0
        %v1863 = vmax.f32 %v1791, 0.0
        %v1864 = vmax.f32 %v1793, 0.0
        %v1865 = vmax.f32 %v1797, 0.0
        %v1866 = vmax.f32 %v1799, 0.0
        %v1867 = vmax.f32 %v1801, 0.0
        %v1868 = vmax.f32 %v1803, 0.0
        %v1869 = vpack.c.bf16 %v1807, %v1805
        %v1870 = vpack.c.bf16 %v1808, %v1806
        %v1871 = vpack.c.bf16 %v1811, %v1809
        %v1872 = vpack.c.bf16 %v1812, %v1810
        %v1873 = vpack.c.bf16 %v1815, %v1813
        %v1874 = vpack.c.bf16 %v1816, %v1814
        %v1875 = vpack.c.bf16 %v1819, %v1817
        %v1876 = vpack.c.bf16 %v1820, %v1818
        %v1877 = vpack.c.bf16 %v1823, %v1821
        %v1878 = vpack.c.bf16 %v1824, %v1822
        %v1879 = vpack.c.bf16 %v1827, %v1825
        %v1880 = vpack.c.bf16 %v1828, %v1826
        %v1881 = vpack.c.bf16 %v1831, %v1829
        %v1882 = vpack.c.bf16 %v1832, %v1830
        %v1883 = vpack.c.bf16 %v1835, %v1833
        %v1884 = vpack.c.bf16 %v1836, %v1834
        %v1885 = vpack.c.bf16 %v1839, %v1837
        %v1886 = vpack.c.bf16 %v1840, %v1838
        %v1887 = vpack.c.bf16 %v1843, %v1841
        %v1888 = vpack.c.bf16 %v1844, %v1842
        %v1889 = vpack.c.bf16 %v1847, %v1845
        %v1890 = vpack.c.bf16 %v1848, %v1846
        %v1891 = vpack.c.bf16 %v1851, %v1849
        %v1892 = vpack.c.bf16 %v1852, %v1850
        %v1893 = vpack.c.bf16 %v1855, %v1853
        %v1894 = vpack.c.bf16 %v1856, %v1854
        %v1895 = vpack.c.bf16 %v1859, %v1857
        %v1896 = vpack.c.bf16 %v1860, %v1858
        %v1897 = vpack.c.bf16 %v1863, %v1861
        %v1898 = vpack.c.bf16 %v1864, %v1862
        %v1899 = vpack.c.bf16 %v1867, %v1865
        %v1900 = vpack.c.bf16 %v1868, %v1866
        %s1901 = scalar_lea.vmem %s3, 512
        %v1902 = vld [vmem:[%s1901] sm:$0xff]
        %v1903 = vld [vmem:[%s1901 + $0x8] sm:$0xff]
        %v1904 = vld [vmem:[%s1901 + $0x10] sm:$0xff]
        %v1905 = vld [vmem:[%s1901 + $0x18] sm:$0xff]
        %v1906 = vld [vmem:[%s1901 + $0x20] sm:$0xff]
        %v1907 = vld [vmem:[%s1901 + $0x28] sm:$0xff]
        %v1908 = vld [vmem:[%s1901 + $0x30] sm:$0xff]
        %v1909 = vld [vmem:[%s1901 + $0x38] sm:$0xff]
        %v1910 = vld [vmem:[%s1901 + $0x40] sm:$0xff]
        %v1911 = vld [vmem:[%s1901 + $0x48] sm:$0xff]
        %v1912 = vld [vmem:[%s1901 + $0x50] sm:$0xff]
        %v1913 = vld [vmem:[%s1901 + $0x58] sm:$0xff]
        %v1914 = vld [vmem:[%s1901 + $0x60] sm:$0xff]
        %v1915 = vld [vmem:[%s1901 + $0x68] sm:$0xff]
        %v1916 = vld [vmem:[%s1901 + $0x70] sm:$0xff]
        %v1917 = vld [vmem:[%s1901 + $0x78] sm:$0xff]
        %v1918 = vld [vmem:[%s1901 + $0x80] sm:$0xff]
        %v1919 = vld [vmem:[%s1901 + $0x88] sm:$0xff]
        %v1920 = vld [vmem:[%s1901 + $0x90] sm:$0xff]
        %v1921 = vld [vmem:[%s1901 + $0x98] sm:$0xff]
        %v1922 = vld [vmem:[%s1901 + $0xa0] sm:$0xff]
        %v1923 = vld [vmem:[%s1901 + $0xa8] sm:$0xff]
        %v1924 = vld [vmem:[%s1901 + $0xb0] sm:$0xff]
        %v1925 = vld [vmem:[%s1901 + $0xb8] sm:$0xff]
        %v1926 = vld [vmem:[%s1901 + $0xc0] sm:$0xff]
        %v1927 = vld [vmem:[%s1901 + $0xc8] sm:$0xff]
        %v1928 = vld [vmem:[%s1901 + $0xd0] sm:$0xff]
        %v1929 = vld [vmem:[%s1901 + $0xd8] sm:$0xff]
        %v1930 = vld [vmem:[%s1901 + $0xe0] sm:$0xff]
        %v1931 = vld [vmem:[%s1901 + $0xe8] sm:$0xff]
        %v1932 = vld [vmem:[%s1901 + $0xf0] sm:$0xff]
        %v1933 = vld [vmem:[%s1901 + $0xf8] sm:$0xff]
        %s1934 = scalar_lea.vmem %s4, 4
        %v1935 = vld [vmem:[%s1934] sm:$0x3]
        %v1937 = vlaneseq
        %v1938 = vshrl.u32 %v1937, 7
        %v1939 = vsub.s32 0, %v1938
        %v1940 = vrot.slane %v1935, %v1939
        %v1941 = vlaneseq
        %v1942 = vshrl.u32 %v1941, 7
        %v1943 = vsub.s32 1, %v1942
        %v1944 = vrot.slane %v1935, %v1943
        %v1979 = vunpack.c.l.b16 %v1902
        %v1980 = vunpack.c.h.b16 %v1902
        %v1981 = vunpack.c.l.b16 %v1903
        %v1982 = vunpack.c.h.b16 %v1903
        %v1983 = vunpack.c.l.b16 %v1904
        %v1984 = vunpack.c.h.b16 %v1904
        %v1985 = vunpack.c.l.b16 %v1905
        %v1986 = vunpack.c.h.b16 %v1905
        %v1987 = vunpack.c.l.b16 %v1906
        %v1988 = vunpack.c.h.b16 %v1906
        %v1989 = vunpack.c.l.b16 %v1907
        %v1990 = vunpack.c.h.b16 %v1907
        %v1991 = vunpack.c.l.b16 %v1908
        %v1992 = vunpack.c.h.b16 %v1908
        %v1993 = vunpack.c.l.b16 %v1909
        %v1994 = vunpack.c.h.b16 %v1909
        %v1995 = vunpack.c.l.b16 %v1910
        %v1996 = vunpack.c.h.b16 %v1910
        %v1997 = vunpack.c.l.b16 %v1911
        %v1998 = vunpack.c.h.b16 %v1911
        %v1999 = vunpack.c.l.b16 %v1912
        %v2000 = vunpack.c.h.b16 %v1912
        %v2001 = vunpack.c.l.b16 %v1913
        %v2002 = vunpack.c.h.b16 %v1913
        %v2003 = vunpack.c.l.b16 %v1914
        %v2004 = vunpack.c.h.b16 %v1914
        %v2005 = vunpack.c.l.b16 %v1915
        %v2006 = vunpack.c.h.b16 %v1915
        %v2007 = vunpack.c.l.b16 %v1916
        %v2008 = vunpack.c.h.b16 %v1916
        %v2009 = vunpack.c.l.b16 %v1917
        %v2010 = vunpack.c.h.b16 %v1917
        %v2011 = vunpack.c.l.b16 %v1918
        %v2012 = vunpack.c.h.b16 %v1918
        %v2013 = vunpack.c.l.b16 %v1919
        %v2014 = vunpack.c.h.b16 %v1919
        %v2015 = vunpack.c.l.b16 %v1920
        %v2016 = vunpack.c.h.b16 %v1920
        %v2017 = vunpack.c.l.b16 %v1921
        %v2018 = vunpack.c.h.b16 %v1921
        %v2019 = vunpack.c.l.b16 %v1922
        %v2020 = vunpack.c.h.b16 %v1922
        %v2021 = vunpack.c.l.b16 %v1923
        %v2022 = vunpack.c.h.b16 %v1923
        %v2023 = vunpack.c.l.b16 %v1924
        %v2024 = vunpack.c.h.b16 %v1924
        %v2025 = vunpack.c.l.b16 %v1925
        %v2026 = vunpack.c.h.b16 %v1925
        %v2027 = vunpack.c.l.b16 %v1926
        %v2028 = vunpack.c.h.b16 %v1926
        %v2029 = vunpack.c.l.b16 %v1927
        %v2030 = vunpack.c.h.b16 %v1927
        %v2031 = vunpack.c.l.b16 %v1928
        %v2032 = vunpack.c.h.b16 %v1928
        %v2033 = vunpack.c.l.b16 %v1929
        %v2034 = vunpack.c.h.b16 %v1929
        %v2035 = vunpack.c.l.b16 %v1930
        %v2036 = vunpack.c.h.b16 %v1930
        %v2037 = vunpack.c.l.b16 %v1931
        %v2038 = vunpack.c.h.b16 %v1931
        %v2039 = vunpack.c.l.b16 %v1932
        %v2040 = vunpack.c.h.b16 %v1932
        %v2041 = vunpack.c.l.b16 %v1933
        %v2042 = vunpack.c.h.b16 %v1933
        %v2043 = vpack.c.b16 %v1981, %v1979
        %v2044 = vpack.c.b16 %v1982, %v1980
        %v2045 = vpack.c.b16 %v1985, %v1983
        %v2046 = vpack.c.b16 %v1986, %v1984
        %v2047 = vpack.c.b16 %v1989, %v1987
        %v2048 = vpack.c.b16 %v1990, %v1988
        %v2049 = vpack.c.b16 %v1993, %v1991
        %v2050 = vpack.c.b16 %v1994, %v1992
        %v2051 = vpack.c.b16 %v1997, %v1995
        %v2052 = vpack.c.b16 %v1998, %v1996
        %v2053 = vpack.c.b16 %v2001, %v1999
        %v2054 = vpack.c.b16 %v2002, %v2000
        %v2055 = vpack.c.b16 %v2005, %v2003
        %v2056 = vpack.c.b16 %v2006, %v2004
        %v2057 = vpack.c.b16 %v2009, %v2007
        %v2058 = vpack.c.b16 %v2010, %v2008
        %v2059 = vpack.c.b16 %v2013, %v2011
        %v2060 = vpack.c.b16 %v2014, %v2012
        %v2061 = vpack.c.b16 %v2017, %v2015
        %v2062 = vpack.c.b16 %v2018, %v2016
        %v2063 = vpack.c.b16 %v2021, %v2019
        %v2064 = vpack.c.b16 %v2022, %v2020
        %v2065 = vpack.c.b16 %v2025, %v2023
        %v2066 = vpack.c.b16 %v2026, %v2024
        %v2067 = vpack.c.b16 %v2029, %v2027
        %v2068 = vpack.c.b16 %v2030, %v2028
        %v2069 = vpack.c.b16 %v2033, %v2031
        %v2070 = vpack.c.b16 %v2034, %v2032
        %v2071 = vpack.c.b16 %v2037, %v2035
        %v2072 = vpack.c.b16 %v2038, %v2036
        %v2073 = vpack.c.b16 %v2041, %v2039
        %v2074 = vpack.c.b16 %v2042, %v2040
        %2107 = vmatprep.subr.bf16.mxu0 %v2058
        %2108 = vmatpush1.bf16.msra.mxu0 %v2057
        %2109 = vmatprep.subr.bf16.mxu0 %v2056
        %2110 = vmatpush1.bf16.msra.mxu0 %v2055
        %2111 = vmatprep.subr.bf16.mxu0 %v2054
        %2112 = vmatpush1.bf16.msra.mxu0 %v2053
        %2113 = vmatprep.subr.bf16.mxu0 %v2052
        %2114 = vmatpush1.bf16.msra.mxu0 %v2051
        %2115 = vmatprep.subr.bf16.mxu0 %v2050
        %2116 = vmatpush1.bf16.msra.mxu0 %v2049
        %2117 = vmatprep.subr.bf16.mxu0 %v2048
        %2118 = vmatpush1.bf16.msra.mxu0 %v2047
        %2119 = vmatprep.subr.bf16.mxu0 %v2046
        %2120 = vmatpush1.bf16.msra.mxu0 %v2045
        %2121 = vmatprep.subr.bf16.mxu0 %v2044
        %2122 = vmatpush1.bf16.msra.mxu0 %v2043
        %2123 = vmatprep.subr.bf16.mxu0 %v2074
        %2124 = vmatpush2.bf16.msra.mxu0 %v2073
        %2125 = vmatprep.subr.bf16.mxu0 %v2072
        %2126 = vmatpush2.bf16.msra.mxu0 %v2071
        %2127 = vmatprep.subr.bf16.mxu0 %v2070
        %2128 = vmatpush2.bf16.msra.mxu0 %v2069
        %2129 = vmatprep.subr.bf16.mxu0 %v2068
        %2130 = vmatpush2.bf16.msra.mxu0 %v2067
        %2131 = vmatprep.subr.bf16.mxu0 %v2066
        %2132 = vmatpush2.bf16.msra.mxu0 %v2065
        %2133 = vmatprep.subr.bf16.mxu0 %v2064
        %2134 = vmatpush2.bf16.msra.mxu0 %v2063
        %2135 = vmatprep.subr.bf16.mxu0 %v2062
        %2136 = vmatpush2.bf16.msra.mxu0 %v2061
        %2137 = vmatprep.subr.bf16.mxu0 %v2060
        %2138 = vmatpush2.bf16.msra.mxu0 %v2059
        %2139 = vmatprep.mubr.bf16.mxu0 %v1870
        %2140 = vmatmul.mubr.bf16.gmra.mxu0 %v1869
        %v2141 = vpop.f32.mrf.mxu0
        %v2142 = vadd.f32 %v1940, %v2141
        %v2143 = vpop.f32.mrf.mxu0
        %v2144 = vadd.f32 %v1944, %v2143
        %v2145 = vpop.f32.mrf.mxu0
        %v2146 = vadd.f32 %v1940, %v2145
        %v2147 = vpop.f32.mrf.mxu0
        %v2148 = vadd.f32 %v1944, %v2147
        %2149 = vmatprep.mubr.bf16.mxu0 %v1872
        %2150 = vmatmul.mubr.bf16.gmra.mxu0 %v1871
        %v2151 = vpop.f32.mrf.mxu0
        %v2152 = vadd.f32 %v1940, %v2151
        %v2153 = vpop.f32.mrf.mxu0
        %v2154 = vadd.f32 %v1944, %v2153
        %v2155 = vpop.f32.mrf.mxu0
        %v2156 = vadd.f32 %v1940, %v2155
        %v2157 = vpop.f32.mrf.mxu0
        %v2158 = vadd.f32 %v1944, %v2157
        %2159 = vmatprep.mubr.bf16.mxu0 %v1874
        %2160 = vmatmul.mubr.bf16.gmra.mxu0 %v1873
        %v2161 = vpop.f32.mrf.mxu0
        %v2162 = vadd.f32 %v1940, %v2161
        %v2163 = vpop.f32.mrf.mxu0
        %v2164 = vadd.f32 %v1944, %v2163
        %v2165 = vpop.f32.mrf.mxu0
        %v2166 = vadd.f32 %v1940, %v2165
        %v2167 = vpop.f32.mrf.mxu0
        %v2168 = vadd.f32 %v1944, %v2167
        %2169 = vmatprep.mubr.bf16.mxu0 %v1876
        %2170 = vmatmul.mubr.bf16.gmra.mxu0 %v1875
        %v2171 = vpop.f32.mrf.mxu0
        %v2172 = vadd.f32 %v1940, %v2171
        %v2173 = vpop.f32.mrf.mxu0
        %v2174 = vadd.f32 %v1944, %v2173
        %v2175 = vpop.f32.mrf.mxu0
        %v2176 = vadd.f32 %v1940, %v2175
        %v2177 = vpop.f32.mrf.mxu0
        %v2178 = vadd.f32 %v1944, %v2177
        %2179 = vmatprep.mubr.bf16.mxu0 %v1878
        %2180 = vmatmul.mubr.bf16.gmra.mxu0 %v1877
        %v2181 = vpop.f32.mrf.mxu0
        %v2182 = vadd.f32 %v1940, %v2181
        %v2183 = vpop.f32.mrf.mxu0
        %v2184 = vadd.f32 %v1944, %v2183
        %v2185 = vpop.f32.mrf.mxu0
        %v2186 = vadd.f32 %v1940, %v2185
        %v2187 = vpop.f32.mrf.mxu0
        %v2188 = vadd.f32 %v1944, %v2187
        %2189 = vmatprep.mubr.bf16.mxu0 %v1880
        %2190 = vmatmul.mubr.bf16.gmra.mxu0 %v1879
        %v2191 = vpop.f32.mrf.mxu0
        %v2192 = vadd.f32 %v1940, %v2191
        %v2193 = vpop.f32.mrf.mxu0
        %v2194 = vadd.f32 %v1944, %v2193
        %v2195 = vpop.f32.mrf.mxu0
        %v2196 = vadd.f32 %v1940, %v2195
        %v2197 = vpop.f32.mrf.mxu0
        %v2198 = vadd.f32 %v1944, %v2197
        %2199 = vmatprep.mubr.bf16.mxu0 %v1882
        %2200 = vmatmul.mubr.bf16.gmra.mxu0 %v1881
        %v2201 = vpop.f32.mrf.mxu0
        %v2202 = vadd.f32 %v1940, %v2201
        %v2203 = vpop.f32.mrf.mxu0
        %v2204 = vadd.f32 %v1944, %v2203
        %v2205 = vpop.f32.mrf.mxu0
        %v2206 = vadd.f32 %v1940, %v2205
        %v2207 = vpop.f32.mrf.mxu0
        %v2208 = vadd.f32 %v1944, %v2207
        %2209 = vmatprep.mubr.bf16.mxu0 %v1884
        %2210 = vmatmul.mubr.bf16.gmra.mxu0 %v1883
        %v2211 = vpop.f32.mrf.mxu0
        %v2212 = vadd.f32 %v1940, %v2211
        %v2213 = vpop.f32.mrf.mxu0
        %v2214 = vadd.f32 %v1944, %v2213
        %v2215 = vpop.f32.mrf.mxu0
        %v2216 = vadd.f32 %v1940, %v2215
        %v2217 = vpop.f32.mrf.mxu0
        %v2218 = vadd.f32 %v1944, %v2217
        %2219 = vmatprep.mubr.bf16.mxu0 %v1886
        %2220 = vmatmul.mubr.bf16.gmra.mxu0 %v1885
        %v2221 = vpop.f32.mrf.mxu0
        %v2222 = vadd.f32 %v1940, %v2221
        %v2223 = vpop.f32.mrf.mxu0
        %v2224 = vadd.f32 %v1944, %v2223
        %v2225 = vpop.f32.mrf.mxu0
        %v2226 = vadd.f32 %v1940, %v2225
        %v2227 = vpop.f32.mrf.mxu0
        %v2228 = vadd.f32 %v1944, %v2227
        %2229 = vmatprep.mubr.bf16.mxu0 %v1888
        %2230 = vmatmul.mubr.bf16.gmra.mxu0 %v1887
        %v2231 = vpop.f32.mrf.mxu0
        %v2232 = vadd.f32 %v1940, %v2231
        %v2233 = vpop.f32.mrf.mxu0
        %v2234 = vadd.f32 %v1944, %v2233
        %v2235 = vpop.f32.mrf.mxu0
        %v2236 = vadd.f32 %v1940, %v2235
        %v2237 = vpop.f32.mrf.mxu0
        %v2238 = vadd.f32 %v1944, %v2237
        %2239 = vmatprep.mubr.bf16.mxu0 %v1890
        %2240 = vmatmul.mubr.bf16.gmra.mxu0 %v1889
        %v2241 = vpop.f32.mrf.mxu0
        %v2242 = vadd.f32 %v1940, %v2241
        %v2243 = vpop.f32.mrf.mxu0
        %v2244 = vadd.f32 %v1944, %v2243
        %v2245 = vpop.f32.mrf.mxu0
        %v2246 = vadd.f32 %v1940, %v2245
        %v2247 = vpop.f32.mrf.mxu0
        %v2248 = vadd.f32 %v1944, %v2247
        %2249 = vmatprep.mubr.bf16.mxu0 %v1892
        %2250 = vmatmul.mubr.bf16.gmra.mxu0 %v1891
        %v2251 = vpop.f32.mrf.mxu0
        %v2252 = vadd.f32 %v1940, %v2251
        %v2253 = vpop.f32.mrf.mxu0
        %v2254 = vadd.f32 %v1944, %v2253
        %v2255 = vpop.f32.mrf.mxu0
        %v2256 = vadd.f32 %v1940, %v2255
        %v2257 = vpop.f32.mrf.mxu0
        %v2258 = vadd.f32 %v1944, %v2257
        %2259 = vmatprep.mubr.bf16.mxu0 %v1894
        %2260 = vmatmul.mubr.bf16.gmra.mxu0 %v1893
        %v2261 = vpop.f32.mrf.mxu0
        %v2262 = vadd.f32 %v1940, %v2261
        %v2263 = vpop.f32.mrf.mxu0
        %v2264 = vadd.f32 %v1944, %v2263
        %v2265 = vpop.f32.mrf.mxu0
        %v2266 = vadd.f32 %v1940, %v2265
        %v2267 = vpop.f32.mrf.mxu0
        %v2268 = vadd.f32 %v1944, %v2267
        %2269 = vmatprep.mubr.bf16.mxu0 %v1896
        %2270 = vmatmul.mubr.bf16.gmra.mxu0 %v1895
        %v2271 = vpop.f32.mrf.mxu0
        %v2272 = vadd.f32 %v1940, %v2271
        %v2273 = vpop.f32.mrf.mxu0
        %v2274 = vadd.f32 %v1944, %v2273
        %v2275 = vpop.f32.mrf.mxu0
        %v2276 = vadd.f32 %v1940, %v2275
        %v2277 = vpop.f32.mrf.mxu0
        %v2278 = vadd.f32 %v1944, %v2277
        %2279 = vmatprep.mubr.bf16.mxu0 %v1898
        %2280 = vmatmul.mubr.bf16.gmra.mxu0 %v1897
        %v2281 = vpop.f32.mrf.mxu0
        %v2282 = vadd.f32 %v1940, %v2281
        %v2283 = vpop.f32.mrf.mxu0
        %v2284 = vadd.f32 %v1944, %v2283
        %v2285 = vpop.f32.mrf.mxu0
        %v2286 = vadd.f32 %v1940, %v2285
        %v2287 = vpop.f32.mrf.mxu0
        %v2288 = vadd.f32 %v1944, %v2287
        %2289 = vmatprep.mubr.bf16.mxu0 %v1900
        %2290 = vmatmul.mubr.bf16.gmra.mxu0 %v1899
        %v2291 = vpop.f32.mrf.mxu0
        %v2292 = vadd.f32 %v1940, %v2291
        %v2293 = vpop.f32.mrf.mxu0
        %v2294 = vadd.f32 %v1944, %v2293
        %v2295 = vpop.f32.mrf.mxu0
        %v2296 = vadd.f32 %v1940, %v2295
        %v2297 = vpop.f32.mrf.mxu0
        %v2298 = vadd.f32 %v1944, %v2297
        %2299 = vdwg.mxu0
        %v2300 = vmax.f32 %v2142, 0.0
        %v2301 = vmax.f32 %v2144, 0.0
        %v2302 = vmax.f32 %v2146, 0.0
        %v2303 = vmax.f32 %v2148, 0.0
        %v2304 = vmax.f32 %v2152, 0.0
        %v2305 = vmax.f32 %v2154, 0.0
        %v2306 = vmax.f32 %v2156, 0.0
        %v2307 = vmax.f32 %v2158, 0.0
        %v2308 = vmax.f32 %v2162, 0.0
        %v2309 = vmax.f32 %v2164, 0.0
        %v2310 = vmax.f32 %v2166, 0.0
        %v2311 = vmax.f32 %v2168, 0.0
        %v2312 = vmax.f32 %v2172, 0.0
        %v2313 = vmax.f32 %v2174, 0.0
        %v2314 = vmax.f32 %v2176, 0.0
        %v2315 = vmax.f32 %v2178, 0.0
        %v2316 = vmax.f32 %v2182, 0.0
        %v2317 = vmax.f32 %v2184, 0.0
        %v2318 = vmax.f32 %v2186, 0.0
        %v2319 = vmax.f32 %v2188, 0.0
        %v2320 = vmax.f32 %v2192, 0.0
        %v2321 = vmax.f32 %v2194, 0.0
        %v2322 = vmax.f32 %v2196, 0.0
        %v2323 = vmax.f32 %v2198, 0.0
        %v2324 = vmax.f32 %v2202, 0.0
        %v2325 = vmax.f32 %v2204, 0.0
        %v2326 = vmax.f32 %v2206, 0.0
        %v2327 = vmax.f32 %v2208, 0.0
        %v2328 = vmax.f32 %v2212, 0.0
        %v2329 = vmax.f32 %v2214, 0.0
        %v2330 = vmax.f32 %v2216, 0.0
        %v2331 = vmax.f32 %v2218, 0.0
        %v2332 = vmax.f32 %v2222, 0.0
        %v2333 = vmax.f32 %v2224, 0.0
        %v2334 = vmax.f32 %v2226, 0.0
        %v2335 = vmax.f32 %v2228, 0.0
        %v2336 = vmax.f32 %v2232, 0.0
        %v2337 = vmax.f32 %v2234, 0.0
        %v2338 = vmax.f32 %v2236, 0.0
        %v2339 = vmax.f32 %v2238, 0.0
        %v2340 = vmax.f32 %v2242, 0.0
        %v2341 = vmax.f32 %v2244, 0.0
        %v2342 = vmax.f32 %v2246, 0.0
        %v2343 = vmax.f32 %v2248, 0.0
        %v2344 = vmax.f32 %v2252, 0.0
        %v2345 = vmax.f32 %v2254, 0.0
        %v2346 = vmax.f32 %v2256, 0.0
        %v2347 = vmax.f32 %v2258, 0.0
        %v2348 = vmax.f32 %v2262, 0.0
        %v2349 = vmax.f32 %v2264, 0.0
        %v2350 = vmax.f32 %v2266, 0.0
        %v2351 = vmax.f32 %v2268, 0.0
        %v2352 = vmax.f32 %v2272, 0.0
        %v2353 = vmax.f32 %v2274, 0.0
        %v2354 = vmax.f32 %v2276, 0.0
        %v2355 = vmax.f32 %v2278, 0.0
        %v2356 = vmax.f32 %v2282, 0.0
        %v2357 = vmax.f32 %v2284, 0.0
        %v2358 = vmax.f32 %v2286, 0.0
        %v2359 = vmax.f32 %v2288, 0.0
        %v2360 = vmax.f32 %v2292, 0.0
        %v2361 = vmax.f32 %v2294, 0.0
        %v2362 = vmax.f32 %v2296, 0.0
        %v2363 = vmax.f32 %v2298, 0.0
        %v2364 = vpack.c.bf16 %v2302, %v2300
        %v2365 = vpack.c.bf16 %v2303, %v2301
        %v2366 = vpack.c.bf16 %v2306, %v2304
        %v2367 = vpack.c.bf16 %v2307, %v2305
        %v2368 = vpack.c.bf16 %v2310, %v2308
        %v2369 = vpack.c.bf16 %v2311, %v2309
        %v2370 = vpack.c.bf16 %v2314, %v2312
        %v2371 = vpack.c.bf16 %v2315, %v2313
        %v2372 = vpack.c.bf16 %v2318, %v2316
        %v2373 = vpack.c.bf16 %v2319, %v2317
        %v2374 = vpack.c.bf16 %v2322, %v2320
        %v2375 = vpack.c.bf16 %v2323, %v2321
        %v2376 = vpack.c.bf16 %v2326, %v2324
        %v2377 = vpack.c.bf16 %v2327, %v2325
        %v2378 = vpack.c.bf16 %v2330, %v2328
        %v2379 = vpack.c.bf16 %v2331, %v2329
        %v2380 = vpack.c.bf16 %v2334, %v2332
        %v2381 = vpack.c.bf16 %v2335, %v2333
        %v2382 = vpack.c.bf16 %v2338, %v2336
        %v2383 = vpack.c.bf16 %v2339, %v2337
        %v2384 = vpack.c.bf16 %v2342, %v2340
        %v2385 = vpack.c.bf16 %v2343, %v2341
        %v2386 = vpack.c.bf16 %v2346, %v2344
        %v2387 = vpack.c.bf16 %v2347, %v2345
        %v2388 = vpack.c.bf16 %v2350, %v2348
        %v2389 = vpack.c.bf16 %v2351, %v2349
        %v2390 = vpack.c.bf16 %v2354, %v2352
        %v2391 = vpack.c.bf16 %v2355, %v2353
        %v2392 = vpack.c.bf16 %v2358, %v2356
        %v2393 = vpack.c.bf16 %v2359, %v2357
        %v2394 = vpack.c.bf16 %v2362, %v2360
        %v2395 = vpack.c.bf16 %v2363, %v2361
        %s2396 = scalar_lea.vmem %s3, 768
        %v2397 = vld [vmem:[%s2396] sm:$0xff]
        %v2398 = vld [vmem:[%s2396 + $0x8] sm:$0xff]
        %v2399 = vld [vmem:[%s2396 + $0x10] sm:$0xff]
        %v2400 = vld [vmem:[%s2396 + $0x18] sm:$0xff]
        %v2401 = vld [vmem:[%s2396 + $0x20] sm:$0xff]
        %v2402 = vld [vmem:[%s2396 + $0x28] sm:$0xff]
        %v2403 = vld [vmem:[%s2396 + $0x30] sm:$0xff]
        %v2404 = vld [vmem:[%s2396 + $0x38] sm:$0xff]
        %v2405 = vld [vmem:[%s2396 + $0x40] sm:$0xff]
        %v2406 = vld [vmem:[%s2396 + $0x48] sm:$0xff]
        %v2407 = vld [vmem:[%s2396 + $0x50] sm:$0xff]
        %v2408 = vld [vmem:[%s2396 + $0x58] sm:$0xff]
        %v2409 = vld [vmem:[%s2396 + $0x60] sm:$0xff]
        %v2410 = vld [vmem:[%s2396 + $0x68] sm:$0xff]
        %v2411 = vld [vmem:[%s2396 + $0x70] sm:$0xff]
        %v2412 = vld [vmem:[%s2396 + $0x78] sm:$0xff]
        %v2413 = vld [vmem:[%s2396 + $0x80] sm:$0xff]
        %v2414 = vld [vmem:[%s2396 + $0x88] sm:$0xff]
        %v2415 = vld [vmem:[%s2396 + $0x90] sm:$0xff]
        %v2416 = vld [vmem:[%s2396 + $0x98] sm:$0xff]
        %v2417 = vld [vmem:[%s2396 + $0xa0] sm:$0xff]
        %v2418 = vld [vmem:[%s2396 + $0xa8] sm:$0xff]
        %v2419 = vld [vmem:[%s2396 + $0xb0] sm:$0xff]
        %v2420 = vld [vmem:[%s2396 + $0xb8] sm:$0xff]
        %v2421 = vld [vmem:[%s2396 + $0xc0] sm:$0xff]
        %v2422 = vld [vmem:[%s2396 + $0xc8] sm:$0xff]
        %v2423 = vld [vmem:[%s2396 + $0xd0] sm:$0xff]
        %v2424 = vld [vmem:[%s2396 + $0xd8] sm:$0xff]
        %v2425 = vld [vmem:[%s2396 + $0xe0] sm:$0xff]
        %v2426 = vld [vmem:[%s2396 + $0xe8] sm:$0xff]
        %v2427 = vld [vmem:[%s2396 + $0xf0] sm:$0xff]
        %v2428 = vld [vmem:[%s2396 + $0xf8] sm:$0xff]
        %s2429 = scalar_lea.vmem %s4, 6
        %v2430 = vld [vmem:[%s2429] sm:$0x3]
        %v2432 = vlaneseq
        %v2433 = vshrl.u32 %v2432, 7
        %v2434 = vsub.s32 0, %v2433
        %v2435 = vrot.slane %v2430, %v2434
        %v2436 = vlaneseq
        %v2437 = vshrl.u32 %v2436, 7
        %v2438 = vsub.s32 1, %v2437
        %v2439 = vrot.slane %v2430, %v2438
        %v2474 = vunpack.c.l.b16 %v2397
        %v2475 = vunpack.c.h.b16 %v2397
        %v2476 = vunpack.c.l.b16 %v2398
        %v2477 = vunpack.c.h.b16 %v2398
        %v2478 = vunpack.c.l.b16 %v2399
        %v2479 = vunpack.c.h.b16 %v2399
        %v2480 = vunpack.c.l.b16 %v2400
        %v2481 = vunpack.c.h.b16 %v2400
        %v2482 = vunpack.c.l.b16 %v2401
        %v2483 = vunpack.c.h.b16 %v2401
        %v2484 = vunpack.c.l.b16 %v2402
        %v2485 = vunpack.c.h.b16 %v2402
        %v2486 = vunpack.c.l.b16 %v2403
        %v2487 = vunpack.c.h.b16 %v2403
        %v2488 = vunpack.c.l.b16 %v2404
        %v2489 = vunpack.c.h.b16 %v2404
        %v2490 = vunpack.c.l.b16 %v2405
        %v2491 = vunpack.c.h.b16 %v2405
        %v2492 = vunpack.c.l.b16 %v2406
        %v2493 = vunpack.c.h.b16 %v2406
        %v2494 = vunpack.c.l.b16 %v2407
        %v2495 = vunpack.c.h.b16 %v2407
        %v2496 = vunpack.c.l.b16 %v2408
        %v2497 = vunpack.c.h.b16 %v2408
        %v2498 = vunpack.c.l.b16 %v2409
        %v2499 = vunpack.c.h.b16 %v2409
        %v2500 = vunpack.c.l.b16 %v2410
        %v2501 = vunpack.c.h.b16 %v2410
        %v2502 = vunpack.c.l.b16 %v2411
        %v2503 = vunpack.c.h.b16 %v2411
        %v2504 = vunpack.c.l.b16 %v2412
        %v2505 = vunpack.c.h.b16 %v2412
        %v2506 = vunpack.c.l.b16 %v2413
        %v2507 = vunpack.c.h.b16 %v2413
        %v2508 = vunpack.c.l.b16 %v2414
        %v2509 = vunpack.c.h.b16 %v2414
        %v2510 = vunpack.c.l.b16 %v2415
        %v2511 = vunpack.c.h.b16 %v2415
        %v2512 = vunpack.c.l.b16 %v2416
        %v2513 = vunpack.c.h.b16 %v2416
        %v2514 = vunpack.c.l.b16 %v2417
        %v2515 = vunpack.c.h.b16 %v2417
        %v2516 = vunpack.c.l.b16 %v2418
        %v2517 = vunpack.c.h.b16 %v2418
        %v2518 = vunpack.c.l.b16 %v2419
        %v2519 = vunpack.c.h.b16 %v2419
        %v2520 = vunpack.c.l.b16 %v2420
        %v2521 = vunpack.c.h.b16 %v2420
        %v2522 = vunpack.c.l.b16 %v2421
        %v2523 = vunpack.c.h.b16 %v2421
        %v2524 = vunpack.c.l.b16 %v2422
        %v2525 = vunpack.c.h.b16 %v2422
        %v2526 = vunpack.c.l.b16 %v2423
        %v2527 = vunpack.c.h.b16 %v2423
        %v2528 = vunpack.c.l.b16 %v2424
        %v2529 = vunpack.c.h.b16 %v2424
        %v2530 = vunpack.c.l.b16 %v2425
        %v2531 = vunpack.c.h.b16 %v2425
        %v2532 = vunpack.c.l.b16 %v2426
        %v2533 = vunpack.c.h.b16 %v2426
        %v2534 = vunpack.c.l.b16 %v2427
        %v2535 = vunpack.c.h.b16 %v2427
        %v2536 = vunpack.c.l.b16 %v2428
        %v2537 = vunpack.c.h.b16 %v2428
        %v2538 = vpack.c.b16 %v2476, %v2474
        %v2539 = vpack.c.b16 %v2477, %v2475
        %v2540 = vpack.c.b16 %v2480, %v2478
        %v2541 = vpack.c.b16 %v2481, %v2479
        %v2542 = vpack.c.b16 %v2484, %v2482
        %v2543 = vpack.c.b16 %v2485, %v2483
        %v2544 = vpack.c.b16 %v2488, %v2486
        %v2545 = vpack.c.b16 %v2489, %v2487
        %v2546 = vpack.c.b16 %v2492, %v2490
        %v2547 = vpack.c.b16 %v2493, %v2491
        %v2548 = vpack.c.b16 %v2496, %v2494
        %v2549 = vpack.c.b16 %v2497, %v2495
        %v2550 = vpack.c.b16 %v2500, %v2498
        %v2551 = vpack.c.b16 %v2501, %v2499
        %v2552 = vpack.c.b16 %v2504, %v2502
        %v2553 = vpack.c.b16 %v2505, %v2503
        %v2554 = vpack.c.b16 %v2508, %v2506
        %v2555 = vpack.c.b16 %v2509, %v2507
        %v2556 = vpack.c.b16 %v2512, %v2510
        %v2557 = vpack.c.b16 %v2513, %v2511
        %v2558 = vpack.c.b16 %v2516, %v2514
        %v2559 = vpack.c.b16 %v2517, %v2515
        %v2560 = vpack.c.b16 %v2520, %v2518
        %v2561 = vpack.c.b16 %v2521, %v2519
        %v2562 = vpack.c.b16 %v2524, %v2522
        %v2563 = vpack.c.b16 %v2525, %v2523
        %v2564 = vpack.c.b16 %v2528, %v2526
        %v2565 = vpack.c.b16 %v2529, %v2527
        %v2566 = vpack.c.b16 %v2532, %v2530
        %v2567 = vpack.c.b16 %v2533, %v2531
        %v2568 = vpack.c.b16 %v2536, %v2534
        %v2569 = vpack.c.b16 %v2537, %v2535
        %2602 = vmatprep.subr.bf16.mxu0 %v2553
        %2603 = vmatpush1.bf16.msra.mxu0 %v2552
        %2604 = vmatprep.subr.bf16.mxu0 %v2551
        %2605 = vmatpush1.bf16.msra.mxu0 %v2550
        %2606 = vmatprep.subr.bf16.mxu0 %v2549
        %2607 = vmatpush1.bf16.msra.mxu0 %v2548
        %2608 = vmatprep.subr.bf16.mxu0 %v2547
        %2609 = vmatpush1.bf16.msra.mxu0 %v2546
        %2610 = vmatprep.subr.bf16.mxu0 %v2545
        %2611 = vmatpush1.bf16.msra.mxu0 %v2544
        %2612 = vmatprep.subr.bf16.mxu0 %v2543
        %2613 = vmatpush1.bf16.msra.mxu0 %v2542
        %2614 = vmatprep.subr.bf16.mxu0 %v2541
        %2615 = vmatpush1.bf16.msra.mxu0 %v2540
        %2616 = vmatprep.subr.bf16.mxu0 %v2539
        %2617 = vmatpush1.bf16.msra.mxu0 %v2538
        %2618 = vmatprep.subr.bf16.mxu0 %v2569
        %2619 = vmatpush2.bf16.msra.mxu0 %v2568
        %2620 = vmatprep.subr.bf16.mxu0 %v2567
        %2621 = vmatpush2.bf16.msra.mxu0 %v2566
        %2622 = vmatprep.subr.bf16.mxu0 %v2565
        %2623 = vmatpush2.bf16.msra.mxu0 %v2564
        %2624 = vmatprep.subr.bf16.mxu0 %v2563
        %2625 = vmatpush2.bf16.msra.mxu0 %v2562
        %2626 = vmatprep.subr.bf16.mxu0 %v2561
        %2627 = vmatpush2.bf16.msra.mxu0 %v2560
        %2628 = vmatprep.subr.bf16.mxu0 %v2559
        %2629 = vmatpush2.bf16.msra.mxu0 %v2558
        %2630 = vmatprep.subr.bf16.mxu0 %v2557
        %2631 = vmatpush2.bf16.msra.mxu0 %v2556
        %2632 = vmatprep.subr.bf16.mxu0 %v2555
        %2633 = vmatpush2.bf16.msra.mxu0 %v2554
        %2634 = vmatprep.mubr.bf16.mxu0 %v2365
        %2635 = vmatmul.mubr.bf16.gmra.mxu0 %v2364
        %v2636 = vpop.f32.mrf.mxu0
        %v2637 = vadd.f32 %v2435, %v2636
        %v2638 = vpop.f32.mrf.mxu0
        %v2639 = vadd.f32 %v2439, %v2638
        %v2640 = vpop.f32.mrf.mxu0
        %v2641 = vadd.f32 %v2435, %v2640
        %v2642 = vpop.f32.mrf.mxu0
        %v2643 = vadd.f32 %v2439, %v2642
        %2644 = vmatprep.mubr.bf16.mxu0 %v2367
        %2645 = vmatmul.mubr.bf16.gmra.mxu0 %v2366
        %v2646 = vpop.f32.mrf.mxu0
        %v2647 = vadd.f32 %v2435, %v2646
        %v2648 = vpop.f32.mrf.mxu0
        %v2649 = vadd.f32 %v2439, %v2648
        %v2650 = vpop.f32.mrf.mxu0
        %v2651 = vadd.f32 %v2435, %v2650
        %v2652 = vpop.f32.mrf.mxu0
        %v2653 = vadd.f32 %v2439, %v2652
        %2654 = vmatprep.mubr.bf16.mxu0 %v2369
        %2655 = vmatmul.mubr.bf16.gmra.mxu0 %v2368
        %v2656 = vpop.f32.mrf.mxu0
        %v2657 = vadd.f32 %v2435, %v2656
        %v2658 = vpop.f32.mrf.mxu0
        %v2659 = vadd.f32 %v2439, %v2658
        %v2660 = vpop.f32.mrf.mxu0
        %v2661 = vadd.f32 %v2435, %v2660
        %v2662 = vpop.f32.mrf.mxu0
        %v2663 = vadd.f32 %v2439, %v2662
        %2664 = vmatprep.mubr.bf16.mxu0 %v2371
        %2665 = vmatmul.mubr.bf16.gmra.mxu0 %v2370
        %v2666 = vpop.f32.mrf.mxu0
        %v2667 = vadd.f32 %v2435, %v2666
        %v2668 = vpop.f32.mrf.mxu0
        %v2669 = vadd.f32 %v2439, %v2668
        %v2670 = vpop.f32.mrf.mxu0
        %v2671 = vadd.f32 %v2435, %v2670
        %v2672 = vpop.f32.mrf.mxu0
        %v2673 = vadd.f32 %v2439, %v2672
        %2674 = vmatprep.mubr.bf16.mxu0 %v2373
        %2675 = vmatmul.mubr.bf16.gmra.mxu0 %v2372
        %v2676 = vpop.f32.mrf.mxu0
        %v2677 = vadd.f32 %v2435, %v2676
        %v2678 = vpop.f32.mrf.mxu0
        %v2679 = vadd.f32 %v2439, %v2678
        %v2680 = vpop.f32.mrf.mxu0
        %v2681 = vadd.f32 %v2435, %v2680
        %v2682 = vpop.f32.mrf.mxu0
        %v2683 = vadd.f32 %v2439, %v2682
        %2684 = vmatprep.mubr.bf16.mxu0 %v2375
        %2685 = vmatmul.mubr.bf16.gmra.mxu0 %v2374
        %v2686 = vpop.f32.mrf.mxu0
        %v2687 = vadd.f32 %v2435, %v2686
        %v2688 = vpop.f32.mrf.mxu0
        %v2689 = vadd.f32 %v2439, %v2688
        %v2690 = vpop.f32.mrf.mxu0
        %v2691 = vadd.f32 %v2435, %v2690
        %v2692 = vpop.f32.mrf.mxu0
        %v2693 = vadd.f32 %v2439, %v2692
        %2694 = vmatprep.mubr.bf16.mxu0 %v2377
        %2695 = vmatmul.mubr.bf16.gmra.mxu0 %v2376
        %v2696 = vpop.f32.mrf.mxu0
        %v2697 = vadd.f32 %v2435, %v2696
        %v2698 = vpop.f32.mrf.mxu0
        %v2699 = vadd.f32 %v2439, %v2698
        %v2700 = vpop.f32.mrf.mxu0
        %v2701 = vadd.f32 %v2435, %v2700
        %v2702 = vpop.f32.mrf.mxu0
        %v2703 = vadd.f32 %v2439, %v2702
        %2704 = vmatprep.mubr.bf16.mxu0 %v2379
        %2705 = vmatmul.mubr.bf16.gmra.mxu0 %v2378
        %v2706 = vpop.f32.mrf.mxu0
        %v2707 = vadd.f32 %v2435, %v2706
        %v2708 = vpop.f32.mrf.mxu0
        %v2709 = vadd.f32 %v2439, %v2708
        %v2710 = vpop.f32.mrf.mxu0
        %v2711 = vadd.f32 %v2435, %v2710
        %v2712 = vpop.f32.mrf.mxu0
        %v2713 = vadd.f32 %v2439, %v2712
        %2714 = vmatprep.mubr.bf16.mxu0 %v2381
        %2715 = vmatmul.mubr.bf16.gmra.mxu0 %v2380
        %v2716 = vpop.f32.mrf.mxu0
        %v2717 = vadd.f32 %v2435, %v2716
        %v2718 = vpop.f32.mrf.mxu0
        %v2719 = vadd.f32 %v2439, %v2718
        %v2720 = vpop.f32.mrf.mxu0
        %v2721 = vadd.f32 %v2435, %v2720
        %v2722 = vpop.f32.mrf.mxu0
        %v2723 = vadd.f32 %v2439, %v2722
        %2724 = vmatprep.mubr.bf16.mxu0 %v2383
        %2725 = vmatmul.mubr.bf16.gmra.mxu0 %v2382
        %v2726 = vpop.f32.mrf.mxu0
        %v2727 = vadd.f32 %v2435, %v2726
        %v2728 = vpop.f32.mrf.mxu0
        %v2729 = vadd.f32 %v2439, %v2728
        %v2730 = vpop.f32.mrf.mxu0
        %v2731 = vadd.f32 %v2435, %v2730
        %v2732 = vpop.f32.mrf.mxu0
        %v2733 = vadd.f32 %v2439, %v2732
        %2734 = vmatprep.mubr.bf16.mxu0 %v2385
        %2735 = vmatmul.mubr.bf16.gmra.mxu0 %v2384
        %v2736 = vpop.f32.mrf.mxu0
        %v2737 = vadd.f32 %v2435, %v2736
        %v2738 = vpop.f32.mrf.mxu0
        %v2739 = vadd.f32 %v2439, %v2738
        %v2740 = vpop.f32.mrf.mxu0
        %v2741 = vadd.f32 %v2435, %v2740
        %v2742 = vpop.f32.mrf.mxu0
        %v2743 = vadd.f32 %v2439, %v2742
        %2744 = vmatprep.mubr.bf16.mxu0 %v2387
        %2745 = vmatmul.mubr.bf16.gmra.mxu0 %v2386
        %v2746 = vpop.f32.mrf.mxu0
        %v2747 = vadd.f32 %v2435, %v2746
        %v2748 = vpop.f32.mrf.mxu0
        %v2749 = vadd.f32 %v2439, %v2748
        %v2750 = vpop.f32.mrf.mxu0
        %v2751 = vadd.f32 %v2435, %v2750
        %v2752 = vpop.f32.mrf.mxu0
        %v2753 = vadd.f32 %v2439, %v2752
        %2754 = vmatprep.mubr.bf16.mxu0 %v2389
        %2755 = vmatmul.mubr.bf16.gmra.mxu0 %v2388
        %v2756 = vpop.f32.mrf.mxu0
        %v2757 = vadd.f32 %v2435, %v2756
        %v2758 = vpop.f32.mrf.mxu0
        %v2759 = vadd.f32 %v2439, %v2758
        %v2760 = vpop.f32.mrf.mxu0
        %v2761 = vadd.f32 %v2435, %v2760
        %v2762 = vpop.f32.mrf.mxu0
        %v2763 = vadd.f32 %v2439, %v2762
        %2764 = vmatprep.mubr.bf16.mxu0 %v2391
        %2765 = vmatmul.mubr.bf16.gmra.mxu0 %v2390
        %v2766 = vpop.f32.mrf.mxu0
        %v2767 = vadd.f32 %v2435, %v2766
        %v2768 = vpop.f32.mrf.mxu0
        %v2769 = vadd.f32 %v2439, %v2768
        %v2770 = vpop.f32.mrf.mxu0
        %v2771 = vadd.f32 %v2435, %v2770
        %v2772 = vpop.f32.mrf.mxu0
        %v2773 = vadd.f32 %v2439, %v2772
        %2774 = vmatprep.mubr.bf16.mxu0 %v2393
        %2775 = vmatmul.mubr.bf16.gmra.mxu0 %v2392
        %v2776 = vpop.f32.mrf.mxu0
        %v2777 = vadd.f32 %v2435, %v2776
        %v2778 = vpop.f32.mrf.mxu0
        %v2779 = vadd.f32 %v2439, %v2778
        %v2780 = vpop.f32.mrf.mxu0
        %v2781 = vadd.f32 %v2435, %v2780
        %v2782 = vpop.f32.mrf.mxu0
        %v2783 = vadd.f32 %v2439, %v2782
        %2784 = vmatprep.mubr.bf16.mxu0 %v2395
        %2785 = vmatmul.mubr.bf16.gmra.mxu0 %v2394
        %v2786 = vpop.f32.mrf.mxu0
        %v2787 = vadd.f32 %v2435, %v2786
        %v2788 = vpop.f32.mrf.mxu0
        %v2789 = vadd.f32 %v2439, %v2788
        %v2790 = vpop.f32.mrf.mxu0
        %v2791 = vadd.f32 %v2435, %v2790
        %v2792 = vpop.f32.mrf.mxu0
        %v2793 = vadd.f32 %v2439, %v2792
        %2794 = vdwg.mxu0
        %v2795 = vmax.f32 %v2637, 0.0
        %v2796 = vmax.f32 %v2639, 0.0
        %v2797 = vmax.f32 %v2641, 0.0
        %v2798 = vmax.f32 %v2643, 0.0
        %v2799 = vmax.f32 %v2647, 0.0
        %v2800 = vmax.f32 %v2649, 0.0
        %v2801 = vmax.f32 %v2651, 0.0
        %v2802 = vmax.f32 %v2653, 0.0
        %v2803 = vmax.f32 %v2657, 0.0
        %v2804 = vmax.f32 %v2659, 0.0
        %v2805 = vmax.f32 %v2661, 0.0
        %v2806 = vmax.f32 %v2663, 0.0
        %v2807 = vmax.f32 %v2667, 0.0
        %v2808 = vmax.f32 %v2669, 0.0
        %v2809 = vmax.f32 %v2671, 0.0
        %v2810 = vmax.f32 %v2673, 0.0
        %v2811 = vmax.f32 %v2677, 0.0
        %v2812 = vmax.f32 %v2679, 0.0
        %v2813 = vmax.f32 %v2681, 0.0
        %v2814 = vmax.f32 %v2683, 0.0
        %v2815 = vmax.f32 %v2687, 0.0
        %v2816 = vmax.f32 %v2689, 0.0
        %v2817 = vmax.f32 %v2691, 0.0
        %v2818 = vmax.f32 %v2693, 0.0
        %v2819 = vmax.f32 %v2697, 0.0
        %v2820 = vmax.f32 %v2699, 0.0
        %v2821 = vmax.f32 %v2701, 0.0
        %v2822 = vmax.f32 %v2703, 0.0
        %v2823 = vmax.f32 %v2707, 0.0
        %v2824 = vmax.f32 %v2709, 0.0
        %v2825 = vmax.f32 %v2711, 0.0
        %v2826 = vmax.f32 %v2713, 0.0
        %v2827 = vmax.f32 %v2717, 0.0
        %v2828 = vmax.f32 %v2719, 0.0
        %v2829 = vmax.f32 %v2721, 0.0
        %v2830 = vmax.f32 %v2723, 0.0
        %v2831 = vmax.f32 %v2727, 0.0
        %v2832 = vmax.f32 %v2729, 0.0
        %v2833 = vmax.f32 %v2731, 0.0
        %v2834 = vmax.f32 %v2733, 0.0
        %v2835 = vmax.f32 %v2737, 0.0
        %v2836 = vmax.f32 %v2739, 0.0
        %v2837 = vmax.f32 %v2741, 0.0
        %v2838 = vmax.f32 %v2743, 0.0
        %v2839 = vmax.f32 %v2747, 0.0
        %v2840 = vmax.f32 %v2749, 0.0
        %v2841 = vmax.f32 %v2751, 0.0
        %v2842 = vmax.f32 %v2753, 0.0
        %v2843 = vmax.f32 %v2757, 0.0
        %v2844 = vmax.f32 %v2759, 0.0
        %v2845 = vmax.f32 %v2761, 0.0
        %v2846 = vmax.f32 %v2763, 0.0
        %v2847 = vmax.f32 %v2767, 0.0
        %v2848 = vmax.f32 %v2769, 0.0
        %v2849 = vmax.f32 %v2771, 0.0
        %v2850 = vmax.f32 %v2773, 0.0
        %v2851 = vmax.f32 %v2777, 0.0
        %v2852 = vmax.f32 %v2779, 0.0
        %v2853 = vmax.f32 %v2781, 0.0
        %v2854 = vmax.f32 %v2783, 0.0
        %v2855 = vmax.f32 %v2787, 0.0
        %v2856 = vmax.f32 %v2789, 0.0
        %v2857 = vmax.f32 %v2791, 0.0
        %v2858 = vmax.f32 %v2793, 0.0
        %v2859 = vpack.c.bf16 %v2797, %v2795
        %v2860 = vpack.c.bf16 %v2798, %v2796
        %v2861 = vpack.c.bf16 %v2801, %v2799
        %v2862 = vpack.c.bf16 %v2802, %v2800
        %v2863 = vpack.c.bf16 %v2805, %v2803
        %v2864 = vpack.c.bf16 %v2806, %v2804
        %v2865 = vpack.c.bf16 %v2809, %v2807
        %v2866 = vpack.c.bf16 %v2810, %v2808
        %v2867 = vpack.c.bf16 %v2813, %v2811
        %v2868 = vpack.c.bf16 %v2814, %v2812
        %v2869 = vpack.c.bf16 %v2817, %v2815
        %v2870 = vpack.c.bf16 %v2818, %v2816
        %v2871 = vpack.c.bf16 %v2821, %v2819
        %v2872 = vpack.c.bf16 %v2822, %v2820
        %v2873 = vpack.c.bf16 %v2825, %v2823
        %v2874 = vpack.c.bf16 %v2826, %v2824
        %v2875 = vpack.c.bf16 %v2829, %v2827
        %v2876 = vpack.c.bf16 %v2830, %v2828
        %v2877 = vpack.c.bf16 %v2833, %v2831
        %v2878 = vpack.c.bf16 %v2834, %v2832
        %v2879 = vpack.c.bf16 %v2837, %v2835
        %v2880 = vpack.c.bf16 %v2838, %v2836
        %v2881 = vpack.c.bf16 %v2841, %v2839
        %v2882 = vpack.c.bf16 %v2842, %v2840
        %v2883 = vpack.c.bf16 %v2845, %v2843
        %v2884 = vpack.c.bf16 %v2846, %v2844
        %v2885 = vpack.c.bf16 %v2849, %v2847
        %v2886 = vpack.c.bf16 %v2850, %v2848
        %v2887 = vpack.c.bf16 %v2853, %v2851
        %v2888 = vpack.c.bf16 %v2854, %v2852
        %v2889 = vpack.c.bf16 %v2857, %v2855
        %v2890 = vpack.c.bf16 %v2858, %v2856
        %v2891 = vld [vmem:[%s5] sm:$0xff]
        %v2892 = vld [vmem:[%s5 + $0x8] sm:$0xff]
        %v2893 = vld [vmem:[%s5 + $0x10] sm:$0xff]
        %v2894 = vld [vmem:[%s5 + $0x18] sm:$0xff]
        %v2895 = vld [vmem:[%s5 + $0x20] sm:$0xff]
        %v2896 = vld [vmem:[%s5 + $0x28] sm:$0xff]
        %v2897 = vld [vmem:[%s5 + $0x30] sm:$0xff]
        %v2898 = vld [vmem:[%s5 + $0x38] sm:$0xff]
        %v2899 = vld [vmem:[%s5 + $0x40] sm:$0xff]
        %v2900 = vld [vmem:[%s5 + $0x48] sm:$0xff]
        %v2901 = vld [vmem:[%s5 + $0x50] sm:$0xff]
        %v2902 = vld [vmem:[%s5 + $0x58] sm:$0xff]
        %v2903 = vld [vmem:[%s5 + $0x60] sm:$0xff]
        %v2904 = vld [vmem:[%s5 + $0x68] sm:$0xff]
        %v2905 = vld [vmem:[%s5 + $0x70] sm:$0xff]
        %v2906 = vld [vmem:[%s5 + $0x78] sm:$0xff]
        %v2907 = vld [vmem:[%s5 + $0x80] sm:$0xff]
        %v2908 = vld [vmem:[%s5 + $0x88] sm:$0xff]
        %v2909 = vld [vmem:[%s5 + $0x90] sm:$0xff]
        %v2910 = vld [vmem:[%s5 + $0x98] sm:$0xff]
        %v2911 = vld [vmem:[%s5 + $0xa0] sm:$0xff]
        %v2912 = vld [vmem:[%s5 + $0xa8] sm:$0xff]
        %v2913 = vld [vmem:[%s5 + $0xb0] sm:$0xff]
        %v2914 = vld [vmem:[%s5 + $0xb8] sm:$0xff]
        %v2915 = vld [vmem:[%s5 + $0xc0] sm:$0xff]
        %v2916 = vld [vmem:[%s5 + $0xc8] sm:$0xff]
        %v2917 = vld [vmem:[%s5 + $0xd0] sm:$0xff]
        %v2918 = vld [vmem:[%s5 + $0xd8] sm:$0xff]
        %v2919 = vld [vmem:[%s5 + $0xe0] sm:$0xff]
        %v2920 = vld [vmem:[%s5 + $0xe8] sm:$0xff]
        %v2921 = vld [vmem:[%s5 + $0xf0] sm:$0xff]
        %v2922 = vld [vmem:[%s5 + $0xf8] sm:$0xff]
        %v2924 = vlaneseq
        %v2925 = vshrl.u32 %v2924, 7
        %v2926 = vsub.s32 0, %v2925
        %v2927 = vrot.slane %v359, %v2926
        %v2928 = vlaneseq
        %v2929 = vshrl.u32 %v2928, 7
        %v2930 = vsub.s32 1, %v2929
        %v2931 = vrot.slane %v359, %v2930
        %v2966 = vunpack.c.l.b16 %v2891
        %v2967 = vunpack.c.h.b16 %v2891
        %v2968 = vunpack.c.l.b16 %v2892
        %v2969 = vunpack.c.h.b16 %v2892
        %v2970 = vunpack.c.l.b16 %v2893
        %v2971 = vunpack.c.h.b16 %v2893
        %v2972 = vunpack.c.l.b16 %v2894
        %v2973 = vunpack.c.h.b16 %v2894
        %v2974 = vunpack.c.l.b16 %v2895
        %v2975 = vunpack.c.h.b16 %v2895
        %v2976 = vunpack.c.l.b16 %v2896
        %v2977 = vunpack.c.h.b16 %v2896
        %v2978 = vunpack.c.l.b16 %v2897
        %v2979 = vunpack.c.h.b16 %v2897
        %v2980 = vunpack.c.l.b16 %v2898
        %v2981 = vunpack.c.h.b16 %v2898
        %v2982 = vunpack.c.l.b16 %v2899
        %v2983 = vunpack.c.h.b16 %v2899
        %v2984 = vunpack.c.l.b16 %v2900
        %v2985 = vunpack.c.h.b16 %v2900
        %v2986 = vunpack.c.l.b16 %v2901
        %v2987 = vunpack.c.h.b16 %v2901
        %v2988 = vunpack.c.l.b16 %v2902
        %v2989 = vunpack.c.h.b16 %v2902
        %v2990 = vunpack.c.l.b16 %v2903
        %v2991 = vunpack.c.h.b16 %v2903
        %v2992 = vunpack.c.l.b16 %v2904
        %v2993 = vunpack.c.h.b16 %v2904
        %v2994 = vunpack.c.l.b16 %v2905
        %v2995 = vunpack.c.h.b16 %v2905
        %v2996 = vunpack.c.l.b16 %v2906
        %v2997 = vunpack.c.h.b16 %v2906
        %v2998 = vunpack.c.l.b16 %v2907
        %v2999 = vunpack.c.h.b16 %v2907
        %v3000 = vunpack.c.l.b16 %v2908
        %v3001 = vunpack.c.h.b16 %v2908
        %v3002 = vunpack.c.l.b16 %v2909
        %v3003 = vunpack.c.h.b16 %v2909
        %v3004 = vunpack.c.l.b16 %v2910
        %v3005 = vunpack.c.h.b16 %v2910
        %v3006 = vunpack.c.l.b16 %v2911
        %v3007 = vunpack.c.h.b16 %v2911
        %v3008 = vunpack.c.l.b16 %v2912
        %v3009 = vunpack.c.h.b16 %v2912
        %v3010 = vunpack.c.l.b16 %v2913
        %v3011 = vunpack.c.h.b16 %v2913
        %v3012 = vunpack.c.l.b16 %v2914
        %v3013 = vunpack.c.h.b16 %v2914
        %v3014 = vunpack.c.l.b16 %v2915
        %v3015 = vunpack.c.h.b16 %v2915
        %v3016 = vunpack.c.l.b16 %v2916
        %v3017 = vunpack.c.h.b16 %v2916
        %v3018 = vunpack.c.l.b16 %v2917
        %v3019 = vunpack.c.h.b16 %v2917
        %v3020 = vunpack.c.l.b16 %v2918
        %v3021 = vunpack.c.h.b16 %v2918
        %v3022 = vunpack.c.l.b16 %v2919
        %v3023 = vunpack.c.h.b16 %v2919
        %v3024 = vunpack.c.l.b16 %v2920
        %v3025 = vunpack.c.h.b16 %v2920
        %v3026 = vunpack.c.l.b16 %v2921
        %v3027 = vunpack.c.h.b16 %v2921
        %v3028 = vunpack.c.l.b16 %v2922
        %v3029 = vunpack.c.h.b16 %v2922
        %v3030 = vpack.c.b16 %v2968, %v2966
        %v3031 = vpack.c.b16 %v2969, %v2967
        %v3032 = vpack.c.b16 %v2972, %v2970
        %v3033 = vpack.c.b16 %v2973, %v2971
        %v3034 = vpack.c.b16 %v2976, %v2974
        %v3035 = vpack.c.b16 %v2977, %v2975
        %v3036 = vpack.c.b16 %v2980, %v2978
        %v3037 = vpack.c.b16 %v2981, %v2979
        %v3038 = vpack.c.b16 %v2984, %v2982
        %v3039 = vpack.c.b16 %v2985, %v2983
        %v3040 = vpack.c.b16 %v2988, %v2986
        %v3041 = vpack.c.b16 %v2989, %v2987
        %v3042 = vpack.c.b16 %v2992, %v2990
        %v3043 = vpack.c.b16 %v2993, %v2991
        %v3044 = vpack.c.b16 %v2996, %v2994
        %v3045 = vpack.c.b16 %v2997, %v2995
        %v3046 = vpack.c.b16 %v3000, %v2998
        %v3047 = vpack.c.b16 %v3001, %v2999
        %v3048 = vpack.c.b16 %v3004, %v3002
        %v3049 = vpack.c.b16 %v3005, %v3003
        %v3050 = vpack.c.b16 %v3008, %v3006
        %v3051 = vpack.c.b16 %v3009, %v3007
        %v3052 = vpack.c.b16 %v3012, %v3010
        %v3053 = vpack.c.b16 %v3013, %v3011
        %v3054 = vpack.c.b16 %v3016, %v3014
        %v3055 = vpack.c.b16 %v3017, %v3015
        %v3056 = vpack.c.b16 %v3020, %v3018
        %v3057 = vpack.c.b16 %v3021, %v3019
        %v3058 = vpack.c.b16 %v3024, %v3022
        %v3059 = vpack.c.b16 %v3025, %v3023
        %v3060 = vpack.c.b16 %v3028, %v3026
        %v3061 = vpack.c.b16 %v3029, %v3027
        %3094 = vmatprep.subr.bf16.mxu0 %v3045
        %3095 = vmatpush1.bf16.msra.mxu0 %v3044
        %3096 = vmatprep.subr.bf16.mxu0 %v3043
        %3097 = vmatpush1.bf16.msra.mxu0 %v3042
        %3098 = vmatprep.subr.bf16.mxu0 %v3041
        %3099 = vmatpush1.bf16.msra.mxu0 %v3040
        %3100 = vmatprep.subr.bf16.mxu0 %v3039
        %3101 = vmatpush1.bf16.msra.mxu0 %v3038
        %3102 = vmatprep.subr.bf16.mxu0 %v3037
        %3103 = vmatpush1.bf16.msra.mxu0 %v3036
        %3104 = vmatprep.subr.bf16.mxu0 %v3035
        %3105 = vmatpush1.bf16.msra.mxu0 %v3034
        %3106 = vmatprep.subr.bf16.mxu0 %v3033
        %3107 = vmatpush1.bf16.msra.mxu0 %v3032
        %3108 = vmatprep.subr.bf16.mxu0 %v3031
        %3109 = vmatpush1.bf16.msra.mxu0 %v3030
        %3110 = vmatprep.subr.bf16.mxu0 %v3061
        %3111 = vmatpush2.bf16.msra.mxu0 %v3060
        %3112 = vmatprep.subr.bf16.mxu0 %v3059
        %3113 = vmatpush2.bf16.msra.mxu0 %v3058
        %3114 = vmatprep.subr.bf16.mxu0 %v3057
        %3115 = vmatpush2.bf16.msra.mxu0 %v3056
        %3116 = vmatprep.subr.bf16.mxu0 %v3055
        %3117 = vmatpush2.bf16.msra.mxu0 %v3054
        %3118 = vmatprep.subr.bf16.mxu0 %v3053
        %3119 = vmatpush2.bf16.msra.mxu0 %v3052
        %3120 = vmatprep.subr.bf16.mxu0 %v3051
        %3121 = vmatpush2.bf16.msra.mxu0 %v3050
        %3122 = vmatprep.subr.bf16.mxu0 %v3049
        %3123 = vmatpush2.bf16.msra.mxu0 %v3048
        %3124 = vmatprep.subr.bf16.mxu0 %v3047
        %3125 = vmatpush2.bf16.msra.mxu0 %v3046
        %3126 = vmatprep.mubr.bf16.mxu0 %v2860
        %3127 = vmatmul.mubr.bf16.gmra.mxu0 %v2859
        %v3128 = vpop.f32.mrf.mxu0
        %v3129 = vadd.f32 %v2927, %v3128
        %v3130 = vpop.f32.mrf.mxu0
        %v3131 = vadd.f32 %v2931, %v3130
        %v3132 = vpop.f32.mrf.mxu0
        %v3133 = vadd.f32 %v2927, %v3132
        %v3134 = vpop.f32.mrf.mxu0
        %v3135 = vadd.f32 %v2931, %v3134
        %3136 = vmatprep.mubr.bf16.mxu0 %v2862
        %3137 = vmatmul.mubr.bf16.gmra.mxu0 %v2861
        %v3138 = vpop.f32.mrf.mxu0
        %v3139 = vadd.f32 %v2927, %v3138
        %v3140 = vpop.f32.mrf.mxu0
        %v3141 = vadd.f32 %v2931, %v3140
        %v3142 = vpop.f32.mrf.mxu0
        %v3143 = vadd.f32 %v2927, %v3142
        %v3144 = vpop.f32.mrf.mxu0
        %v3145 = vadd.f32 %v2931, %v3144
        %3146 = vmatprep.mubr.bf16.mxu0 %v2864
        %3147 = vmatmul.mubr.bf16.gmra.mxu0 %v2863
        %v3148 = vpop.f32.mrf.mxu0
        %v3149 = vadd.f32 %v2927, %v3148
        %v3150 = vpop.f32.mrf.mxu0
        %v3151 = vadd.f32 %v2931, %v3150
        %v3152 = vpop.f32.mrf.mxu0
        %v3153 = vadd.f32 %v2927, %v3152
        %v3154 = vpop.f32.mrf.mxu0
        %v3155 = vadd.f32 %v2931, %v3154
        %3156 = vmatprep.mubr.bf16.mxu0 %v2866
        %3157 = vmatmul.mubr.bf16.gmra.mxu0 %v2865
        %v3158 = vpop.f32.mrf.mxu0
        %v3159 = vadd.f32 %v2927, %v3158
        %v3160 = vpop.f32.mrf.mxu0
        %v3161 = vadd.f32 %v2931, %v3160
        %v3162 = vpop.f32.mrf.mxu0
        %v3163 = vadd.f32 %v2927, %v3162
        %v3164 = vpop.f32.mrf.mxu0
        %v3165 = vadd.f32 %v2931, %v3164
        %3166 = vmatprep.mubr.bf16.mxu0 %v2868
        %3167 = vmatmul.mubr.bf16.gmra.mxu0 %v2867
        %v3168 = vpop.f32.mrf.mxu0
        %v3169 = vadd.f32 %v2927, %v3168
        %v3170 = vpop.f32.mrf.mxu0
        %v3171 = vadd.f32 %v2931, %v3170
        %v3172 = vpop.f32.mrf.mxu0
        %v3173 = vadd.f32 %v2927, %v3172
        %v3174 = vpop.f32.mrf.mxu0
        %v3175 = vadd.f32 %v2931, %v3174
        %3176 = vmatprep.mubr.bf16.mxu0 %v2870
        %3177 = vmatmul.mubr.bf16.gmra.mxu0 %v2869
        %v3178 = vpop.f32.mrf.mxu0
        %v3179 = vadd.f32 %v2927, %v3178
        %v3180 = vpop.f32.mrf.mxu0
        %v3181 = vadd.f32 %v2931, %v3180
        %v3182 = vpop.f32.mrf.mxu0
        %v3183 = vadd.f32 %v2927, %v3182
        %v3184 = vpop.f32.mrf.mxu0
        %v3185 = vadd.f32 %v2931, %v3184
        %3186 = vmatprep.mubr.bf16.mxu0 %v2872
        %3187 = vmatmul.mubr.bf16.gmra.mxu0 %v2871
        %v3188 = vpop.f32.mrf.mxu0
        %v3189 = vadd.f32 %v2927, %v3188
        %v3190 = vpop.f32.mrf.mxu0
        %v3191 = vadd.f32 %v2931, %v3190
        %v3192 = vpop.f32.mrf.mxu0
        %v3193 = vadd.f32 %v2927, %v3192
        %v3194 = vpop.f32.mrf.mxu0
        %v3195 = vadd.f32 %v2931, %v3194
        %3196 = vmatprep.mubr.bf16.mxu0 %v2874
        %3197 = vmatmul.mubr.bf16.gmra.mxu0 %v2873
        %v3198 = vpop.f32.mrf.mxu0
        %v3199 = vadd.f32 %v2927, %v3198
        %v3200 = vpop.f32.mrf.mxu0
        %v3201 = vadd.f32 %v2931, %v3200
        %v3202 = vpop.f32.mrf.mxu0
        %v3203 = vadd.f32 %v2927, %v3202
        %v3204 = vpop.f32.mrf.mxu0
        %v3205 = vadd.f32 %v2931, %v3204
        %3206 = vmatprep.mubr.bf16.mxu0 %v2876
        %3207 = vmatmul.mubr.bf16.gmra.mxu0 %v2875
        %v3208 = vpop.f32.mrf.mxu0
        %v3209 = vadd.f32 %v2927, %v3208
        %v3210 = vpop.f32.mrf.mxu0
        %v3211 = vadd.f32 %v2931, %v3210
        %v3212 = vpop.f32.mrf.mxu0
        %v3213 = vadd.f32 %v2927, %v3212
        %v3214 = vpop.f32.mrf.mxu0
        %v3215 = vadd.f32 %v2931, %v3214
        %3216 = vmatprep.mubr.bf16.mxu0 %v2878
        %3217 = vmatmul.mubr.bf16.gmra.mxu0 %v2877
        %v3218 = vpop.f32.mrf.mxu0
        %v3219 = vadd.f32 %v2927, %v3218
        %v3220 = vpop.f32.mrf.mxu0
        %v3221 = vadd.f32 %v2931, %v3220
        %v3222 = vpop.f32.mrf.mxu0
        %v3223 = vadd.f32 %v2927, %v3222
        %v3224 = vpop.f32.mrf.mxu0
        %v3225 = vadd.f32 %v2931, %v3224
        %3226 = vmatprep.mubr.bf16.mxu0 %v2880
        %3227 = vmatmul.mubr.bf16.gmra.mxu0 %v2879
        %v3228 = vpop.f32.mrf.mxu0
        %v3229 = vadd.f32 %v2927, %v3228
        %v3230 = vpop.f32.mrf.mxu0
        %v3231 = vadd.f32 %v2931, %v3230
        %v3232 = vpop.f32.mrf.mxu0
        %v3233 = vadd.f32 %v2927, %v3232
        %v3234 = vpop.f32.mrf.mxu0
        %v3235 = vadd.f32 %v2931, %v3234
        %3236 = vmatprep.mubr.bf16.mxu0 %v2882
        %3237 = vmatmul.mubr.bf16.gmra.mxu0 %v2881
        %v3238 = vpop.f32.mrf.mxu0
        %v3239 = vadd.f32 %v2927, %v3238
        %v3240 = vpop.f32.mrf.mxu0
        %v3241 = vadd.f32 %v2931, %v3240
        %v3242 = vpop.f32.mrf.mxu0
        %v3243 = vadd.f32 %v2927, %v3242
        %v3244 = vpop.f32.mrf.mxu0
        %v3245 = vadd.f32 %v2931, %v3244
        %3246 = vmatprep.mubr.bf16.mxu0 %v2884
        %3247 = vmatmul.mubr.bf16.gmra.mxu0 %v2883
        %v3248 = vpop.f32.mrf.mxu0
        %v3249 = vadd.f32 %v2927, %v3248
        %v3250 = vpop.f32.mrf.mxu0
        %v3251 = vadd.f32 %v2931, %v3250
        %v3252 = vpop.f32.mrf.mxu0
        %v3253 = vadd.f32 %v2927, %v3252
        %v3254 = vpop.f32.mrf.mxu0
        %v3255 = vadd.f32 %v2931, %v3254
        %3256 = vmatprep.mubr.bf16.mxu0 %v2886
        %3257 = vmatmul.mubr.bf16.gmra.mxu0 %v2885
        %v3258 = vpop.f32.mrf.mxu0
        %v3259 = vadd.f32 %v2927, %v3258
        %v3260 = vpop.f32.mrf.mxu0
        %v3261 = vadd.f32 %v2931, %v3260
        %v3262 = vpop.f32.mrf.mxu0
        %v3263 = vadd.f32 %v2927, %v3262
        %v3264 = vpop.f32.mrf.mxu0
        %v3265 = vadd.f32 %v2931, %v3264
        %3266 = vmatprep.mubr.bf16.mxu0 %v2888
        %3267 = vmatmul.mubr.bf16.gmra.mxu0 %v2887
        %v3268 = vpop.f32.mrf.mxu0
        %v3269 = vadd.f32 %v2927, %v3268
        %v3270 = vpop.f32.mrf.mxu0
        %v3271 = vadd.f32 %v2931, %v3270
        %v3272 = vpop.f32.mrf.mxu0
        %v3273 = vadd.f32 %v2927, %v3272
        %v3274 = vpop.f32.mrf.mxu0
        %v3275 = vadd.f32 %v2931, %v3274
        %3276 = vmatprep.mubr.bf16.mxu0 %v2890
        %3277 = vmatmul.mubr.bf16.gmra.mxu0 %v2889
        %v3278 = vpop.f32.mrf.mxu0
        %v3279 = vadd.f32 %v2927, %v3278
        %v3280 = vpop.f32.mrf.mxu0
        %v3281 = vadd.f32 %v2931, %v3280
        %v3282 = vpop.f32.mrf.mxu0
        %v3283 = vadd.f32 %v2927, %v3282
        %v3284 = vpop.f32.mrf.mxu0
        %v3285 = vadd.f32 %v2931, %v3284
        %3286 = vdwg.mxu0
        %v3287 = vmax.f32 %v3129, 0.0
        %v3288 = vmax.f32 %v3131, 0.0
        %v3289 = vmax.f32 %v3133, 0.0
        %v3290 = vmax.f32 %v3135, 0.0
        %v3291 = vmax.f32 %v3139, 0.0
        %v3292 = vmax.f32 %v3141, 0.0
        %v3293 = vmax.f32 %v3143, 0.0
        %v3294 = vmax.f32 %v3145, 0.0
        %v3295 = vmax.f32 %v3149, 0.0
        %v3296 = vmax.f32 %v3151, 0.0
        %v3297 = vmax.f32 %v3153, 0.0
        %v3298 = vmax.f32 %v3155, 0.0
        %v3299 = vmax.f32 %v3159, 0.0
        %v3300 = vmax.f32 %v3161, 0.0
        %v3301 = vmax.f32 %v3163, 0.0
        %v3302 = vmax.f32 %v3165, 0.0
        %v3303 = vmax.f32 %v3169, 0.0
        %v3304 = vmax.f32 %v3171, 0.0
        %v3305 = vmax.f32 %v3173, 0.0
        %v3306 = vmax.f32 %v3175, 0.0
        %v3307 = vmax.f32 %v3179, 0.0
        %v3308 = vmax.f32 %v3181, 0.0
        %v3309 = vmax.f32 %v3183, 0.0
        %v3310 = vmax.f32 %v3185, 0.0
        %v3311 = vmax.f32 %v3189, 0.0
        %v3312 = vmax.f32 %v3191, 0.0
        %v3313 = vmax.f32 %v3193, 0.0
        %v3314 = vmax.f32 %v3195, 0.0
        %v3315 = vmax.f32 %v3199, 0.0
        %v3316 = vmax.f32 %v3201, 0.0
        %v3317 = vmax.f32 %v3203, 0.0
        %v3318 = vmax.f32 %v3205, 0.0
        %v3319 = vmax.f32 %v3209, 0.0
        %v3320 = vmax.f32 %v3211, 0.0
        %v3321 = vmax.f32 %v3213, 0.0
        %v3322 = vmax.f32 %v3215, 0.0
        %v3323 = vmax.f32 %v3219, 0.0
        %v3324 = vmax.f32 %v3221, 0.0
        %v3325 = vmax.f32 %v3223, 0.0
        %v3326 = vmax.f32 %v3225, 0.0
        %v3327 = vmax.f32 %v3229, 0.0
        %v3328 = vmax.f32 %v3231, 0.0
        %v3329 = vmax.f32 %v3233, 0.0
        %v3330 = vmax.f32 %v3235, 0.0
        %v3331 = vmax.f32 %v3239, 0.0
        %v3332 = vmax.f32 %v3241, 0.0
        %v3333 = vmax.f32 %v3243, 0.0
        %v3334 = vmax.f32 %v3245, 0.0
        %v3335 = vmax.f32 %v3249, 0.0
        %v3336 = vmax.f32 %v3251, 0.0
        %v3337 = vmax.f32 %v3253, 0.0
        %v3338 = vmax.f32 %v3255, 0.0
        %v3339 = vmax.f32 %v3259, 0.0
        %v3340 = vmax.f32 %v3261, 0.0
        %v3341 = vmax.f32 %v3263, 0.0
        %v3342 = vmax.f32 %v3265, 0.0
        %v3343 = vmax.f32 %v3269, 0.0
        %v3344 = vmax.f32 %v3271, 0.0
        %v3345 = vmax.f32 %v3273, 0.0
        %v3346 = vmax.f32 %v3275, 0.0
        %v3347 = vmax.f32 %v3279, 0.0
        %v3348 = vmax.f32 %v3281, 0.0
        %v3349 = vmax.f32 %v3283, 0.0
        %v3350 = vmax.f32 %v3285, 0.0
        %v3352 = vlaneseq
        %v3353 = vshrl.u32 %v3352, 7
        %v3354 = vsub.s32 0, %v3353
        %v3355 = vrot.slane %v361, %v3354
        %v3356 = vlaneseq
        %v3357 = vshrl.u32 %v3356, 7
        %v3358 = vsub.s32 2, %v3357
        %v3359 = vrot.slane %v361, %v3358
        %v3362 = vlaneseq
        %v3363 = vshrl.u32 %v3362, 7
        %v3364 = vsub.s32 0, %v3363
        %v3365 = vrot.slane %v3355, %v3364
        %v3366 = vlaneseq
        %v3367 = vshrl.u32 %v3366, 7
        %v3368 = vsub.s32 0, %v3367
        %v3369 = vrot.slane %v3359, %v3368
        %v3370 = vmul.f32 %v3287, %v3365
        %v3371 = vmul.f32 %v3288, %v3369
        %v3372 = vmul.f32 %v3289, %v3365
        %v3373 = vmul.f32 %v3290, %v3369
        %v3374 = vmul.f32 %v3291, %v3365
        %v3375 = vmul.f32 %v3292, %v3369
        %v3376 = vmul.f32 %v3293, %v3365
        %v3377 = vmul.f32 %v3294, %v3369
        %v3378 = vmul.f32 %v3295, %v3365
        %v3379 = vmul.f32 %v3296, %v3369
        %v3380 = vmul.f32 %v3297, %v3365
        %v3381 = vmul.f32 %v3298, %v3369
        %v3382 = vmul.f32 %v3299, %v3365
        %v3383 = vmul.f32 %v3300, %v3369
        %v3384 = vmul.f32 %v3301, %v3365
        %v3385 = vmul.f32 %v3302, %v3369
        %v3386 = vmul.f32 %v3303, %v3365
        %v3387 = vmul.f32 %v3304, %v3369
        %v3388 = vmul.f32 %v3305, %v3365
        %v3389 = vmul.f32 %v3306, %v3369
        %v3390 = vmul.f32 %v3307, %v3365
        %v3391 = vmul.f32 %v3308, %v3369
        %v3392 = vmul.f32 %v3309, %v3365
        %v3393 = vmul.f32 %v3310, %v3369
        %v3394 = vmul.f32 %v3311, %v3365
        %v3395 = vmul.f32 %v3312, %v3369
        %v3396 = vmul.f32 %v3313, %v3365
        %v3397 = vmul.f32 %v3314, %v3369
        %v3398 = vmul.f32 %v3315, %v3365
        %v3399 = vmul.f32 %v3316, %v3369
        %v3400 = vmul.f32 %v3317, %v3365
        %v3401 = vmul.f32 %v3318, %v3369
        %v3402 = vmul.f32 %v3319, %v3365
        %v3403 = vmul.f32 %v3320, %v3369
        %v3404 = vmul.f32 %v3321, %v3365
        %v3405 = vmul.f32 %v3322, %v3369
        %v3406 = vmul.f32 %v3323, %v3365
        %v3407 = vmul.f32 %v3324, %v3369
        %v3408 = vmul.f32 %v3325, %v3365
        %v3409 = vmul.f32 %v3326, %v3369
        %v3410 = vmul.f32 %v3327, %v3365
        %v3411 = vmul.f32 %v3328, %v3369
        %v3412 = vmul.f32 %v3329, %v3365
        %v3413 = vmul.f32 %v3330, %v3369
        %v3414 = vmul.f32 %v3331, %v3365
        %v3415 = vmul.f32 %v3332, %v3369
        %v3416 = vmul.f32 %v3333, %v3365
        %v3417 = vmul.f32 %v3334, %v3369
        %v3418 = vmul.f32 %v3335, %v3365
        %v3419 = vmul.f32 %v3336, %v3369
        %v3420 = vmul.f32 %v3337, %v3365
        %v3421 = vmul.f32 %v3338, %v3369
        %v3422 = vmul.f32 %v3339, %v3365
        %v3423 = vmul.f32 %v3340, %v3369
        %v3424 = vmul.f32 %v3341, %v3365
        %v3425 = vmul.f32 %v3342, %v3369
        %v3426 = vmul.f32 %v3343, %v3365
        %v3427 = vmul.f32 %v3344, %v3369
        %v3428 = vmul.f32 %v3345, %v3365
        %v3429 = vmul.f32 %v3346, %v3369
        %v3430 = vmul.f32 %v3347, %v3365
        %v3431 = vmul.f32 %v3348, %v3369
        %v3432 = vmul.f32 %v3349, %v3365
        %v3433 = vmul.f32 %v3350, %v3369
        %v3434 = vadd.f32 %v3370, %v3371
        %3435 = vadd.xlane.f32.xlu0 %v3434
        %v3436 = vpop.xlane.xlu0 %3435
        %v3437 = vadd.f32 %v3372, %v3373
        %3438 = vadd.xlane.f32.xlu0 %v3437
        %v3439 = vpop.xlane.xlu0 %3438
        %v3440 = vadd.f32 %v3374, %v3375
        %3441 = vadd.xlane.f32.xlu0 %v3440
        %v3442 = vpop.xlane.xlu0 %3441
        %v3443 = vadd.f32 %v3376, %v3377
        %3444 = vadd.xlane.f32.xlu0 %v3443
        %v3445 = vpop.xlane.xlu0 %3444
        %v3446 = vadd.f32 %v3378, %v3379
        %3447 = vadd.xlane.f32.xlu0 %v3446
        %v3448 = vpop.xlane.xlu0 %3447
        %v3449 = vadd.f32 %v3380, %v3381
        %3450 = vadd.xlane.f32.xlu0 %v3449
        %v3451 = vpop.xlane.xlu0 %3450
        %v3452 = vadd.f32 %v3382, %v3383
        %3453 = vadd.xlane.f32.xlu0 %v3452
        %v3454 = vpop.xlane.xlu0 %3453
        %v3455 = vadd.f32 %v3384, %v3385
        %3456 = vadd.xlane.f32.xlu0 %v3455
        %v3457 = vpop.xlane.xlu0 %3456
        %v3458 = vadd.f32 %v3386, %v3387
        %3459 = vadd.xlane.f32.xlu0 %v3458
        %v3460 = vpop.xlane.xlu0 %3459
        %v3461 = vadd.f32 %v3388, %v3389
        %3462 = vadd.xlane.f32.xlu0 %v3461
        %v3463 = vpop.xlane.xlu0 %3462
        %v3464 = vadd.f32 %v3390, %v3391
        %3465 = vadd.xlane.f32.xlu0 %v3464
        %v3466 = vpop.xlane.xlu0 %3465
        %v3467 = vadd.f32 %v3392, %v3393
        %3468 = vadd.xlane.f32.xlu0 %v3467
        %v3469 = vpop.xlane.xlu0 %3468
        %v3470 = vadd.f32 %v3394, %v3395
        %3471 = vadd.xlane.f32.xlu0 %v3470
        %v3472 = vpop.xlane.xlu0 %3471
        %v3473 = vadd.f32 %v3396, %v3397
        %3474 = vadd.xlane.f32.xlu0 %v3473
        %v3475 = vpop.xlane.xlu0 %3474
        %v3476 = vadd.f32 %v3398, %v3399
        %3477 = vadd.xlane.f32.xlu0 %v3476
        %v3478 = vpop.xlane.xlu0 %3477
        %v3479 = vadd.f32 %v3400, %v3401
        %3480 = vadd.xlane.f32.xlu0 %v3479
        %v3481 = vpop.xlane.xlu0 %3480
        %v3482 = vadd.f32 %v3402, %v3403
        %3483 = vadd.xlane.f32.xlu0 %v3482
        %v3484 = vpop.xlane.xlu0 %3483
        %v3485 = vadd.f32 %v3404, %v3405
        %3486 = vadd.xlane.f32.xlu0 %v3485
        %v3487 = vpop.xlane.xlu0 %3486
        %v3488 = vadd.f32 %v3406, %v3407
        %3489 = vadd.xlane.f32.xlu0 %v3488
        %v3490 = vpop.xlane.xlu0 %3489
        %v3491 = vadd.f32 %v3408, %v3409
        %3492 = vadd.xlane.f32.xlu0 %v3491
        %v3493 = vpop.xlane.xlu0 %3492
        %v3494 = vadd.f32 %v3410, %v3411
        %3495 = vadd.xlane.f32.xlu0 %v3494
        %v3496 = vpop.xlane.xlu0 %3495
        %v3497 = vadd.f32 %v3412, %v3413
        %3498 = vadd.xlane.f32.xlu0 %v3497
        %v3499 = vpop.xlane.xlu0 %3498
        %v3500 = vadd.f32 %v3414, %v3415
        %3501 = vadd.xlane.f32.xlu0 %v3500
        %v3502 = vpop.xlane.xlu0 %3501
        %v3503 = vadd.f32 %v3416, %v3417
        %3504 = vadd.xlane.f32.xlu0 %v3503
        %v3505 = vpop.xlane.xlu0 %3504
        %v3506 = vadd.f32 %v3418, %v3419
        %3507 = vadd.xlane.f32.xlu0 %v3506
        %v3508 = vpop.xlane.xlu0 %3507
        %v3509 = vadd.f32 %v3420, %v3421
        %3510 = vadd.xlane.f32.xlu0 %v3509
        %v3511 = vpop.xlane.xlu0 %3510
        %v3512 = vadd.f32 %v3422, %v3423
        %3513 = vadd.xlane.f32.xlu0 %v3512
        %v3514 = vpop.xlane.xlu0 %3513
        %v3515 = vadd.f32 %v3424, %v3425
        %3516 = vadd.xlane.f32.xlu0 %v3515
        %v3517 = vpop.xlane.xlu0 %3516
        %v3518 = vadd.f32 %v3426, %v3427
        %3519 = vadd.xlane.f32.xlu0 %v3518
        %v3520 = vpop.xlane.xlu0 %3519
        %v3521 = vadd.f32 %v3428, %v3429
        %3522 = vadd.xlane.f32.xlu0 %v3521
        %v3523 = vpop.xlane.xlu0 %3522
        %v3524 = vadd.f32 %v3430, %v3431
        %3525 = vadd.xlane.f32.xlu0 %v3524
        %v3526 = vpop.xlane.xlu0 %3525
        %v3527 = vadd.f32 %v3432, %v3433
        %3528 = vadd.xlane.f32.xlu0 %v3527
        %v3529 = vpop.xlane.xlu0 %3528
        %v3530 = vstv %s362
        %v3531 = vadd.f32 %v3436, %v3530
        %v3532 = vadd.f32 %v3439, %v3530
        %v3533 = vadd.f32 %v3442, %v3530
        %v3534 = vadd.f32 %v3445, %v3530
        %v3535 = vadd.f32 %v3448, %v3530
        %v3536 = vadd.f32 %v3451, %v3530
        %v3537 = vadd.f32 %v3454, %v3530
        %v3538 = vadd.f32 %v3457, %v3530
        %v3539 = vadd.f32 %v3460, %v3530
        %v3540 = vadd.f32 %v3463, %v3530
        %v3541 = vadd.f32 %v3466, %v3530
        %v3542 = vadd.f32 %v3469, %v3530
        %v3543 = vadd.f32 %v3472, %v3530
        %v3544 = vadd.f32 %v3475, %v3530
        %v3545 = vadd.f32 %v3478, %v3530
        %v3546 = vadd.f32 %v3481, %v3530
        %v3547 = vadd.f32 %v3484, %v3530
        %v3548 = vadd.f32 %v3487, %v3530
        %v3549 = vadd.f32 %v3490, %v3530
        %v3550 = vadd.f32 %v3493, %v3530
        %v3551 = vadd.f32 %v3496, %v3530
        %v3552 = vadd.f32 %v3499, %v3530
        %v3553 = vadd.f32 %v3502, %v3530
        %v3554 = vadd.f32 %v3505, %v3530
        %v3555 = vadd.f32 %v3508, %v3530
        %v3556 = vadd.f32 %v3511, %v3530
        %v3557 = vadd.f32 %v3514, %v3530
        %v3558 = vadd.f32 %v3517, %v3530
        %v3559 = vadd.f32 %v3520, %v3530
        %v3560 = vadd.f32 %v3523, %v3530
        %v3561 = vadd.f32 %v3526, %v3530
        %v3562 = vadd.f32 %v3529, %v3530
        %s3563 = scalar_lea.vmem %s355, %s402
        %vm3564 = vcmask 7168
        %3565 = vst.msk [vmem:[%s3563] sm:$0xff] %vm3564, %v3531
        %3566 = vst.msk [vmem:[%s3563 + $0x8] sm:$0xff] %vm3564, %v3532
        %3567 = vst.msk [vmem:[%s3563 + $0x10] sm:$0xff] %vm3564, %v3533
        %3568 = vst.msk [vmem:[%s3563 + $0x18] sm:$0xff] %vm3564, %v3534
        %3569 = vst.msk [vmem:[%s3563 + $0x20] sm:$0xff] %vm3564, %v3535
        %3570 = vst.msk [vmem:[%s3563 + $0x28] sm:$0xff] %vm3564, %v3536
        %3571 = vst.msk [vmem:[%s3563 + $0x30] sm:$0xff] %vm3564, %v3537
        %3572 = vst.msk [vmem:[%s3563 + $0x38] sm:$0xff] %vm3564, %v3538
        %3573 = vst.msk [vmem:[%s3563 + $0x40] sm:$0xff] %vm3564, %v3539
        %3574 = vst.msk [vmem:[%s3563 + $0x48] sm:$0xff] %vm3564, %v3540
        %3575 = vst.msk [vmem:[%s3563 + $0x50] sm:$0xff] %vm3564, %v3541
        %3576 = vst.msk [vmem:[%s3563 + $0x58] sm:$0xff] %vm3564, %v3542
        %3577 = vst.msk [vmem:[%s3563 + $0x60] sm:$0xff] %vm3564, %v3543
        %3578 = vst.msk [vmem:[%s3563 + $0x68] sm:$0xff] %vm3564, %v3544
        %3579 = vst.msk [vmem:[%s3563 + $0x70] sm:$0xff] %vm3564, %v3545
        %3580 = vst.msk [vmem:[%s3563 + $0x78] sm:$0xff] %vm3564, %v3546
        %3581 = vst.msk [vmem:[%s3563 + $0x80] sm:$0xff] %vm3564, %v3547
        %3582 = vst.msk [vmem:[%s3563 + $0x88] sm:$0xff] %vm3564, %v3548
        %3583 = vst.msk [vmem:[%s3563 + $0x90] sm:$0xff] %vm3564, %v3549
        %3584 = vst.msk [vmem:[%s3563 + $0x98] sm:$0xff] %vm3564, %v3550
        %3585 = vst.msk [vmem:[%s3563 + $0xa0] sm:$0xff] %vm3564, %v3551
        %3586 = vst.msk [vmem:[%s3563 + $0xa8] sm:$0xff] %vm3564, %v3552
        %3587 = vst.msk [vmem:[%s3563 + $0xb0] sm:$0xff] %vm3564, %v3553
        %3588 = vst.msk [vmem:[%s3563 + $0xb8] sm:$0xff] %vm3564, %v3554
        %3589 = vst.msk [vmem:[%s3563 + $0xc0] sm:$0xff] %vm3564, %v3555
        %3590 = vst.msk [vmem:[%s3563 + $0xc8] sm:$0xff] %vm3564, %v3556
        %3591 = vst.msk [vmem:[%s3563 + $0xd0] sm:$0xff] %vm3564, %v3557
        %3592 = vst.msk [vmem:[%s3563 + $0xd8] sm:$0xff] %vm3564, %v3558
        %3593 = vst.msk [vmem:[%s3563 + $0xe0] sm:$0xff] %vm3564, %v3559
        %3594 = vst.msk [vmem:[%s3563 + $0xe8] sm:$0xff] %vm3564, %v3560
        %3595 = vst.msk [vmem:[%s3563 + $0xf0] sm:$0xff] %vm3564, %v3561
        %3596 = vst.msk [vmem:[%s3563 + $0xf8] sm:$0xff] %vm3564, %v3562
      $region61: #{tpu_custom_call.1} parent=55 // loop_footer
        %s401 = sadd.s32 1, %s397
      $region62: #{tpu_custom_call.1} parent=55 // loop_footer_branch
        %396 = sbr.rel target = $region58
      $region63: #{tpu_custom_call.1} parent=55 // loop_exit
        _
      %s3597 = smul.u32 64, %s21
      %p3598 = scmp.lt.s32.totalorder %s3597, 127
      %s3599 = scalar_select %p3598, %s3597, 127
      %s3600 = smul.addr %s3599, 8
      %s3601 = scalar_lea.vmem %s9, %s3600
      // Predicated region
      $region64: #{tpu_custom_call.1} parent=55 // pred_check
        %p3602 = pneg %p233
      $region65: #{tpu_custom_call.1} parent=55 // pred_check_branch
        %3604 = sbr.rel (%p3602) target = $region67
      $region66: #{tpu_custom_call.1} parent=55 // pred_region
        %s3605 = smul.u32 64, %s21
      $region67: #{tpu_custom_call.1} parent=55 // pred_fallthru
        _
    $region56: #{tpu_custom_call.1} parent=5 // pred_fallthru
      _
    %p3606 = scmp.le.s32.totalorder 2, %s16
    // Predicated region
    $region68: #{tpu_custom_call.1} parent=5 // pred_check
      %p3607 = pneg %p3606
    $region69: #{tpu_custom_call.1} parent=5 // pred_check_branch
      %3609 = sbr.rel (%p3607) target = $region71
    $region70: #{tpu_custom_call.1} parent=5 // pred_region
      %s3610 = ssub.s32 %s16, 2
      // Predicated region
      $region72: #{tpu_custom_call.1} parent=70 // pred_check
        %p3611 = pneg %p239
      $region73: #{tpu_custom_call.1} parent=70 // pred_check_branch
        %3613 = sbr.rel (%p3611) target = $region75
      $region74: #{tpu_custom_call.1} parent=70 // pred_region
        %s3614 = smul.u32 64, %s22
        %p3615 = scmp.lt.s32.totalorder %s3614, 127
        %s3616 = scalar_select %p3615, %s3614, 127
        %s3617 = smul.addr %s3616, 8
        %s3618 = scalar_lea.vmem %s9, %s3617
      $region75: #{tpu_custom_call.1} parent=70 // pred_fallthru
        _
    $region71: #{tpu_custom_call.1} parent=5 // pred_fallthru
      _
  $region6: #{tpu_custom_call.1} parent=0 // loop_footer
    %s20 = sadd.s32 1, %s16
  $region7: #{tpu_custom_call.1} parent=0 // loop_footer_branch
    %15 = sbr.rel target = $region3
  $region8: #{tpu_custom_call.1} parent=0 // loop_exit
    _

</llo_original>
